<compile_context>
chip_gen: v5e
topology: v5e:2x2
jax: 0.10.0
libtpu: 0.0.40
codegen_flags: <defaults>
</compile_context>

<pallas_src>
import jax
import jax.numpy as jnp
from jax.experimental import pallas as pl
from jax.experimental.pallas import tpu as pltpu

BN_EPS = 1e-5
SIN = 32 * 32          # per-sample flat column stride


def _vmem():
    # Whole-array block resident in VMEM (all operands are tiny).
    return pl.BlockSpec(memory_space=pltpu.MemorySpace.VMEM)


def _make_kernel(B):
    W1 = B * SIN                  # conv1 column domain  (col = b*1024 + 32h + w)
    L2 = (B - 1) * SIN + 640      # conv2 column domain  (col = b*1024 + 64oh + 2ow)
    LW2 = L2 + 8                  # width needed per kh-block (max kw shift = 8)
    PW1 = W1 - 33                 # width of pooled-conv1 value
    PW2 = L2 - 66                 # width of pooled-conv2 value
    INV1 = 1.0 / float(B * 28 * 28)   # reciprocal of valid conv1 positions
    INV2 = 1.0 / float(B * 10 * 10)   # reciprocal of valid conv2 positions

    def kernel(xs_ref, w1_ref, w2_ref, cvec_ref, fw1_ref, fw23_ref, fvec_ref,
               out_ref, pk_ref, p2_ref, rhs_ref):
        # ---------------- conv1: single (6,75)@(75,W1) bf16 matmul -----------
        a1 = jnp.dot(w1_ref[...], xs_ref[...],
                     preferred_element_type=jnp.float32)           # (6, W1) f32
        a1 = a1 + cvec_ref[0:6, 0:1]                                # + conv1 bias

        # ---------------- BN1 (batch stats over valid cols) ------------------
        col = jax.lax.broadcasted_iota(jnp.int32, (1, W1), 1)
        r = jnp.bitwise_and(col, SIN - 1)                           # 32h + w
        mask1 = jnp.logical_and(jnp.bitwise_and(r, 31) < 28, r < 896)  # h,w < 28
        mean1 = jnp.sum(jnp.where(mask1, a1, 0.0), axis=1, keepdims=True) * INV1
        d1 = a1 - mean1
        var1 = jnp.sum(jnp.where(mask1, d1 * d1, 0.0), axis=1, keepdims=True) * INV1
        y1 = d1 * (cvec_ref[0:6, 1:2] * jax.lax.rsqrt(var1 + BN_EPS)) \
            + cvec_ref[0:6, 2:3]                                    # no ReLU yet

        # ---------------- maxpool1 2x2/2 (shift-max) + ReLU ------------------
        m1 = jnp.maximum(y1[:, :W1 - 1], y1[:, 1:])                 # w, w+1
        p1 = jnp.maximum(jnp.maximum(m1[:, :PW1], m1[:, 32:W1 - 1]), 0.0)
        # pooled value (b, ph, pw) lives at column b*1024 + 64*ph + 2*pw

        # ---- store pooled conv1 as bf16, kh-stacked (rows kh*6+ci) ----------
        pk_ref[0:6, 0:PW1] = p1.astype(jnp.bfloat16)                # kh = 0 block
        for kh in range(1, 5):                                      # kh-shifted copies
            pk_ref[6 * kh:6 * (kh + 1), 0:LW2] = pk_ref[0:6, 64 * kh:64 * kh + LW2]

        # ---------------- conv2: 5 dots of K=30 on ref slices ----------------
        a2 = jnp.zeros((16, L2), jnp.float32)
        for kw in range(5):
            a2 = a2 + jnp.dot(w2_ref[16 * kw:16 * (kw + 1), :],     # (16, 30) bf16
                              pk_ref[:, 2 * kw:2 * kw + L2],        # (30, L2) bf16
                              preferred_element_type=jnp.float32)
        a2 = a2 + cvec_ref[:, 3:4]                                  # + conv2 bias
        # conv2 output (b, oh, ow) lives at column b*1024 + 64*oh + 2*ow

        # ---------------- BN2 -------------------------------------------------
        col2 = jax.lax.broadcasted_iota(jnp.int32, (1, L2), 1)
        r2 = jnp.bitwise_and(col2, SIN - 1)
        mask2 = jnp.logical_and(
            jnp.logical_and(r2 < 640, jnp.bitwise_and(r2, 63) < 20),
            jnp.bitwise_and(r2, 1) == 0)                            # oh,ow < 10
        mean2 = jnp.sum(jnp.where(mask2, a2, 0.0), axis=1, keepdims=True) * INV2
        d2 = a2 - mean2
        var2 = jnp.sum(jnp.where(mask2, d2 * d2, 0.0), axis=1, keepdims=True) * INV2
        y2 = d2 * (cvec_ref[:, 4:5] * jax.lax.rsqrt(var2 + BN_EPS)) + cvec_ref[:, 5:6]

        # ---------------- maxpool2 2x2/2 (shift-max) + ReLU ------------------
        q2 = jnp.maximum(y2[:, :L2 - 2], y2[:, 2:])                 # ow, ow+1
        p2 = jnp.maximum(jnp.maximum(q2[:, :PW2], q2[:, 64:L2 - 2]), 0.0)
        p2_ref[:, 0:PW2] = p2
        # pooled value (b, ph, pw) lives at column b*1024 + 128*ph + 4*pw

        # -------- fc1: compact 25 positions/sample into (400, B), one matmul --
        for pos in range(25):
            off = 128 * (pos // 5) + 4 * (pos % 5)
            for b in range(B):
                rhs_ref[16 * pos:16 * (pos + 1), b:b + 1] = \
                    p2_ref[:, b * SIN + off:b * SIN + off + 1]
        h = jnp.dot(fw1_ref[...], rhs_ref[...],
                    preferred_element_type=jnp.float32)             # (120, B)
        h = jnp.maximum(h + fvec_ref[:, 0:1], 0.0)

        # ---------------- fc2 (+ReLU), fc3 ------------------------------------
        h = jnp.dot(fw23_ref[16:100, :], h,
                    preferred_element_type=jnp.float32)             # (84, B)
        h = jnp.maximum(h + fvec_ref[0:84, 1:2], 0.0)
        out_ref[...] = jnp.dot(fw23_ref[0:10, 0:84], h,
                               preferred_element_type=jnp.float32) \
            + fvec_ref[0:10, 2:3]                                   # (10, B)

    return kernel


# ------------------------------ parameter packing ----------------------------

def prepare_params(params):
    """One-time repack of torch-layout parameters into kernel layout
    (call once at setup, NOT inside the per-step forward)."""
    p = params

    def padrows(v, n):
        return jnp.pad(v, (0, n - v.shape[0]))

    # conv1 weights: (6,3,5,5) -> (6, 75), column = (kh*5+kw)*3 + ci (bf16)
    w1c = p['conv1_w'].transpose(0, 2, 3, 1).reshape(6, 75).astype(jnp.bfloat16)
    # conv2 weights: (16,6,5,5) -> (80, 30), row = kw*16+co, col = kh*6+ci (bf16)
    w2k = p['conv2_w'].transpose(3, 0, 2, 1).reshape(80, 30).astype(jnp.bfloat16)
    # conv bias / BN vectors packed into one (16, 6) array
    cvec = jnp.stack([padrows(p['conv1_b'], 16), padrows(p['bn1_g'], 16),
                      padrows(p['bn1_b'], 16), p['conv2_b'], p['bn2_g'],
                      p['bn2_b']], axis=1).astype(jnp.float32)
    # fc1: torch column order (ch, ph, pw) -> kernel order (ph, pw, ch)
    fw1 = p['fc1_w'].reshape(120, 16, 5, 5).transpose(0, 2, 3, 1) \
        .reshape(120, 400).astype(jnp.float32)
    # fc2 / fc3 weights packed into one (100, 120) array (sublane-aligned rows)
    fw23 = jnp.zeros((100, 120), jnp.float32)
    fw23 = fw23.at[0:10, 0:84].set(p['fc3_w'].astype(jnp.float32))
    fw23 = fw23.at[16:100, :].set(p['fc2_w'].astype(jnp.float32))
    # fc biases packed into one (120, 3) array
    fvec = jnp.stack([p['fc1_b'], padrows(p['fc2_b'], 120),
                      padrows(p['fc3_b'], 120)], axis=1).astype(jnp.float32)

    return {'w1c': w1c, 'w2k': w2k, 'cvec': cvec,
            'fw1': fw1, 'fw23': fw23, 'fvec': fvec}


# ---------------------------------- forward -----------------------------------

def lenet_forward(x, kp):
    """x: (B, 3, 32, 32) float32, kp: prepare_params(...) output -> (B, 10)."""
    B = x.shape[0]
    W1 = B * SIN
    L2 = (B - 1) * SIN + 640
    x = x.astype(jnp.float32)

    # conv1 im2col in the wrapper: flat channel-major input (col = b*1024+32h+w),
    # zero-padded tail, 25 shifted copies stacked -> (75, W1) bf16 operand.
    xf = x.transpose(1, 0, 2, 3).reshape(3, W1)
    xp = jnp.pad(xf, ((0, 0), (0, 132)))                  # max shift = 4*32 + 4
    xs = jnp.concatenate(
        [xp[:, kh * 32 + kw: kh * 32 + kw + W1] for kh in range(5) for kw in range(5)],
        axis=0).astype(jnp.bfloat16)                      # (75, W1)

    out = pl.pallas_call(
        _make_kernel(B),
        out_shape=jax.ShapeDtypeStruct((10, B), jnp.float32),
        in_specs=[_vmem()] * 7,
        out_specs=_vmem(),
        scratch_shapes=[
            pltpu.VMEM((30, W1), jnp.bfloat16),   # kh-stacked pooled conv1 acts
            pltpu.VMEM((16, L2), jnp.float32),    # pooled conv2 acts
            pltpu.VMEM((400, B), jnp.float32),    # compacted fc1 rhs
        ],
    )(xs, kp['w1c'], kp['w2k'], kp['cvec'], kp['fw1'], kp['fw23'], kp['fvec'])
    return out.T                                          # (B, 10)


# ---------------------------------- params ------------------------------------

def init_params(key):
    keys = jax.random.split(key, 10)

    def nrm(k, shape, scale):
        return (scale * jax.random.normal(k, shape)).astype(jnp.float32)

    return {
        'conv1_w': nrm(keys[0], (6, 3, 5, 5), 0.1),
        'conv1_b': nrm(keys[1], (6,), 0.1),
        'bn1_g': jnp.ones((6,), jnp.float32),
        'bn1_b': jnp.zeros((6,), jnp.float32),
        'conv2_w': nrm(keys[2], (16, 6, 5, 5), 0.1),
        'conv2_b': nrm(keys[3], (16,), 0.1),
        'bn2_g': jnp.ones((16,), jnp.float32),
        'bn2_b': jnp.zeros((16,), jnp.float32),
        'fc1_w': nrm(keys[4], (120, 400), 0.05),
        'fc1_b': nrm(keys[5], (120,), 0.05),
        'fc2_w': nrm(keys[6], (84, 120), 0.05),
        'fc2_b': nrm(keys[7], (84,), 0.05),
        'fc3_w': nrm(keys[8], (10, 84), 0.05),
        'fc3_b': nrm(keys[9], (10,), 0.05),
    }


if __name__ == "__main__":
    key = jax.random.PRNGKey(0)
    k_x, k_p = jax.random.split(key)
    # LeNet for CIFAR-10 requires 32x32 spatial input (16*5*5 flatten); batch=2.
    x = jax.random.normal(k_x, (2, 3, 32, 32), dtype=jnp.float32)
    params = init_params(k_p)
    kparams = prepare_params(params)          # one-time weight repack

    out = jax.jit(lenet_forward)(x, kparams)
    out = jax.block_until_ready(out)
    assert out.shape == (2, 10), out.shape
    assert bool(jnp.all(jnp.isfinite(out)))
    print("KERNEL_OK")
</pallas_src>

<mosaic_0001>
module attributes {stable_mosaic.version = 11 : i64} {
  func.func @kernel(%arg0: memref<75x2048xbf16, #tpu.memory_space<vmem>>, %arg1: memref<6x75xbf16, #tpu.memory_space<vmem>>, %arg2: memref<80x30xbf16, #tpu.memory_space<vmem>>, %arg3: memref<16x6xf32, #tpu.memory_space<vmem>>, %arg4: memref<120x400xf32, #tpu.memory_space<vmem>>, %arg5: memref<100x120xf32, #tpu.memory_space<vmem>>, %arg6: memref<120x3xf32, #tpu.memory_space<vmem>>, %arg7: memref<10x2xf32, #tpu.memory_space<vmem>>, %arg8: memref<30x2048xbf16, #tpu.memory_space<vmem>>, %arg9: memref<16x1664xf32, #tpu.memory_space<vmem>>, %arg10: memref<400x2xf32, #tpu.memory_space<vmem>>) attributes {dimension_semantics = [], scalar_prefetch = 0 : i64, scratch_operands = 3 : i64, tpu.core_type = #tpu.core_type<tc>} {
    %c0 = arith.constant 0 : index
    %c0_0 = arith.constant 0 : index
    %0 = vector.load %arg1[%c0, %c0_0] : memref<6x75xbf16, #tpu.memory_space<vmem>>, vector<6x75xbf16>
    %c0_1 = arith.constant 0 : index
    %c0_2 = arith.constant 0 : index
    %1 = vector.load %arg0[%c0_1, %c0_2] : memref<75x2048xbf16, #tpu.memory_space<vmem>>, vector<75x2048xbf16>
    %cst = arith.constant dense<0.000000e+00> : vector<6x2048xf32>
    %2 = tpu.matmul %0, %1, %cst {dimension_numbers = #tpu.dot_dimension_numbers<[1], [0], [0], [1], [0, 0, 1, 1], [], []>} : vector<6x75xbf16>, vector<75x2048xbf16>, vector<6x2048xf32> -> vector<6x2048xf32>
    %c0_3 = arith.constant 0 : index
    %c0_4 = arith.constant 0 : index
    %3 = vector.load %arg3[%c0_3, %c0_4] : memref<16x6xf32, #tpu.memory_space<vmem>>, vector<6x1xf32>
    %4 = vector.broadcast %3 : vector<6x1xf32> to vector<6x2048xf32>
    %5 = arith.addf %2, %4 : vector<6x2048xf32>
    %6 = tpu.iota {dimensions = array<i32: 1>} : vector<1x2048xi32>
    %c1023_i32 = arith.constant 1023 : i32
    %7 = vector.broadcast %c1023_i32 : i32 to vector<1x2048xi32>
    %8 = arith.andi %6, %7 : vector<1x2048xi32>
    %c31_i32 = arith.constant 31 : i32
    %9 = vector.broadcast %c31_i32 : i32 to vector<1x2048xi32>
    %10 = arith.andi %8, %9 : vector<1x2048xi32>
    %c28_i32 = arith.constant 28 : i32
    %11 = vector.broadcast %c28_i32 : i32 to vector<1x2048xi32>
    %12 = arith.cmpi slt, %10, %11 : vector<1x2048xi32>
    %c896_i32 = arith.constant 896 : i32
    %13 = vector.broadcast %c896_i32 : i32 to vector<1x2048xi32>
    %14 = arith.cmpi slt, %8, %13 : vector<1x2048xi32>
    %15 = arith.andi %12, %14 : vector<1x2048xi1>
    %cst_5 = arith.constant 0.000000e+00 : f32
    %16 = vector.shape_cast %15 : vector<1x2048xi1> to vector<1x2048xi1>
    %17 = vector.broadcast %16 : vector<1x2048xi1> to vector<6x2048xi1>
    %18 = vector.broadcast %cst_5 : f32 to vector<6x2048xf32>
    %19 = arith.select %17, %5, %18 : vector<6x2048xi1>, vector<6x2048xf32>
    %cst_6 = arith.constant dense<0.000000e+00> : vector<6xf32>
    %20 = vector.multi_reduction <add>, %19, %cst_6 [1] : vector<6x2048xf32> to vector<6xf32>
    %21 = vector.shape_cast %20 : vector<6xf32> to vector<6x1xf32>
    %cst_7 = arith.constant 6.37755089E-4 : f32
    %22 = vector.broadcast %cst_7 : f32 to vector<6x1xf32>
    %23 = arith.mulf %21, %22 : vector<6x1xf32>
    %24 = vector.broadcast %23 : vector<6x1xf32> to vector<6x2048xf32>
    %25 = arith.subf %5, %24 : vector<6x2048xf32>
    %26 = arith.mulf %25, %25 : vector<6x2048xf32>
    %cst_8 = arith.constant 0.000000e+00 : f32
    %27 = vector.shape_cast %15 : vector<1x2048xi1> to vector<1x2048xi1>
    %28 = vector.broadcast %27 : vector<1x2048xi1> to vector<6x2048xi1>
    %29 = vector.broadcast %cst_8 : f32 to vector<6x2048xf32>
    %30 = arith.select %28, %26, %29 : vector<6x2048xi1>, vector<6x2048xf32>
    %cst_9 = arith.constant dense<0.000000e+00> : vector<6xf32>
    %31 = vector.multi_reduction <add>, %30, %cst_9 [1] : vector<6x2048xf32> to vector<6xf32>
    %32 = vector.shape_cast %31 : vector<6xf32> to vector<6x1xf32>
    %cst_10 = arith.constant 6.37755089E-4 : f32
    %33 = vector.broadcast %cst_10 : f32 to vector<6x1xf32>
    %34 = arith.mulf %32, %33 : vector<6x1xf32>
    %c0_11 = arith.constant 0 : index
    %c1 = arith.constant 1 : index
    %35 = vector.load %arg3[%c0_11, %c1] : memref<16x6xf32, #tpu.memory_space<vmem>>, vector<6x1xf32>
    %cst_12 = arith.constant 9.99999974E-6 : f32
    %36 = vector.broadcast %cst_12 : f32 to vector<6x1xf32>
    %37 = arith.addf %34, %36 : vector<6x1xf32>
    %38 = math.rsqrt %37 : vector<6x1xf32>
    %39 = arith.mulf %35, %38 : vector<6x1xf32>
    %40 = vector.broadcast %39 : vector<6x1xf32> to vector<6x2048xf32>
    %41 = arith.mulf %25, %40 : vector<6x2048xf32>
    %c0_13 = arith.constant 0 : index
    %c2 = arith.constant 2 : index
    %42 = vector.load %arg3[%c0_13, %c2] : memref<16x6xf32, #tpu.memory_space<vmem>>, vector<6x1xf32>
    %43 = vector.broadcast %42 : vector<6x1xf32> to vector<6x2048xf32>
    %44 = arith.addf %41, %43 : vector<6x2048xf32>
    %45 = vector.extract_strided_slice %44 {offsets = [0, 0], sizes = [6, 2047], strides = [1, 1]} : vector<6x2048xf32> to vector<6x2047xf32>
    %46 = vector.extract_strided_slice %44 {offsets = [0, 1], sizes = [6, 2047], strides = [1, 1]} : vector<6x2048xf32> to vector<6x2047xf32>
    %47 = arith.maximumf %45, %46 : vector<6x2047xf32>
    %48 = vector.extract_strided_slice %47 {offsets = [0, 0], sizes = [6, 2015], strides = [1, 1]} : vector<6x2047xf32> to vector<6x2015xf32>
    %49 = vector.extract_strided_slice %47 {offsets = [0, 32], sizes = [6, 2015], strides = [1, 1]} : vector<6x2047xf32> to vector<6x2015xf32>
    %50 = arith.maximumf %48, %49 : vector<6x2015xf32>
    %cst_14 = arith.constant 0.000000e+00 : f32
    %51 = vector.broadcast %cst_14 : f32 to vector<6x2015xf32>
    %52 = arith.maximumf %50, %51 : vector<6x2015xf32>
    %53 = arith.truncf %52 : vector<6x2015xf32> to vector<6x2015xbf16>
    %c0_15 = arith.constant 0 : index
    %c0_16 = arith.constant 0 : index
    %54 = vector.load %arg8[%c0_15, %c0_16] : memref<30x2048xbf16, #tpu.memory_space<vmem>>, vector<6x2015xbf16>
    tpu.vector_store %arg8[%c0_15, %c0_16], %53 {strides = array<i32>} : memref<30x2048xbf16, #tpu.memory_space<vmem>>, vector<6x2015xbf16>,
    %c0_17 = arith.constant 0 : index
    %c64 = arith.constant 64 : index
    %55 = vector.load %arg8[%c0_17, %c64] : memref<30x2048xbf16, #tpu.memory_space<vmem>>, vector<6x1672xbf16>
    %c6 = arith.constant 6 : index
    %c0_18 = arith.constant 0 : index
    %56 = vector.load %arg8[%c6, %c0_18] : memref<30x2048xbf16, #tpu.memory_space<vmem>>, vector<6x1672xbf16>
    tpu.vector_store %arg8[%c6, %c0_18], %55 {strides = array<i32>} : memref<30x2048xbf16, #tpu.memory_space<vmem>>, vector<6x1672xbf16>,
    %c0_19 = arith.constant 0 : index
    %c128 = arith.constant 128 : index
    %57 = vector.load %arg8[%c0_19, %c128] : memref<30x2048xbf16, #tpu.memory_space<vmem>>, vector<6x1672xbf16>
    %c12 = arith.constant 12 : index
    %c0_20 = arith.constant 0 : index
    %58 = vector.load %arg8[%c12, %c0_20] : memref<30x2048xbf16, #tpu.memory_space<vmem>>, vector<6x1672xbf16>
    tpu.vector_store %arg8[%c12, %c0_20], %57 {strides = array<i32>} : memref<30x2048xbf16, #tpu.memory_space<vmem>>, vector<6x1672xbf16>,
    %c0_21 = arith.constant 0 : index
    %c192 = arith.constant 192 : index
    %59 = vector.load %arg8[%c0_21, %c192] : memref<30x2048xbf16, #tpu.memory_space<vmem>>, vector<6x1672xbf16>
    %c18 = arith.constant 18 : index
    %c0_22 = arith.constant 0 : index
    %60 = vector.load %arg8[%c18, %c0_22] : memref<30x2048xbf16, #tpu.memory_space<vmem>>, vector<6x1672xbf16>
    tpu.vector_store %arg8[%c18, %c0_22], %59 {strides = array<i32>} : memref<30x2048xbf16, #tpu.memory_space<vmem>>, vector<6x1672xbf16>,
    %c0_23 = arith.constant 0 : index
    %c256 = arith.constant 256 : index
    %61 = vector.load %arg8[%c0_23, %c256] : memref<30x2048xbf16, #tpu.memory_space<vmem>>, vector<6x1672xbf16>
    %c24 = arith.constant 24 : index
    %c0_24 = arith.constant 0 : index
    %62 = vector.load %arg8[%c24, %c0_24] : memref<30x2048xbf16, #tpu.memory_space<vmem>>, vector<6x1672xbf16>
    tpu.vector_store %arg8[%c24, %c0_24], %61 {strides = array<i32>} : memref<30x2048xbf16, #tpu.memory_space<vmem>>, vector<6x1672xbf16>,
    %cst_25 = arith.constant 0.000000e+00 : f32
    %63 = vector.broadcast %cst_25 : f32 to vector<16x1664xf32>
    %c0_26 = arith.constant 0 : index
    %c0_27 = arith.constant 0 : index
    %64 = vector.load %arg2[%c0_26, %c0_27] : memref<80x30xbf16, #tpu.memory_space<vmem>>, vector<16x30xbf16>
    %c0_28 = arith.constant 0 : index
    %c0_29 = arith.constant 0 : index
    %65 = vector.load %arg8[%c0_28, %c0_29] : memref<30x2048xbf16, #tpu.memory_space<vmem>>, vector<30x1664xbf16>
    %cst_30 = arith.constant dense<0.000000e+00> : vector<16x1664xf32>
    %66 = tpu.matmul %64, %65, %cst_30 {dimension_numbers = #tpu.dot_dimension_numbers<[1], [0], [0], [1], [0, 0, 1, 1], [], []>} : vector<16x30xbf16>, vector<30x1664xbf16>, vector<16x1664xf32> -> vector<16x1664xf32>
    %67 = arith.addf %63, %66 : vector<16x1664xf32>
    %c16 = arith.constant 16 : index
    %c0_31 = arith.constant 0 : index
    %68 = vector.load %arg2[%c16, %c0_31] : memref<80x30xbf16, #tpu.memory_space<vmem>>, vector<16x30xbf16>
    %c0_32 = arith.constant 0 : index
    %c2_33 = arith.constant 2 : index
    %69 = vector.load %arg8[%c0_32, %c2_33] : memref<30x2048xbf16, #tpu.memory_space<vmem>>, vector<30x1664xbf16>
    %cst_34 = arith.constant dense<0.000000e+00> : vector<16x1664xf32>
    %70 = tpu.matmul %68, %69, %cst_34 {dimension_numbers = #tpu.dot_dimension_numbers<[1], [0], [0], [1], [0, 0, 1, 1], [], []>} : vector<16x30xbf16>, vector<30x1664xbf16>, vector<16x1664xf32> -> vector<16x1664xf32>
    %71 = arith.addf %67, %70 : vector<16x1664xf32>
    %c32 = arith.constant 32 : index
    %c0_35 = arith.constant 0 : index
    %72 = vector.load %arg2[%c32, %c0_35] : memref<80x30xbf16, #tpu.memory_space<vmem>>, vector<16x30xbf16>
    %c0_36 = arith.constant 0 : index
    %c4 = arith.constant 4 : index
    %73 = vector.load %arg8[%c0_36, %c4] : memref<30x2048xbf16, #tpu.memory_space<vmem>>, vector<30x1664xbf16>
    %cst_37 = arith.constant dense<0.000000e+00> : vector<16x1664xf32>
    %74 = tpu.matmul %72, %73, %cst_37 {dimension_numbers = #tpu.dot_dimension_numbers<[1], [0], [0], [1], [0, 0, 1, 1], [], []>} : vector<16x30xbf16>, vector<30x1664xbf16>, vector<16x1664xf32> -> vector<16x1664xf32>
    %75 = arith.addf %71, %74 : vector<16x1664xf32>
    %c48 = arith.constant 48 : index
    %c0_38 = arith.constant 0 : index
    %76 = vector.load %arg2[%c48, %c0_38] : memref<80x30xbf16, #tpu.memory_space<vmem>>, vector<16x30xbf16>
    %c0_39 = arith.constant 0 : index
    %c6_40 = arith.constant 6 : index
    %77 = vector.load %arg8[%c0_39, %c6_40] : memref<30x2048xbf16, #tpu.memory_space<vmem>>, vector<30x1664xbf16>
    %cst_41 = arith.constant dense<0.000000e+00> : vector<16x1664xf32>
    %78 = tpu.matmul %76, %77, %cst_41 {dimension_numbers = #tpu.dot_dimension_numbers<[1], [0], [0], [1], [0, 0, 1, 1], [], []>} : vector<16x30xbf16>, vector<30x1664xbf16>, vector<16x1664xf32> -> vector<16x1664xf32>
    %79 = arith.addf %75, %78 : vector<16x1664xf32>
    %c64_42 = arith.constant 64 : index
    %c0_43 = arith.constant 0 : index
    %80 = vector.load %arg2[%c64_42, %c0_43] : memref<80x30xbf16, #tpu.memory_space<vmem>>, vector<16x30xbf16>
    %c0_44 = arith.constant 0 : index
    %c8 = arith.constant 8 : index
    %81 = vector.load %arg8[%c0_44, %c8] : memref<30x2048xbf16, #tpu.memory_space<vmem>>, vector<30x1664xbf16>
    %cst_45 = arith.constant dense<0.000000e+00> : vector<16x1664xf32>
    %82 = tpu.matmul %80, %81, %cst_45 {dimension_numbers = #tpu.dot_dimension_numbers<[1], [0], [0], [1], [0, 0, 1, 1], [], []>} : vector<16x30xbf16>, vector<30x1664xbf16>, vector<16x1664xf32> -> vector<16x1664xf32>
    %83 = arith.addf %79, %82 : vector<16x1664xf32>
    %c0_46 = arith.constant 0 : index
    %c3 = arith.constant 3 : index
    %84 = vector.load %arg3[%c0_46, %c3] : memref<16x6xf32, #tpu.memory_space<vmem>>, vector<16x1xf32>
    %85 = vector.broadcast %84 : vector<16x1xf32> to vector<16x1664xf32>
    %86 = arith.addf %83, %85 : vector<16x1664xf32>
    %87 = tpu.iota {dimensions = array<i32: 1>} : vector<1x1664xi32>
    %c1023_i32_47 = arith.constant 1023 : i32
    %88 = vector.broadcast %c1023_i32_47 : i32 to vector<1x1664xi32>
    %89 = arith.andi %87, %88 : vector<1x1664xi32>
    %c640_i32 = arith.constant 640 : i32
    %90 = vector.broadcast %c640_i32 : i32 to vector<1x1664xi32>
    %91 = arith.cmpi slt, %89, %90 : vector<1x1664xi32>
    %c63_i32 = arith.constant 63 : i32
    %92 = vector.broadcast %c63_i32 : i32 to vector<1x1664xi32>
    %93 = arith.andi %89, %92 : vector<1x1664xi32>
    %c20_i32 = arith.constant 20 : i32
    %94 = vector.broadcast %c20_i32 : i32 to vector<1x1664xi32>
    %95 = arith.cmpi slt, %93, %94 : vector<1x1664xi32>
    %96 = arith.andi %91, %95 : vector<1x1664xi1>
    %c1_i32 = arith.constant 1 : i32
    %97 = vector.broadcast %c1_i32 : i32 to vector<1x1664xi32>
    %98 = arith.andi %89, %97 : vector<1x1664xi32>
    %c0_i32 = arith.constant 0 : i32
    %99 = vector.broadcast %c0_i32 : i32 to vector<1x1664xi32>
    %100 = arith.cmpi eq, %98, %99 : vector<1x1664xi32>
    %101 = arith.andi %96, %100 : vector<1x1664xi1>
    %cst_48 = arith.constant 0.000000e+00 : f32
    %102 = vector.shape_cast %101 : vector<1x1664xi1> to vector<1x1664xi1>
    %103 = vector.broadcast %102 : vector<1x1664xi1> to vector<16x1664xi1>
    %104 = vector.broadcast %cst_48 : f32 to vector<16x1664xf32>
    %105 = arith.select %103, %86, %104 : vector<16x1664xi1>, vector<16x1664xf32>
    %cst_49 = arith.constant dense<0.000000e+00> : vector<16xf32>
    %106 = vector.multi_reduction <add>, %105, %cst_49 [1] : vector<16x1664xf32> to vector<16xf32>
    %107 = vector.shape_cast %106 : vector<16xf32> to vector<16x1xf32>
    %cst_50 = arith.constant 5.000000e-03 : f32
    %108 = vector.broadcast %cst_50 : f32 to vector<16x1xf32>
    %109 = arith.mulf %107, %108 : vector<16x1xf32>
    %110 = vector.broadcast %109 : vector<16x1xf32> to vector<16x1664xf32>
    %111 = arith.subf %86, %110 : vector<16x1664xf32>
    %112 = arith.mulf %111, %111 : vector<16x1664xf32>
    %cst_51 = arith.constant 0.000000e+00 : f32
    %113 = vector.shape_cast %101 : vector<1x1664xi1> to vector<1x1664xi1>
    %114 = vector.broadcast %113 : vector<1x1664xi1> to vector<16x1664xi1>
    %115 = vector.broadcast %cst_51 : f32 to vector<16x1664xf32>
    %116 = arith.select %114, %112, %115 : vector<16x1664xi1>, vector<16x1664xf32>
    %cst_52 = arith.constant dense<0.000000e+00> : vector<16xf32>
    %117 = vector.multi_reduction <add>, %116, %cst_52 [1] : vector<16x1664xf32> to vector<16xf32>
    %118 = vector.shape_cast %117 : vector<16xf32> to vector<16x1xf32>
    %cst_53 = arith.constant 5.000000e-03 : f32
    %119 = vector.broadcast %cst_53 : f32 to vector<16x1xf32>
    %120 = arith.mulf %118, %119 : vector<16x1xf32>
    %c0_54 = arith.constant 0 : index
    %c4_55 = arith.constant 4 : index
    %121 = vector.load %arg3[%c0_54, %c4_55] : memref<16x6xf32, #tpu.memory_space<vmem>>, vector<16x1xf32>
    %cst_56 = arith.constant 9.99999974E-6 : f32
    %122 = vector.broadcast %cst_56 : f32 to vector<16x1xf32>
    %123 = arith.addf %120, %122 : vector<16x1xf32>
    %124 = math.rsqrt %123 : vector<16x1xf32>
    %125 = arith.mulf %121, %124 : vector<16x1xf32>
    %126 = vector.broadcast %125 : vector<16x1xf32> to vector<16x1664xf32>
    %127 = arith.mulf %111, %126 : vector<16x1664xf32>
    %c0_57 = arith.constant 0 : index
    %c5 = arith.constant 5 : index
    %128 = vector.load %arg3[%c0_57, %c5] : memref<16x6xf32, #tpu.memory_space<vmem>>, vector<16x1xf32>
    %129 = vector.broadcast %128 : vector<16x1xf32> to vector<16x1664xf32>
    %130 = arith.addf %127, %129 : vector<16x1664xf32>
    %131 = vector.extract_strided_slice %130 {offsets = [0, 0], sizes = [16, 1662], strides = [1, 1]} : vector<16x1664xf32> to vector<16x1662xf32>
    %132 = vector.extract_strided_slice %130 {offsets = [0, 2], sizes = [16, 1662], strides = [1, 1]} : vector<16x1664xf32> to vector<16x1662xf32>
    %133 = arith.maximumf %131, %132 : vector<16x1662xf32>
    %134 = vector.extract_strided_slice %133 {offsets = [0, 0], sizes = [16, 1598], strides = [1, 1]} : vector<16x1662xf32> to vector<16x1598xf32>
    %135 = vector.extract_strided_slice %133 {offsets = [0, 64], sizes = [16, 1598], strides = [1, 1]} : vector<16x1662xf32> to vector<16x1598xf32>
    %136 = arith.maximumf %134, %135 : vector<16x1598xf32>
    %cst_58 = arith.constant 0.000000e+00 : f32
    %137 = vector.broadcast %cst_58 : f32 to vector<16x1598xf32>
    %138 = arith.maximumf %136, %137 : vector<16x1598xf32>
    %c0_59 = arith.constant 0 : index
    %c0_60 = arith.constant 0 : index
    %139 = vector.load %arg9[%c0_59, %c0_60] : memref<16x1664xf32, #tpu.memory_space<vmem>>, vector<16x1598xf32>
    tpu.vector_store %arg9[%c0_59, %c0_60], %138 {strides = array<i32>} : memref<16x1664xf32, #tpu.memory_space<vmem>>, vector<16x1598xf32>,
    %c0_61 = arith.constant 0 : index
    %c0_62 = arith.constant 0 : index
    %140 = vector.load %arg9[%c0_61, %c0_62] : memref<16x1664xf32, #tpu.memory_space<vmem>>, vector<16x1xf32>
    %c0_63 = arith.constant 0 : index
    %c0_64 = arith.constant 0 : index
    %141 = vector.load %arg10[%c0_63, %c0_64] : memref<400x2xf32, #tpu.memory_space<vmem>>, vector<16x1xf32>
    tpu.vector_store %arg10[%c0_63, %c0_64], %140 {strides = array<i32>} : memref<400x2xf32, #tpu.memory_space<vmem>>, vector<16x1xf32>,
    %c0_65 = arith.constant 0 : index
    %c1024 = arith.constant 1024 : index
    %142 = vector.load %arg9[%c0_65, %c1024] : memref<16x1664xf32, #tpu.memory_space<vmem>>, vector<16x1xf32>
    %c0_66 = arith.constant 0 : index
    %c1_67 = arith.constant 1 : index
    %143 = vector.load %arg10[%c0_66, %c1_67] : memref<400x2xf32, #tpu.memory_space<vmem>>, vector<16x1xf32>
    tpu.vector_store %arg10[%c0_66, %c1_67], %142 {strides = array<i32>} : memref<400x2xf32, #tpu.memory_space<vmem>>, vector<16x1xf32>,
    %c0_68 = arith.constant 0 : index
    %c4_69 = arith.constant 4 : index
    %144 = vector.load %arg9[%c0_68, %c4_69] : memref<16x1664xf32, #tpu.memory_space<vmem>>, vector<16x1xf32>
    %c16_70 = arith.constant 16 : index
    %c0_71 = arith.constant 0 : index
    %145 = vector.load %arg10[%c16_70, %c0_71] : memref<400x2xf32, #tpu.memory_space<vmem>>, vector<16x1xf32>
    tpu.vector_store %arg10[%c16_70, %c0_71], %144 {strides = array<i32>} : memref<400x2xf32, #tpu.memory_space<vmem>>, vector<16x1xf32>,
    %c0_72 = arith.constant 0 : index
    %c1028 = arith.constant 1028 : index
    %146 = vector.load %arg9[%c0_72, %c1028] : memref<16x1664xf32, #tpu.memory_space<vmem>>, vector<16x1xf32>
    %c16_73 = arith.constant 16 : index
    %c1_74 = arith.constant 1 : index
    %147 = vector.load %arg10[%c16_73, %c1_74] : memref<400x2xf32, #tpu.memory_space<vmem>>, vector<16x1xf32>
    tpu.vector_store %arg10[%c16_73, %c1_74], %146 {strides = array<i32>} : memref<400x2xf32, #tpu.memory_space<vmem>>, vector<16x1xf32>,
    %c0_75 = arith.constant 0 : index
    %c8_76 = arith.constant 8 : index
    %148 = vector.load %arg9[%c0_75, %c8_76] : memref<16x1664xf32, #tpu.memory_space<vmem>>, vector<16x1xf32>
    %c32_77 = arith.constant 32 : index
    %c0_78 = arith.constant 0 : index
    %149 = vector.load %arg10[%c32_77, %c0_78] : memref<400x2xf32, #tpu.memory_space<vmem>>, vector<16x1xf32>
    tpu.vector_store %arg10[%c32_77, %c0_78], %148 {strides = array<i32>} : memref<400x2xf32, #tpu.memory_space<vmem>>, vector<16x1xf32>,
    %c0_79 = arith.constant 0 : index
    %c1032 = arith.constant 1032 : index
    %150 = vector.load %arg9[%c0_79, %c1032] : memref<16x1664xf32, #tpu.memory_space<vmem>>, vector<16x1xf32>
    %c32_80 = arith.constant 32 : index
    %c1_81 = arith.constant 1 : index
    %151 = vector.load %arg10[%c32_80, %c1_81] : memref<400x2xf32, #tpu.memory_space<vmem>>, vector<16x1xf32>
    tpu.vector_store %arg10[%c32_80, %c1_81], %150 {strides = array<i32>} : memref<400x2xf32, #tpu.memory_space<vmem>>, vector<16x1xf32>,
    %c0_82 = arith.constant 0 : index
    %c12_83 = arith.constant 12 : index
    %152 = vector.load %arg9[%c0_82, %c12_83] : memref<16x1664xf32, #tpu.memory_space<vmem>>, vector<16x1xf32>
    %c48_84 = arith.constant 48 : index
    %c0_85 = arith.constant 0 : index
    %153 = vector.load %arg10[%c48_84, %c0_85] : memref<400x2xf32, #tpu.memory_space<vmem>>, vector<16x1xf32>
    tpu.vector_store %arg10[%c48_84, %c0_85], %152 {strides = array<i32>} : memref<400x2xf32, #tpu.memory_space<vmem>>, vector<16x1xf32>,
    %c0_86 = arith.constant 0 : index
    %c1036 = arith.constant 1036 : index
    %154 = vector.load %arg9[%c0_86, %c1036] : memref<16x1664xf32, #tpu.memory_space<vmem>>, vector<16x1xf32>
    %c48_87 = arith.constant 48 : index
    %c1_88 = arith.constant 1 : index
    %155 = vector.load %arg10[%c48_87, %c1_88] : memref<400x2xf32, #tpu.memory_space<vmem>>, vector<16x1xf32>
    tpu.vector_store %arg10[%c48_87, %c1_88], %154 {strides = array<i32>} : memref<400x2xf32, #tpu.memory_space<vmem>>, vector<16x1xf32>,
    %c0_89 = arith.constant 0 : index
    %c16_90 = arith.constant 16 : index
    %156 = vector.load %arg9[%c0_89, %c16_90] : memref<16x1664xf32, #tpu.memory_space<vmem>>, vector<16x1xf32>
    %c64_91 = arith.constant 64 : index
    %c0_92 = arith.constant 0 : index
    %157 = vector.load %arg10[%c64_91, %c0_92] : memref<400x2xf32, #tpu.memory_space<vmem>>, vector<16x1xf32>
    tpu.vector_store %arg10[%c64_91, %c0_92], %156 {strides = array<i32>} : memref<400x2xf32, #tpu.memory_space<vmem>>, vector<16x1xf32>,
    %c0_93 = arith.constant 0 : index
    %c1040 = arith.constant 1040 : index
    %158 = vector.load %arg9[%c0_93, %c1040] : memref<16x1664xf32, #tpu.memory_space<vmem>>, vector<16x1xf32>
    %c64_94 = arith.constant 64 : index
    %c1_95 = arith.constant 1 : index
    %159 = vector.load %arg10[%c64_94, %c1_95] : memref<400x2xf32, #tpu.memory_space<vmem>>, vector<16x1xf32>
    tpu.vector_store %arg10[%c64_94, %c1_95], %158 {strides = array<i32>} : memref<400x2xf32, #tpu.memory_space<vmem>>, vector<16x1xf32>,
    %c0_96 = arith.constant 0 : index
    %c128_97 = arith.constant 128 : index
    %160 = vector.load %arg9[%c0_96, %c128_97] : memref<16x1664xf32, #tpu.memory_space<vmem>>, vector<16x1xf32>
    %c80 = arith.constant 80 : index
    %c0_98 = arith.constant 0 : index
    %161 = vector.load %arg10[%c80, %c0_98] : memref<400x2xf32, #tpu.memory_space<vmem>>, vector<16x1xf32>
    tpu.vector_store %arg10[%c80, %c0_98], %160 {strides = array<i32>} : memref<400x2xf32, #tpu.memory_space<vmem>>, vector<16x1xf32>,
    %c0_99 = arith.constant 0 : index
    %c1152 = arith.constant 1152 : index
    %162 = vector.load %arg9[%c0_99, %c1152] : memref<16x1664xf32, #tpu.memory_space<vmem>>, vector<16x1xf32>
    %c80_100 = arith.constant 80 : index
    %c1_101 = arith.constant 1 : index
    %163 = vector.load %arg10[%c80_100, %c1_101] : memref<400x2xf32, #tpu.memory_space<vmem>>, vector<16x1xf32>
    tpu.vector_store %arg10[%c80_100, %c1_101], %162 {strides = array<i32>} : memref<400x2xf32, #tpu.memory_space<vmem>>, vector<16x1xf32>,
    %c0_102 = arith.constant 0 : index
    %c132 = arith.constant 132 : index
    %164 = vector.load %arg9[%c0_102, %c132] : memref<16x1664xf32, #tpu.memory_space<vmem>>, vector<16x1xf32>
    %c96 = arith.constant 96 : index
    %c0_103 = arith.constant 0 : index
    %165 = vector.load %arg10[%c96, %c0_103] : memref<400x2xf32, #tpu.memory_space<vmem>>, vector<16x1xf32>
    tpu.vector_store %arg10[%c96, %c0_103], %164 {strides = array<i32>} : memref<400x2xf32, #tpu.memory_space<vmem>>, vector<16x1xf32>,
    %c0_104 = arith.constant 0 : index
    %c1156 = arith.constant 1156 : index
    %166 = vector.load %arg9[%c0_104, %c1156] : memref<16x1664xf32, #tpu.memory_space<vmem>>, vector<16x1xf32>
    %c96_105 = arith.constant 96 : index
    %c1_106 = arith.constant 1 : index
    %167 = vector.load %arg10[%c96_105, %c1_106] : memref<400x2xf32, #tpu.memory_space<vmem>>, vector<16x1xf32>
    tpu.vector_store %arg10[%c96_105, %c1_106], %166 {strides = array<i32>} : memref<400x2xf32, #tpu.memory_space<vmem>>, vector<16x1xf32>,
    %c0_107 = arith.constant 0 : index
    %c136 = arith.constant 136 : index
    %168 = vector.load %arg9[%c0_107, %c136] : memref<16x1664xf32, #tpu.memory_space<vmem>>, vector<16x1xf32>
    %c112 = arith.constant 112 : index
    %c0_108 = arith.constant 0 : index
    %169 = vector.load %arg10[%c112, %c0_108] : memref<400x2xf32, #tpu.memory_space<vmem>>, vector<16x1xf32>
    tpu.vector_store %arg10[%c112, %c0_108], %168 {strides = array<i32>} : memref<400x2xf32, #tpu.memory_space<vmem>>, vector<16x1xf32>,
    %c0_109 = arith.constant 0 : index
    %c1160 = arith.constant 1160 : index
    %170 = vector.load %arg9[%c0_109, %c1160] : memref<16x1664xf32, #tpu.memory_space<vmem>>, vector<16x1xf32>
    %c112_110 = arith.constant 112 : index
    %c1_111 = arith.constant 1 : index
    %171 = vector.load %arg10[%c112_110, %c1_111] : memref<400x2xf32, #tpu.memory_space<vmem>>, vector<16x1xf32>
    tpu.vector_store %arg10[%c112_110, %c1_111], %170 {strides = array<i32>} : memref<400x2xf32, #tpu.memory_space<vmem>>, vector<16x1xf32>,
    %c0_112 = arith.constant 0 : index
    %c140 = arith.constant 140 : index
    %172 = vector.load %arg9[%c0_112, %c140] : memref<16x1664xf32, #tpu.memory_space<vmem>>, vector<16x1xf32>
    %c128_113 = arith.constant 128 : index
    %c0_114 = arith.constant 0 : index
    %173 = vector.load %arg10[%c128_113, %c0_114] : memref<400x2xf32, #tpu.memory_space<vmem>>, vector<16x1xf32>
    tpu.vector_store %arg10[%c128_113, %c0_114], %172 {strides = array<i32>} : memref<400x2xf32, #tpu.memory_space<vmem>>, vector<16x1xf32>,
    %c0_115 = arith.constant 0 : index
    %c1164 = arith.constant 1164 : index
    %174 = vector.load %arg9[%c0_115, %c1164] : memref<16x1664xf32, #tpu.memory_space<vmem>>, vector<16x1xf32>
    %c128_116 = arith.constant 128 : index
    %c1_117 = arith.constant 1 : index
    %175 = vector.load %arg10[%c128_116, %c1_117] : memref<400x2xf32, #tpu.memory_space<vmem>>, vector<16x1xf32>
    tpu.vector_store %arg10[%c128_116, %c1_117], %174 {strides = array<i32>} : memref<400x2xf32, #tpu.memory_space<vmem>>, vector<16x1xf32>,
    %c0_118 = arith.constant 0 : index
    %c144 = arith.constant 144 : index
    %176 = vector.load %arg9[%c0_118, %c144] : memref<16x1664xf32, #tpu.memory_space<vmem>>, vector<16x1xf32>
    %c144_119 = arith.constant 144 : index
    %c0_120 = arith.constant 0 : index
    %177 = vector.load %arg10[%c144_119, %c0_120] : memref<400x2xf32, #tpu.memory_space<vmem>>, vector<16x1xf32>
    tpu.vector_store %arg10[%c144_119, %c0_120], %176 {strides = array<i32>} : memref<400x2xf32, #tpu.memory_space<vmem>>, vector<16x1xf32>,
    %c0_121 = arith.constant 0 : index
    %c1168 = arith.constant 1168 : index
    %178 = vector.load %arg9[%c0_121, %c1168] : memref<16x1664xf32, #tpu.memory_space<vmem>>, vector<16x1xf32>
    %c144_122 = arith.constant 144 : index
    %c1_123 = arith.constant 1 : index
    %179 = vector.load %arg10[%c144_122, %c1_123] : memref<400x2xf32, #tpu.memory_space<vmem>>, vector<16x1xf32>
    tpu.vector_store %arg10[%c144_122, %c1_123], %178 {strides = array<i32>} : memref<400x2xf32, #tpu.memory_space<vmem>>, vector<16x1xf32>,
    %c0_124 = arith.constant 0 : index
    %c256_125 = arith.constant 256 : index
    %180 = vector.load %arg9[%c0_124, %c256_125] : memref<16x1664xf32, #tpu.memory_space<vmem>>, vector<16x1xf32>
    %c160 = arith.constant 160 : index
    %c0_126 = arith.constant 0 : index
    %181 = vector.load %arg10[%c160, %c0_126] : memref<400x2xf32, #tpu.memory_space<vmem>>, vector<16x1xf32>
    tpu.vector_store %arg10[%c160, %c0_126], %180 {strides = array<i32>} : memref<400x2xf32, #tpu.memory_space<vmem>>, vector<16x1xf32>,
    %c0_127 = arith.constant 0 : index
    %c1280 = arith.constant 1280 : index
    %182 = vector.load %arg9[%c0_127, %c1280] : memref<16x1664xf32, #tpu.memory_space<vmem>>, vector<16x1xf32>
    %c160_128 = arith.constant 160 : index
    %c1_129 = arith.constant 1 : index
    %183 = vector.load %arg10[%c160_128, %c1_129] : memref<400x2xf32, #tpu.memory_space<vmem>>, vector<16x1xf32>
    tpu.vector_store %arg10[%c160_128, %c1_129], %182 {strides = array<i32>} : memref<400x2xf32, #tpu.memory_space<vmem>>, vector<16x1xf32>,
    %c0_130 = arith.constant 0 : index
    %c260 = arith.constant 260 : index
    %184 = vector.load %arg9[%c0_130, %c260] : memref<16x1664xf32, #tpu.memory_space<vmem>>, vector<16x1xf32>
    %c176 = arith.constant 176 : index
    %c0_131 = arith.constant 0 : index
    %185 = vector.load %arg10[%c176, %c0_131] : memref<400x2xf32, #tpu.memory_space<vmem>>, vector<16x1xf32>
    tpu.vector_store %arg10[%c176, %c0_131], %184 {strides = array<i32>} : memref<400x2xf32, #tpu.memory_space<vmem>>, vector<16x1xf32>,
    %c0_132 = arith.constant 0 : index
    %c1284 = arith.constant 1284 : index
    %186 = vector.load %arg9[%c0_132, %c1284] : memref<16x1664xf32, #tpu.memory_space<vmem>>, vector<16x1xf32>
    %c176_133 = arith.constant 176 : index
    %c1_134 = arith.constant 1 : index
    %187 = vector.load %arg10[%c176_133, %c1_134] : memref<400x2xf32, #tpu.memory_space<vmem>>, vector<16x1xf32>
    tpu.vector_store %arg10[%c176_133, %c1_134], %186 {strides = array<i32>} : memref<400x2xf32, #tpu.memory_space<vmem>>, vector<16x1xf32>,
    %c0_135 = arith.constant 0 : index
    %c264 = arith.constant 264 : index
    %188 = vector.load %arg9[%c0_135, %c264] : memref<16x1664xf32, #tpu.memory_space<vmem>>, vector<16x1xf32>
    %c192_136 = arith.constant 192 : index
    %c0_137 = arith.constant 0 : index
    %189 = vector.load %arg10[%c192_136, %c0_137] : memref<400x2xf32, #tpu.memory_space<vmem>>, vector<16x1xf32>
    tpu.vector_store %arg10[%c192_136, %c0_137], %188 {strides = array<i32>} : memref<400x2xf32, #tpu.memory_space<vmem>>, vector<16x1xf32>,
    %c0_138 = arith.constant 0 : index
    %c1288 = arith.constant 1288 : index
    %190 = vector.load %arg9[%c0_138, %c1288] : memref<16x1664xf32, #tpu.memory_space<vmem>>, vector<16x1xf32>
    %c192_139 = arith.constant 192 : index
    %c1_140 = arith.constant 1 : index
    %191 = vector.load %arg10[%c192_139, %c1_140] : memref<400x2xf32, #tpu.memory_space<vmem>>, vector<16x1xf32>
    tpu.vector_store %arg10[%c192_139, %c1_140], %190 {strides = array<i32>} : memref<400x2xf32, #tpu.memory_space<vmem>>, vector<16x1xf32>,
    %c0_141 = arith.constant 0 : index
    %c268 = arith.constant 268 : index
    %192 = vector.load %arg9[%c0_141, %c268] : memref<16x1664xf32, #tpu.memory_space<vmem>>, vector<16x1xf32>
    %c208 = arith.constant 208 : index
    %c0_142 = arith.constant 0 : index
    %193 = vector.load %arg10[%c208, %c0_142] : memref<400x2xf32, #tpu.memory_space<vmem>>, vector<16x1xf32>
    tpu.vector_store %arg10[%c208, %c0_142], %192 {strides = array<i32>} : memref<400x2xf32, #tpu.memory_space<vmem>>, vector<16x1xf32>,
    %c0_143 = arith.constant 0 : index
    %c1292 = arith.constant 1292 : index
    %194 = vector.load %arg9[%c0_143, %c1292] : memref<16x1664xf32, #tpu.memory_space<vmem>>, vector<16x1xf32>
    %c208_144 = arith.constant 208 : index
    %c1_145 = arith.constant 1 : index
    %195 = vector.load %arg10[%c208_144, %c1_145] : memref<400x2xf32, #tpu.memory_space<vmem>>, vector<16x1xf32>
    tpu.vector_store %arg10[%c208_144, %c1_145], %194 {strides = array<i32>} : memref<400x2xf32, #tpu.memory_space<vmem>>, vector<16x1xf32>,
    %c0_146 = arith.constant 0 : index
    %c272 = arith.constant 272 : index
    %196 = vector.load %arg9[%c0_146, %c272] : memref<16x1664xf32, #tpu.memory_space<vmem>>, vector<16x1xf32>
    %c224 = arith.constant 224 : index
    %c0_147 = arith.constant 0 : index
    %197 = vector.load %arg10[%c224, %c0_147] : memref<400x2xf32, #tpu.memory_space<vmem>>, vector<16x1xf32>
    tpu.vector_store %arg10[%c224, %c0_147], %196 {strides = array<i32>} : memref<400x2xf32, #tpu.memory_space<vmem>>, vector<16x1xf32>,
    %c0_148 = arith.constant 0 : index
    %c1296 = arith.constant 1296 : index
    %198 = vector.load %arg9[%c0_148, %c1296] : memref<16x1664xf32, #tpu.memory_space<vmem>>, vector<16x1xf32>
    %c224_149 = arith.constant 224 : index
    %c1_150 = arith.constant 1 : index
    %199 = vector.load %arg10[%c224_149, %c1_150] : memref<400x2xf32, #tpu.memory_space<vmem>>, vector<16x1xf32>
    tpu.vector_store %arg10[%c224_149, %c1_150], %198 {strides = array<i32>} : memref<400x2xf32, #tpu.memory_space<vmem>>, vector<16x1xf32>,
    %c0_151 = arith.constant 0 : index
    %c384 = arith.constant 384 : index
    %200 = vector.load %arg9[%c0_151, %c384] : memref<16x1664xf32, #tpu.memory_space<vmem>>, vector<16x1xf32>
    %c240 = arith.constant 240 : index
    %c0_152 = arith.constant 0 : index
    %201 = vector.load %arg10[%c240, %c0_152] : memref<400x2xf32, #tpu.memory_space<vmem>>, vector<16x1xf32>
    tpu.vector_store %arg10[%c240, %c0_152], %200 {strides = array<i32>} : memref<400x2xf32, #tpu.memory_space<vmem>>, vector<16x1xf32>,
    %c0_153 = arith.constant 0 : index
    %c1408 = arith.constant 1408 : index
    %202 = vector.load %arg9[%c0_153, %c1408] : memref<16x1664xf32, #tpu.memory_space<vmem>>, vector<16x1xf32>
    %c240_154 = arith.constant 240 : index
    %c1_155 = arith.constant 1 : index
    %203 = vector.load %arg10[%c240_154, %c1_155] : memref<400x2xf32, #tpu.memory_space<vmem>>, vector<16x1xf32>
    tpu.vector_store %arg10[%c240_154, %c1_155], %202 {strides = array<i32>} : memref<400x2xf32, #tpu.memory_space<vmem>>, vector<16x1xf32>,
    %c0_156 = arith.constant 0 : index
    %c388 = arith.constant 388 : index
    %204 = vector.load %arg9[%c0_156, %c388] : memref<16x1664xf32, #tpu.memory_space<vmem>>, vector<16x1xf32>
    %c256_157 = arith.constant 256 : index
    %c0_158 = arith.constant 0 : index
    %205 = vector.load %arg10[%c256_157, %c0_158] : memref<400x2xf32, #tpu.memory_space<vmem>>, vector<16x1xf32>
    tpu.vector_store %arg10[%c256_157, %c0_158], %204 {strides = array<i32>} : memref<400x2xf32, #tpu.memory_space<vmem>>, vector<16x1xf32>,
    %c0_159 = arith.constant 0 : index
    %c1412 = arith.constant 1412 : index
    %206 = vector.load %arg9[%c0_159, %c1412] : memref<16x1664xf32, #tpu.memory_space<vmem>>, vector<16x1xf32>
    %c256_160 = arith.constant 256 : index
    %c1_161 = arith.constant 1 : index
    %207 = vector.load %arg10[%c256_160, %c1_161] : memref<400x2xf32, #tpu.memory_space<vmem>>, vector<16x1xf32>
    tpu.vector_store %arg10[%c256_160, %c1_161], %206 {strides = array<i32>} : memref<400x2xf32, #tpu.memory_space<vmem>>, vector<16x1xf32>,
    %c0_162 = arith.constant 0 : index
    %c392 = arith.constant 392 : index
    %208 = vector.load %arg9[%c0_162, %c392] : memref<16x1664xf32, #tpu.memory_space<vmem>>, vector<16x1xf32>
    %c272_163 = arith.constant 272 : index
    %c0_164 = arith.constant 0 : index
    %209 = vector.load %arg10[%c272_163, %c0_164] : memref<400x2xf32, #tpu.memory_space<vmem>>, vector<16x1xf32>
    tpu.vector_store %arg10[%c272_163, %c0_164], %208 {strides = array<i32>} : memref<400x2xf32, #tpu.memory_space<vmem>>, vector<16x1xf32>,
    %c0_165 = arith.constant 0 : index
    %c1416 = arith.constant 1416 : index
    %210 = vector.load %arg9[%c0_165, %c1416] : memref<16x1664xf32, #tpu.memory_space<vmem>>, vector<16x1xf32>
    %c272_166 = arith.constant 272 : index
    %c1_167 = arith.constant 1 : index
    %211 = vector.load %arg10[%c272_166, %c1_167] : memref<400x2xf32, #tpu.memory_space<vmem>>, vector<16x1xf32>
    tpu.vector_store %arg10[%c272_166, %c1_167], %210 {strides = array<i32>} : memref<400x2xf32, #tpu.memory_space<vmem>>, vector<16x1xf32>,
    %c0_168 = arith.constant 0 : index
    %c396 = arith.constant 396 : index
    %212 = vector.load %arg9[%c0_168, %c396] : memref<16x1664xf32, #tpu.memory_space<vmem>>, vector<16x1xf32>
    %c288 = arith.constant 288 : index
    %c0_169 = arith.constant 0 : index
    %213 = vector.load %arg10[%c288, %c0_169] : memref<400x2xf32, #tpu.memory_space<vmem>>, vector<16x1xf32>
    tpu.vector_store %arg10[%c288, %c0_169], %212 {strides = array<i32>} : memref<400x2xf32, #tpu.memory_space<vmem>>, vector<16x1xf32>,
    %c0_170 = arith.constant 0 : index
    %c1420 = arith.constant 1420 : index
    %214 = vector.load %arg9[%c0_170, %c1420] : memref<16x1664xf32, #tpu.memory_space<vmem>>, vector<16x1xf32>
    %c288_171 = arith.constant 288 : index
    %c1_172 = arith.constant 1 : index
    %215 = vector.load %arg10[%c288_171, %c1_172] : memref<400x2xf32, #tpu.memory_space<vmem>>, vector<16x1xf32>
    tpu.vector_store %arg10[%c288_171, %c1_172], %214 {strides = array<i32>} : memref<400x2xf32, #tpu.memory_space<vmem>>, vector<16x1xf32>,
    %c0_173 = arith.constant 0 : index
    %c400 = arith.constant 400 : index
    %216 = vector.load %arg9[%c0_173, %c400] : memref<16x1664xf32, #tpu.memory_space<vmem>>, vector<16x1xf32>
    %c304 = arith.constant 304 : index
    %c0_174 = arith.constant 0 : index
    %217 = vector.load %arg10[%c304, %c0_174] : memref<400x2xf32, #tpu.memory_space<vmem>>, vector<16x1xf32>
    tpu.vector_store %arg10[%c304, %c0_174], %216 {strides = array<i32>} : memref<400x2xf32, #tpu.memory_space<vmem>>, vector<16x1xf32>,
    %c0_175 = arith.constant 0 : index
    %c1424 = arith.constant 1424 : index
    %218 = vector.load %arg9[%c0_175, %c1424] : memref<16x1664xf32, #tpu.memory_space<vmem>>, vector<16x1xf32>
    %c304_176 = arith.constant 304 : index
    %c1_177 = arith.constant 1 : index
    %219 = vector.load %arg10[%c304_176, %c1_177] : memref<400x2xf32, #tpu.memory_space<vmem>>, vector<16x1xf32>
    tpu.vector_store %arg10[%c304_176, %c1_177], %218 {strides = array<i32>} : memref<400x2xf32, #tpu.memory_space<vmem>>, vector<16x1xf32>,
    %c0_178 = arith.constant 0 : index
    %c512 = arith.constant 512 : index
    %220 = vector.load %arg9[%c0_178, %c512] : memref<16x1664xf32, #tpu.memory_space<vmem>>, vector<16x1xf32>
    %c320 = arith.constant 320 : index
    %c0_179 = arith.constant 0 : index
    %221 = vector.load %arg10[%c320, %c0_179] : memref<400x2xf32, #tpu.memory_space<vmem>>, vector<16x1xf32>
    tpu.vector_store %arg10[%c320, %c0_179], %220 {strides = array<i32>} : memref<400x2xf32, #tpu.memory_space<vmem>>, vector<16x1xf32>,
    %c0_180 = arith.constant 0 : index
    %c1536 = arith.constant 1536 : index
    %222 = vector.load %arg9[%c0_180, %c1536] : memref<16x1664xf32, #tpu.memory_space<vmem>>, vector<16x1xf32>
    %c320_181 = arith.constant 320 : index
    %c1_182 = arith.constant 1 : index
    %223 = vector.load %arg10[%c320_181, %c1_182] : memref<400x2xf32, #tpu.memory_space<vmem>>, vector<16x1xf32>
    tpu.vector_store %arg10[%c320_181, %c1_182], %222 {strides = array<i32>} : memref<400x2xf32, #tpu.memory_space<vmem>>, vector<16x1xf32>,
    %c0_183 = arith.constant 0 : index
    %c516 = arith.constant 516 : index
    %224 = vector.load %arg9[%c0_183, %c516] : memref<16x1664xf32, #tpu.memory_space<vmem>>, vector<16x1xf32>
    %c336 = arith.constant 336 : index
    %c0_184 = arith.constant 0 : index
    %225 = vector.load %arg10[%c336, %c0_184] : memref<400x2xf32, #tpu.memory_space<vmem>>, vector<16x1xf32>
    tpu.vector_store %arg10[%c336, %c0_184], %224 {strides = array<i32>} : memref<400x2xf32, #tpu.memory_space<vmem>>, vector<16x1xf32>,
    %c0_185 = arith.constant 0 : index
    %c1540 = arith.constant 1540 : index
    %226 = vector.load %arg9[%c0_185, %c1540] : memref<16x1664xf32, #tpu.memory_space<vmem>>, vector<16x1xf32>
    %c336_186 = arith.constant 336 : index
    %c1_187 = arith.constant 1 : index
    %227 = vector.load %arg10[%c336_186, %c1_187] : memref<400x2xf32, #tpu.memory_space<vmem>>, vector<16x1xf32>
    tpu.vector_store %arg10[%c336_186, %c1_187], %226 {strides = array<i32>} : memref<400x2xf32, #tpu.memory_space<vmem>>, vector<16x1xf32>,
    %c0_188 = arith.constant 0 : index
    %c520 = arith.constant 520 : index
    %228 = vector.load %arg9[%c0_188, %c520] : memref<16x1664xf32, #tpu.memory_space<vmem>>, vector<16x1xf32>
    %c352 = arith.constant 352 : index
    %c0_189 = arith.constant 0 : index
    %229 = vector.load %arg10[%c352, %c0_189] : memref<400x2xf32, #tpu.memory_space<vmem>>, vector<16x1xf32>
    tpu.vector_store %arg10[%c352, %c0_189], %228 {strides = array<i32>} : memref<400x2xf32, #tpu.memory_space<vmem>>, vector<16x1xf32>,
    %c0_190 = arith.constant 0 : index
    %c1544 = arith.constant 1544 : index
    %230 = vector.load %arg9[%c0_190, %c1544] : memref<16x1664xf32, #tpu.memory_space<vmem>>, vector<16x1xf32>
    %c352_191 = arith.constant 352 : index
    %c1_192 = arith.constant 1 : index
    %231 = vector.load %arg10[%c352_191, %c1_192] : memref<400x2xf32, #tpu.memory_space<vmem>>, vector<16x1xf32>
    tpu.vector_store %arg10[%c352_191, %c1_192], %230 {strides = array<i32>} : memref<400x2xf32, #tpu.memory_space<vmem>>, vector<16x1xf32>,
    %c0_193 = arith.constant 0 : index
    %c524 = arith.constant 524 : index
    %232 = vector.load %arg9[%c0_193, %c524] : memref<16x1664xf32, #tpu.memory_space<vmem>>, vector<16x1xf32>
    %c368 = arith.constant 368 : index
    %c0_194 = arith.constant 0 : index
    %233 = vector.load %arg10[%c368, %c0_194] : memref<400x2xf32, #tpu.memory_space<vmem>>, vector<16x1xf32>
    tpu.vector_store %arg10[%c368, %c0_194], %232 {strides = array<i32>} : memref<400x2xf32, #tpu.memory_space<vmem>>, vector<16x1xf32>,
    %c0_195 = arith.constant 0 : index
    %c1548 = arith.constant 1548 : index
    %234 = vector.load %arg9[%c0_195, %c1548] : memref<16x1664xf32, #tpu.memory_space<vmem>>, vector<16x1xf32>
    %c368_196 = arith.constant 368 : index
    %c1_197 = arith.constant 1 : index
    %235 = vector.load %arg10[%c368_196, %c1_197] : memref<400x2xf32, #tpu.memory_space<vmem>>, vector<16x1xf32>
    tpu.vector_store %arg10[%c368_196, %c1_197], %234 {strides = array<i32>} : memref<400x2xf32, #tpu.memory_space<vmem>>, vector<16x1xf32>,
    %c0_198 = arith.constant 0 : index
    %c528 = arith.constant 528 : index
    %236 = vector.load %arg9[%c0_198, %c528] : memref<16x1664xf32, #tpu.memory_space<vmem>>, vector<16x1xf32>
    %c384_199 = arith.constant 384 : index
    %c0_200 = arith.constant 0 : index
    %237 = vector.load %arg10[%c384_199, %c0_200] : memref<400x2xf32, #tpu.memory_space<vmem>>, vector<16x1xf32>
    tpu.vector_store %arg10[%c384_199, %c0_200], %236 {strides = array<i32>} : memref<400x2xf32, #tpu.memory_space<vmem>>, vector<16x1xf32>,
    %c0_201 = arith.constant 0 : index
    %c1552 = arith.constant 1552 : index
    %238 = vector.load %arg9[%c0_201, %c1552] : memref<16x1664xf32, #tpu.memory_space<vmem>>, vector<16x1xf32>
    %c384_202 = arith.constant 384 : index
    %c1_203 = arith.constant 1 : index
    %239 = vector.load %arg10[%c384_202, %c1_203] : memref<400x2xf32, #tpu.memory_space<vmem>>, vector<16x1xf32>
    tpu.vector_store %arg10[%c384_202, %c1_203], %238 {strides = array<i32>} : memref<400x2xf32, #tpu.memory_space<vmem>>, vector<16x1xf32>,
    %c0_204 = arith.constant 0 : index
    %c0_205 = arith.constant 0 : index
    %240 = vector.load %arg4[%c0_204, %c0_205] : memref<120x400xf32, #tpu.memory_space<vmem>>, vector<120x400xf32>
    %c0_206 = arith.constant 0 : index
    %c0_207 = arith.constant 0 : index
    %241 = vector.load %arg10[%c0_206, %c0_207] : memref<400x2xf32, #tpu.memory_space<vmem>>, vector<400x2xf32>
    %cst_208 = arith.constant dense<0.000000e+00> : vector<120x2xf32>
    %242 = tpu.matmul %240, %241, %cst_208 {dimension_numbers = #tpu.dot_dimension_numbers<[1], [0], [0], [1], [0, 0, 1, 1], [], []>} : vector<120x400xf32>, vector<400x2xf32>, vector<120x2xf32> -> vector<120x2xf32>
    %c0_209 = arith.constant 0 : index
    %c0_210 = arith.constant 0 : index
    %243 = vector.load %arg6[%c0_209, %c0_210] : memref<120x3xf32, #tpu.memory_space<vmem>>, vector<120x1xf32>
    %244 = vector.broadcast %243 : vector<120x1xf32> to vector<120x2xf32>
    %245 = arith.addf %242, %244 : vector<120x2xf32>
    %cst_211 = arith.constant 0.000000e+00 : f32
    %246 = vector.broadcast %cst_211 : f32 to vector<120x2xf32>
    %247 = arith.maximumf %245, %246 : vector<120x2xf32>
    %c16_212 = arith.constant 16 : index
    %c0_213 = arith.constant 0 : index
    %248 = vector.load %arg5[%c16_212, %c0_213] : memref<100x120xf32, #tpu.memory_space<vmem>>, vector<84x120xf32>
    %cst_214 = arith.constant dense<0.000000e+00> : vector<84x2xf32>
    %249 = tpu.matmul %248, %247, %cst_214 {dimension_numbers = #tpu.dot_dimension_numbers<[1], [0], [0], [1], [0, 0, 1, 1], [], []>} : vector<84x120xf32>, vector<120x2xf32>, vector<84x2xf32> -> vector<84x2xf32>
    %c0_215 = arith.constant 0 : index
    %c1_216 = arith.constant 1 : index
    %250 = vector.load %arg6[%c0_215, %c1_216] : memref<120x3xf32, #tpu.memory_space<vmem>>, vector<84x1xf32>
    %251 = vector.broadcast %250 : vector<84x1xf32> to vector<84x2xf32>
    %252 = arith.addf %249, %251 : vector<84x2xf32>
    %cst_217 = arith.constant 0.000000e+00 : f32
    %253 = vector.broadcast %cst_217 : f32 to vector<84x2xf32>
    %254 = arith.maximumf %252, %253 : vector<84x2xf32>
    %c0_218 = arith.constant 0 : index
    %c0_219 = arith.constant 0 : index
    %255 = vector.load %arg5[%c0_218, %c0_219] : memref<100x120xf32, #tpu.memory_space<vmem>>, vector<10x84xf32>
    %cst_220 = arith.constant dense<0.000000e+00> : vector<10x2xf32>
    %256 = tpu.matmul %255, %254, %cst_220 {dimension_numbers = #tpu.dot_dimension_numbers<[1], [0], [0], [1], [0, 0, 1, 1], [], []>} : vector<10x84xf32>, vector<84x2xf32>, vector<10x2xf32> -> vector<10x2xf32>
    %c0_221 = arith.constant 0 : index
    %c2_222 = arith.constant 2 : index
    %257 = vector.load %arg6[%c0_221, %c2_222] : memref<120x3xf32, #tpu.memory_space<vmem>>, vector<10x1xf32>
    %258 = vector.broadcast %257 : vector<10x1xf32> to vector<10x2xf32>
    %259 = arith.addf %256, %258 : vector<10x2xf32>
    %c0_223 = arith.constant 0 : index
    %c0_224 = arith.constant 0 : index
    %260 = vector.load %arg7[%c0_223, %c0_224] : memref<10x2xf32, #tpu.memory_space<vmem>>, vector<10x2xf32>
    tpu.vector_store %arg7[%c0_223, %c0_224], %259 {strides = array<i32>} : memref<10x2xf32, #tpu.memory_space<vmem>>, vector<10x2xf32>,
    return
  }
}

</mosaic_0001>

<llo_original>
// kernel: lenet_forward.1
$region0: #{lenet_forward.1}
  #allocation0 [shape = 'u32[]', space=smem, size = 0x4, offset = 0x4, fixed_abs, tag = 'smem constant byte address 0x4 - core index']
  #allocation1 [shape = 'u32[72,128]{1,0:T(1,128)}', space=vmem, size = 0x9000, scoped, tag = 'internal scratch']
  #allocation2 [shape = 'bf16[30,2048]{1,0:T(8,128)(2,1)}', space=vmem, size = 0x20000, scoped, tag = 'scratch operand']
  #allocation3 [shape = 'f32[16,1664]{1,0:T(8,128)}', space=vmem, size = 0x1a000, scoped, tag = 'scratch operand']
  #allocation4 [shape = 'f32[400,2]{1,0:T(8,128)}', space=vmem, size = 0x32000, scoped, tag = 'scratch operand']
  %s0 = inlined_call_operand.vmem [shape: bf16[75,2048], index: 0, kind: input, shape index: {}]
  %s1 = inlined_call_operand.vmem [shape: bf16[6,75], index: 1, kind: input, shape index: {}]
  %s2 = inlined_call_operand.vmem [shape: bf16[80,30], index: 2, kind: input, shape index: {}]
  %s3 = inlined_call_operand.vmem [shape: f32[16,6], index: 3, kind: input, shape index: {}]
  %s4 = inlined_call_operand.vmem [shape: f32[120,400], index: 4, kind: input, shape index: {}]
  %s5 = inlined_call_operand.vmem [shape: f32[100,120], index: 5, kind: input, shape index: {}]
  %s6 = inlined_call_operand.vmem [shape: f32[120,3], index: 6, kind: input, shape index: {}]
  %s7 = inlined_call_operand.vmem [shape: f32[10,2], index: 7, kind: output, shape index: {}]
  %s8 = sld [smem:[#allocation0]]
  $region38: #{lenet_forward.1} parent=0
    _
  %s10 = ssub.s32 1, %s8
  %s11 = scalar_select 0, %s10, %s8
  // Predicated region
  $region2: #{lenet_forward.1} parent=0 // pred_check
    _
  $region3: #{lenet_forward.1} parent=0 // pred_check_branch
    %13 = sbr.rel (0) target = $region5
  $region4: #{lenet_forward.1} parent=0 // pred_region
    _
  $region5: #{lenet_forward.1} parent=0 // pred_fallthru
    _
  // Predicated region
  $region6: #{lenet_forward.1} parent=0 // pred_check
    _
  $region7: #{lenet_forward.1} parent=0 // pred_check_branch
    %15 = sbr.rel (0) target = $region9
  $region8: #{lenet_forward.1} parent=0 // pred_region
    _
  $region9: #{lenet_forward.1} parent=0 // pred_fallthru
    _
  // Predicated region
  $region10: #{lenet_forward.1} parent=0 // pred_check
    _
  $region11: #{lenet_forward.1} parent=0 // pred_check_branch
    %17 = sbr.rel (0) target = $region13
  $region12: #{lenet_forward.1} parent=0 // pred_region
    _
  $region13: #{lenet_forward.1} parent=0 // pred_fallthru
    _
  // Predicated region
  $region14: #{lenet_forward.1} parent=0 // pred_check
    _
  $region15: #{lenet_forward.1} parent=0 // pred_check_branch
    %19 = sbr.rel (0) target = $region17
  $region16: #{lenet_forward.1} parent=0 // pred_region
    _
  $region17: #{lenet_forward.1} parent=0 // pred_fallthru
    _
  // Predicated region
  $region18: #{lenet_forward.1} parent=0 // pred_check
    _
  $region19: #{lenet_forward.1} parent=0 // pred_check_branch
    %21 = sbr.rel (0) target = $region21
  $region20: #{lenet_forward.1} parent=0 // pred_region
    _
  $region21: #{lenet_forward.1} parent=0 // pred_fallthru
    _
  // Predicated region
  $region22: #{lenet_forward.1} parent=0 // pred_check
    _
  $region23: #{lenet_forward.1} parent=0 // pred_check_branch
    %23 = sbr.rel (0) target = $region25
  $region24: #{lenet_forward.1} parent=0 // pred_region
    _
  $region25: #{lenet_forward.1} parent=0 // pred_fallthru
    _
  // Predicated region
  $region26: #{lenet_forward.1} parent=0 // pred_check
    _
  $region27: #{lenet_forward.1} parent=0 // pred_check_branch
    %25 = sbr.rel (0) target = $region29
  $region28: #{lenet_forward.1} parent=0 // pred_region
    _
  $region29: #{lenet_forward.1} parent=0 // pred_fallthru
    _
  %v27 = vld [vmem:[%s1] sm:$0x7]
  %v28 = vld [vmem:[%s0] sm:$0xff]
  %v29 = vld [vmem:[%s0 + $0x8] sm:$0xff]
  %v30 = vld [vmem:[%s0 + $0x10] sm:$0xff]
  %v31 = vld [vmem:[%s0 + $0x18] sm:$0xff]
  %v32 = vld [vmem:[%s0 + $0x20] sm:$0xff]
  %v33 = vld [vmem:[%s0 + $0x28] sm:$0xff]
  %v34 = vld [vmem:[%s0 + $0x30] sm:$0xff]
  %v35 = vld [vmem:[%s0 + $0x38] sm:$0xff]
  %v36 = vld [vmem:[%s0 + $0x40] sm:$0xff]
  %v37 = vld [vmem:[%s0 + $0x48] sm:$0xff]
  %v38 = vld [vmem:[%s0 + $0x50] sm:$0xff]
  %v39 = vld [vmem:[%s0 + $0x58] sm:$0xff]
  %v40 = vld [vmem:[%s0 + $0x60] sm:$0xff]
  %v41 = vld [vmem:[%s0 + $0x68] sm:$0xff]
  %v42 = vld [vmem:[%s0 + $0x70] sm:$0xff]
  %v43 = vld [vmem:[%s0 + $0x78] sm:$0xff]
  %v44 = vld [vmem:[%s0 + $0x80] sm:$0xff]
  %v45 = vld [vmem:[%s0 + $0x88] sm:$0xff]
  %v46 = vld [vmem:[%s0 + $0x90] sm:$0xff]
  %v47 = vld [vmem:[%s0 + $0x98] sm:$0xff]
  %v48 = vld [vmem:[%s0 + $0xa0] sm:$0xff]
  %v49 = vld [vmem:[%s0 + $0xa8] sm:$0xff]
  %v50 = vld [vmem:[%s0 + $0xb0] sm:$0xff]
  %v51 = vld [vmem:[%s0 + $0xb8] sm:$0xff]
  %v52 = vld [vmem:[%s0 + $0xc0] sm:$0xff]
  %v53 = vld [vmem:[%s0 + $0xc8] sm:$0xff]
  %v54 = vld [vmem:[%s0 + $0xd0] sm:$0xff]
  %v55 = vld [vmem:[%s0 + $0xd8] sm:$0xff]
  %v56 = vld [vmem:[%s0 + $0xe0] sm:$0xff]
  %v57 = vld [vmem:[%s0 + $0xe8] sm:$0xff]
  %v58 = vld [vmem:[%s0 + $0xf0] sm:$0xff]
  %v59 = vld [vmem:[%s0 + $0xf8] sm:$0xff]
  %v60 = vld [vmem:[%s0 + $0x100] sm:$0xff]
  %v61 = vld [vmem:[%s0 + $0x108] sm:$0xff]
  %v62 = vld [vmem:[%s0 + $0x110] sm:$0xff]
  %v63 = vld [vmem:[%s0 + $0x118] sm:$0xff]
  %v64 = vld [vmem:[%s0 + $0x120] sm:$0xff]
  %v65 = vld [vmem:[%s0 + $0x128] sm:$0xff]
  %v66 = vld [vmem:[%s0 + $0x130] sm:$0xff]
  %v67 = vld [vmem:[%s0 + $0x138] sm:$0xff]
  %v68 = vld [vmem:[%s0 + $0x140] sm:$0xff]
  %v69 = vld [vmem:[%s0 + $0x148] sm:$0xff]
  %v70 = vld [vmem:[%s0 + $0x150] sm:$0xff]
  %v71 = vld [vmem:[%s0 + $0x158] sm:$0xff]
  %v72 = vld [vmem:[%s0 + $0x160] sm:$0xff]
  %v73 = vld [vmem:[%s0 + $0x168] sm:$0xff]
  %v74 = vld [vmem:[%s0 + $0x170] sm:$0xff]
  %v75 = vld [vmem:[%s0 + $0x178] sm:$0xff]
  %v76 = vld [vmem:[%s0 + $0x180] sm:$0xff]
  %v77 = vld [vmem:[%s0 + $0x188] sm:$0xff]
  %v78 = vld [vmem:[%s0 + $0x190] sm:$0xff]
  %v79 = vld [vmem:[%s0 + $0x198] sm:$0xff]
  %v80 = vld [vmem:[%s0 + $0x1a0] sm:$0xff]
  %v81 = vld [vmem:[%s0 + $0x1a8] sm:$0xff]
  %v82 = vld [vmem:[%s0 + $0x1b0] sm:$0xff]
  %v83 = vld [vmem:[%s0 + $0x1b8] sm:$0xff]
  %v84 = vld [vmem:[%s0 + $0x1c0] sm:$0xff]
  %v85 = vld [vmem:[%s0 + $0x1c8] sm:$0xff]
  %v86 = vld [vmem:[%s0 + $0x1d0] sm:$0xff]
  %v87 = vld [vmem:[%s0 + $0x1d8] sm:$0xff]
  %v88 = vld [vmem:[%s0 + $0x1e0] sm:$0xff]
  %v89 = vld [vmem:[%s0 + $0x1e8] sm:$0xff]
  %v90 = vld [vmem:[%s0 + $0x1f0] sm:$0xff]
  %v91 = vld [vmem:[%s0 + $0x1f8] sm:$0xff]
  %v92 = vld [vmem:[%s0 + $0x200] sm:$0xff]
  %v93 = vld [vmem:[%s0 + $0x208] sm:$0xff]
  %v94 = vld [vmem:[%s0 + $0x210] sm:$0xff]
  %v95 = vld [vmem:[%s0 + $0x218] sm:$0xff]
  %v96 = vld [vmem:[%s0 + $0x220] sm:$0xff]
  %v97 = vld [vmem:[%s0 + $0x228] sm:$0xff]
  %v98 = vld [vmem:[%s0 + $0x230] sm:$0xff]
  %v99 = vld [vmem:[%s0 + $0x238] sm:$0xff]
  %v100 = vld [vmem:[%s0 + $0x240] sm:$0x33]
  %v101 = vld [vmem:[%s0 + $0x248] sm:$0x33]
  %v102 = vld [vmem:[%s0 + $0x250] sm:$0x33]
  %v103 = vld [vmem:[%s0 + $0x258] sm:$0x33]
  %v104 = vld [vmem:[%s0 + $0x260] sm:$0x33]
  %v105 = vld [vmem:[%s0 + $0x268] sm:$0x33]
  %v106 = vld [vmem:[%s0 + $0x270] sm:$0x33]
  %v107 = vld [vmem:[%s0 + $0x278] sm:$0x33]
  %v108 = vld [vmem:[%s3] sm:$0x3f]
  %110 = vset.pattern.permute.xlu0 0
  %111 = vperm.xlu0 %110, %v108
  %v112 = vpop.permute.xlu0 %111
  %v194 = vunpack.c.l.b16 %v28
  %v195 = vunpack.c.h.b16 %v28
  %v196 = vunpack.c.l.b16 %v29
  %v197 = vunpack.c.h.b16 %v29
  %v198 = vunpack.c.l.b16 %v30
  %v199 = vunpack.c.h.b16 %v30
  %v200 = vunpack.c.l.b16 %v31
  %v201 = vunpack.c.h.b16 %v31
  %v202 = vunpack.c.l.b16 %v32
  %v203 = vunpack.c.h.b16 %v32
  %v204 = vunpack.c.l.b16 %v33
  %v205 = vunpack.c.h.b16 %v33
  %v206 = vunpack.c.l.b16 %v34
  %v207 = vunpack.c.h.b16 %v34
  %v208 = vunpack.c.l.b16 %v35
  %v209 = vunpack.c.h.b16 %v35
  %v210 = vunpack.c.l.b16 %v36
  %v211 = vunpack.c.h.b16 %v36
  %v212 = vunpack.c.l.b16 %v37
  %v213 = vunpack.c.h.b16 %v37
  %v214 = vunpack.c.l.b16 %v38
  %v215 = vunpack.c.h.b16 %v38
  %v216 = vunpack.c.l.b16 %v39
  %v217 = vunpack.c.h.b16 %v39
  %v218 = vunpack.c.l.b16 %v40
  %v219 = vunpack.c.h.b16 %v40
  %v220 = vunpack.c.l.b16 %v41
  %v221 = vunpack.c.h.b16 %v41
  %v222 = vunpack.c.l.b16 %v42
  %v223 = vunpack.c.h.b16 %v42
  %v224 = vunpack.c.l.b16 %v43
  %v225 = vunpack.c.h.b16 %v43
  %v226 = vunpack.c.l.b16 %v44
  %v227 = vunpack.c.h.b16 %v44
  %v228 = vunpack.c.l.b16 %v45
  %v229 = vunpack.c.h.b16 %v45
  %v230 = vunpack.c.l.b16 %v46
  %v231 = vunpack.c.h.b16 %v46
  %v232 = vunpack.c.l.b16 %v47
  %v233 = vunpack.c.h.b16 %v47
  %v234 = vunpack.c.l.b16 %v48
  %v235 = vunpack.c.h.b16 %v48
  %v236 = vunpack.c.l.b16 %v49
  %v237 = vunpack.c.h.b16 %v49
  %v238 = vunpack.c.l.b16 %v50
  %v239 = vunpack.c.h.b16 %v50
  %v240 = vunpack.c.l.b16 %v51
  %v241 = vunpack.c.h.b16 %v51
  %v242 = vunpack.c.l.b16 %v52
  %v243 = vunpack.c.h.b16 %v52
  %v244 = vunpack.c.l.b16 %v53
  %v245 = vunpack.c.h.b16 %v53
  %v246 = vunpack.c.l.b16 %v54
  %v247 = vunpack.c.h.b16 %v54
  %v248 = vunpack.c.l.b16 %v55
  %v249 = vunpack.c.h.b16 %v55
  %v250 = vunpack.c.l.b16 %v56
  %v251 = vunpack.c.h.b16 %v56
  %v252 = vunpack.c.l.b16 %v57
  %v253 = vunpack.c.h.b16 %v57
  %v254 = vunpack.c.l.b16 %v58
  %v255 = vunpack.c.h.b16 %v58
  %v256 = vunpack.c.l.b16 %v59
  %v257 = vunpack.c.h.b16 %v59
  %v258 = vunpack.c.l.b16 %v60
  %v259 = vunpack.c.h.b16 %v60
  %v260 = vunpack.c.l.b16 %v61
  %v261 = vunpack.c.h.b16 %v61
  %v262 = vunpack.c.l.b16 %v62
  %v263 = vunpack.c.h.b16 %v62
  %v264 = vunpack.c.l.b16 %v63
  %v265 = vunpack.c.h.b16 %v63
  %v266 = vunpack.c.l.b16 %v64
  %v267 = vunpack.c.h.b16 %v64
  %v268 = vunpack.c.l.b16 %v65
  %v269 = vunpack.c.h.b16 %v65
  %v270 = vunpack.c.l.b16 %v66
  %v271 = vunpack.c.h.b16 %v66
  %v272 = vunpack.c.l.b16 %v67
  %v273 = vunpack.c.h.b16 %v67
  %v274 = vunpack.c.l.b16 %v68
  %v275 = vunpack.c.h.b16 %v68
  %v276 = vunpack.c.l.b16 %v69
  %v277 = vunpack.c.h.b16 %v69
  %v278 = vunpack.c.l.b16 %v70
  %v279 = vunpack.c.h.b16 %v70
  %v280 = vunpack.c.l.b16 %v71
  %v281 = vunpack.c.h.b16 %v71
  %v282 = vunpack.c.l.b16 %v72
  %v283 = vunpack.c.h.b16 %v72
  %v284 = vunpack.c.l.b16 %v73
  %v285 = vunpack.c.h.b16 %v73
  %v286 = vunpack.c.l.b16 %v74
  %v287 = vunpack.c.h.b16 %v74
  %v288 = vunpack.c.l.b16 %v75
  %v289 = vunpack.c.h.b16 %v75
  %v290 = vunpack.c.l.b16 %v76
  %v291 = vunpack.c.h.b16 %v76
  %v292 = vunpack.c.l.b16 %v77
  %v293 = vunpack.c.h.b16 %v77
  %v294 = vunpack.c.l.b16 %v78
  %v295 = vunpack.c.h.b16 %v78
  %v296 = vunpack.c.l.b16 %v79
  %v297 = vunpack.c.h.b16 %v79
  %v298 = vunpack.c.l.b16 %v80
  %v299 = vunpack.c.h.b16 %v80
  %v300 = vunpack.c.l.b16 %v81
  %v301 = vunpack.c.h.b16 %v81
  %v302 = vunpack.c.l.b16 %v82
  %v303 = vunpack.c.h.b16 %v82
  %v304 = vunpack.c.l.b16 %v83
  %v305 = vunpack.c.h.b16 %v83
  %v306 = vunpack.c.l.b16 %v84
  %v307 = vunpack.c.h.b16 %v84
  %v308 = vunpack.c.l.b16 %v85
  %v309 = vunpack.c.h.b16 %v85
  %v310 = vunpack.c.l.b16 %v86
  %v311 = vunpack.c.h.b16 %v86
  %v312 = vunpack.c.l.b16 %v87
  %v313 = vunpack.c.h.b16 %v87
  %v314 = vunpack.c.l.b16 %v88
  %v315 = vunpack.c.h.b16 %v88
  %v316 = vunpack.c.l.b16 %v89
  %v317 = vunpack.c.h.b16 %v89
  %v318 = vunpack.c.l.b16 %v90
  %v319 = vunpack.c.h.b16 %v90
  %v320 = vunpack.c.l.b16 %v91
  %v321 = vunpack.c.h.b16 %v91
  %v322 = vunpack.c.l.b16 %v92
  %v323 = vunpack.c.h.b16 %v92
  %v324 = vunpack.c.l.b16 %v93
  %v325 = vunpack.c.h.b16 %v93
  %v326 = vunpack.c.l.b16 %v94
  %v327 = vunpack.c.h.b16 %v94
  %v328 = vunpack.c.l.b16 %v95
  %v329 = vunpack.c.h.b16 %v95
  %v330 = vunpack.c.l.b16 %v96
  %v331 = vunpack.c.h.b16 %v96
  %v332 = vunpack.c.l.b16 %v97
  %v333 = vunpack.c.h.b16 %v97
  %v334 = vunpack.c.l.b16 %v98
  %v335 = vunpack.c.h.b16 %v98
  %v336 = vunpack.c.l.b16 %v99
  %v337 = vunpack.c.h.b16 %v99
  %v338 = vunpack.c.l.b16 %v100
  %v339 = vunpack.c.h.b16 %v100
  %v340 = vunpack.c.l.b16 %v101
  %v341 = vunpack.c.h.b16 %v101
  %v342 = vunpack.c.l.b16 %v102
  %v343 = vunpack.c.h.b16 %v102
  %v344 = vunpack.c.l.b16 %v103
  %v345 = vunpack.c.h.b16 %v103
  %v346 = vunpack.c.l.b16 %v104
  %v347 = vunpack.c.h.b16 %v104
  %v348 = vunpack.c.l.b16 %v105
  %v349 = vunpack.c.h.b16 %v105
  %v350 = vunpack.c.l.b16 %v106
  %v351 = vunpack.c.h.b16 %v106
  %v352 = vunpack.c.l.b16 %v107
  %v353 = vunpack.c.h.b16 %v107
  %v354 = vpack.c.b16 %v210, %v194
  %v355 = vpack.c.b16 %v211, %v195
  %v356 = vpack.c.b16 %v212, %v196
  %v357 = vpack.c.b16 %v213, %v197
  %v358 = vpack.c.b16 %v214, %v198
  %v359 = vpack.c.b16 %v215, %v199
  %v360 = vpack.c.b16 %v216, %v200
  %v361 = vpack.c.b16 %v217, %v201
  %v362 = vpack.c.b16 %v218, %v202
  %v363 = vpack.c.b16 %v219, %v203
  %v364 = vpack.c.b16 %v220, %v204
  %v365 = vpack.c.b16 %v221, %v205
  %v366 = vpack.c.b16 %v222, %v206
  %v367 = vpack.c.b16 %v223, %v207
  %v368 = vpack.c.b16 %v224, %v208
  %v369 = vpack.c.b16 %v225, %v209
  %v370 = vpack.c.b16 %v242, %v226
  %v371 = vpack.c.b16 %v243, %v227
  %v372 = vpack.c.b16 %v244, %v228
  %v373 = vpack.c.b16 %v245, %v229
  %v374 = vpack.c.b16 %v246, %v230
  %v375 = vpack.c.b16 %v247, %v231
  %v376 = vpack.c.b16 %v248, %v232
  %v377 = vpack.c.b16 %v249, %v233
  %v378 = vpack.c.b16 %v250, %v234
  %v379 = vpack.c.b16 %v251, %v235
  %v380 = vpack.c.b16 %v252, %v236
  %v381 = vpack.c.b16 %v253, %v237
  %v382 = vpack.c.b16 %v254, %v238
  %v383 = vpack.c.b16 %v255, %v239
  %v384 = vpack.c.b16 %v256, %v240
  %v385 = vpack.c.b16 %v257, %v241
  %v386 = vpack.c.b16 %v274, %v258
  %v387 = vpack.c.b16 %v275, %v259
  %v388 = vpack.c.b16 %v276, %v260
  %v389 = vpack.c.b16 %v277, %v261
  %v390 = vpack.c.b16 %v278, %v262
  %v391 = vpack.c.b16 %v279, %v263
  %v392 = vpack.c.b16 %v280, %v264
  %v393 = vpack.c.b16 %v281, %v265
  %v394 = vpack.c.b16 %v282, %v266
  %v395 = vpack.c.b16 %v283, %v267
  %v396 = vpack.c.b16 %v284, %v268
  %v397 = vpack.c.b16 %v285, %v269
  %v398 = vpack.c.b16 %v286, %v270
  %v399 = vpack.c.b16 %v287, %v271
  %v400 = vpack.c.b16 %v288, %v272
  %v401 = vpack.c.b16 %v289, %v273
  %v402 = vpack.c.b16 %v306, %v290
  %v403 = vpack.c.b16 %v307, %v291
  %v404 = vpack.c.b16 %v308, %v292
  %v405 = vpack.c.b16 %v309, %v293
  %v406 = vpack.c.b16 %v310, %v294
  %v407 = vpack.c.b16 %v311, %v295
  %v408 = vpack.c.b16 %v312, %v296
  %v409 = vpack.c.b16 %v313, %v297
  %v410 = vpack.c.b16 %v314, %v298
  %v411 = vpack.c.b16 %v315, %v299
  %v412 = vpack.c.b16 %v316, %v300
  %v413 = vpack.c.b16 %v317, %v301
  %v414 = vpack.c.b16 %v318, %v302
  %v415 = vpack.c.b16 %v319, %v303
  %v416 = vpack.c.b16 %v320, %v304
  %v417 = vpack.c.b16 %v321, %v305
  %v418 = vpack.c.b16 %v338, %v322
  %v419 = vpack.c.b16 %v339, %v323
  %v420 = vpack.c.b16 %v340, %v324
  %v421 = vpack.c.b16 %v341, %v325
  %v422 = vpack.c.b16 %v342, %v326
  %v423 = vpack.c.b16 %v343, %v327
  %v424 = vpack.c.b16 %v344, %v328
  %v425 = vpack.c.b16 %v345, %v329
  %v426 = vpack.c.b16 %v346, %v330
  %v427 = vpack.c.b16 %v347, %v331
  %v428 = vpack.c.b16 %v348, %v332
  %v429 = vpack.c.b16 %v349, %v333
  %v430 = vpack.c.b16 %v350, %v334
  %v431 = vpack.c.b16 %v351, %v335
  %v432 = vpack.c.b16 %v352, %v336
  %v433 = vpack.c.b16 %v353, %v337
  %vm498 = vcmask 613376
  %v500 = vsel %vm498, %v27, 0
  %vm502 = vcmask 1044480
  %vm503 = vcmask 1045504
  %v504 = vsel %vm502, 4294967295, 65535
  %v505 = vsel %vm503, %v504, 0
  %v507 = vand.u32 %v418, %v505
  %v510 = vand.u32 %v419, %v505
  %v513 = vand.u32 %v420, %v505
  %v516 = vand.u32 %v421, %v505
  %v519 = vand.u32 %v422, %v505
  %v522 = vand.u32 %v423, %v505
  %v525 = vand.u32 %v424, %v505
  %v528 = vand.u32 %v425, %v505
  %v531 = vand.u32 %v426, %v505
  %v534 = vand.u32 %v427, %v505
  %v537 = vand.u32 %v428, %v505
  %v540 = vand.u32 %v429, %v505
  %v543 = vand.u32 %v430, %v505
  %v546 = vand.u32 %v431, %v505
  %v549 = vand.u32 %v432, %v505
  %v552 = vand.u32 %v433, %v505
  %554 = vmatpush.bf16.msra.mxu0 0
  %555 = vmatpush.bf16.msra.mxu0 0
  %556 = vmatpush.bf16.msra.mxu0 0
  %557 = vmatpush.bf16.msra.mxu0 %v507
  %558 = vmatpush.bf16.msra.mxu0 %v402
  %559 = vmatpush.bf16.msra.mxu0 %v386
  %560 = vmatpush.bf16.msra.mxu0 %v370
  %561 = vmatpush.bf16.msra.mxu0 %v354
  %562 = vmatmul.bf16.gmra.mxu0 %v500
  %v563 = vpop.f32.mrf.mxu0
  %v564 = vadd.f32 %v112, %v563
  %v565 = vpop.f32.mrf.mxu0
  %566 = vdwg.mxu0
  %567 = vmatpush.bf16.msra.mxu0 0
  %568 = vmatpush.bf16.msra.mxu0 0
  %569 = vmatpush.bf16.msra.mxu0 0
  %570 = vmatpush.bf16.msra.mxu0 %v510
  %571 = vmatpush.bf16.msra.mxu0 %v403
  %572 = vmatpush.bf16.msra.mxu0 %v387
  %573 = vmatpush.bf16.msra.mxu0 %v371
  %574 = vmatpush.bf16.msra.mxu0 %v355
  %575 = vmatmul.bf16.gmra.mxu0 %v500
  %v576 = vpop.f32.mrf.mxu0
  %v577 = vadd.f32 %v112, %v576
  %v578 = vpop.f32.mrf.mxu0
  %579 = vdwg.mxu0
  %580 = vmatpush.bf16.msra.mxu0 0
  %581 = vmatpush.bf16.msra.mxu0 0
  %582 = vmatpush.bf16.msra.mxu0 0
  %583 = vmatpush.bf16.msra.mxu0 %v513
  %584 = vmatpush.bf16.msra.mxu0 %v404
  %585 = vmatpush.bf16.msra.mxu0 %v388
  %586 = vmatpush.bf16.msra.mxu0 %v372
  %587 = vmatpush.bf16.msra.mxu0 %v356
  %588 = vmatmul.bf16.gmra.mxu0 %v500
  %v589 = vpop.f32.mrf.mxu0
  %v590 = vadd.f32 %v112, %v589
  %v591 = vpop.f32.mrf.mxu0
  %592 = vdwg.mxu0
  %593 = vmatpush.bf16.msra.mxu0 0
  %594 = vmatpush.bf16.msra.mxu0 0
  %595 = vmatpush.bf16.msra.mxu0 0
  %596 = vmatpush.bf16.msra.mxu0 %v516
  %597 = vmatpush.bf16.msra.mxu0 %v405
  %598 = vmatpush.bf16.msra.mxu0 %v389
  %599 = vmatpush.bf16.msra.mxu0 %v373
  %600 = vmatpush.bf16.msra.mxu0 %v357
  %601 = vmatmul.bf16.gmra.mxu0 %v500
  %v602 = vpop.f32.mrf.mxu0
  %v603 = vadd.f32 %v112, %v602
  %v604 = vpop.f32.mrf.mxu0
  %605 = vdwg.mxu0
  %606 = vmatpush.bf16.msra.mxu0 0
  %607 = vmatpush.bf16.msra.mxu0 0
  %608 = vmatpush.bf16.msra.mxu0 0
  %609 = vmatpush.bf16.msra.mxu0 %v519
  %610 = vmatpush.bf16.msra.mxu0 %v406
  %611 = vmatpush.bf16.msra.mxu0 %v390
  %612 = vmatpush.bf16.msra.mxu0 %v374
  %613 = vmatpush.bf16.msra.mxu0 %v358
  %614 = vmatmul.bf16.gmra.mxu0 %v500
  %v615 = vpop.f32.mrf.mxu0
  %v616 = vadd.f32 %v112, %v615
  %v617 = vpop.f32.mrf.mxu0
  %618 = vdwg.mxu0
  %619 = vmatpush.bf16.msra.mxu0 0
  %620 = vmatpush.bf16.msra.mxu0 0
  %621 = vmatpush.bf16.msra.mxu0 0
  %622 = vmatpush.bf16.msra.mxu0 %v522
  %623 = vmatpush.bf16.msra.mxu0 %v407
  %624 = vmatpush.bf16.msra.mxu0 %v391
  %625 = vmatpush.bf16.msra.mxu0 %v375
  %626 = vmatpush.bf16.msra.mxu0 %v359
  %627 = vmatmul.bf16.gmra.mxu0 %v500
  %v628 = vpop.f32.mrf.mxu0
  %v629 = vadd.f32 %v112, %v628
  %v630 = vpop.f32.mrf.mxu0
  %631 = vdwg.mxu0
  %632 = vmatpush.bf16.msra.mxu0 0
  %633 = vmatpush.bf16.msra.mxu0 0
  %634 = vmatpush.bf16.msra.mxu0 0
  %635 = vmatpush.bf16.msra.mxu0 %v525
  %636 = vmatpush.bf16.msra.mxu0 %v408
  %637 = vmatpush.bf16.msra.mxu0 %v392
  %638 = vmatpush.bf16.msra.mxu0 %v376
  %639 = vmatpush.bf16.msra.mxu0 %v360
  %640 = vmatmul.bf16.gmra.mxu0 %v500
  %v641 = vpop.f32.mrf.mxu0
  %v642 = vadd.f32 %v112, %v641
  %v643 = vpop.f32.mrf.mxu0
  %644 = vdwg.mxu0
  %645 = vmatpush.bf16.msra.mxu0 0
  %646 = vmatpush.bf16.msra.mxu0 0
  %647 = vmatpush.bf16.msra.mxu0 0
  %648 = vmatpush.bf16.msra.mxu0 %v528
  %649 = vmatpush.bf16.msra.mxu0 %v409
  %650 = vmatpush.bf16.msra.mxu0 %v393
  %651 = vmatpush.bf16.msra.mxu0 %v377
  %652 = vmatpush.bf16.msra.mxu0 %v361
  %653 = vmatmul.bf16.gmra.mxu0 %v500
  %v654 = vpop.f32.mrf.mxu0
  %v655 = vadd.f32 %v112, %v654
  %v656 = vpop.f32.mrf.mxu0
  %657 = vdwg.mxu0
  %658 = vmatpush.bf16.msra.mxu0 0
  %659 = vmatpush.bf16.msra.mxu0 0
  %660 = vmatpush.bf16.msra.mxu0 0
  %661 = vmatpush.bf16.msra.mxu0 %v531
  %662 = vmatpush.bf16.msra.mxu0 %v410
  %663 = vmatpush.bf16.msra.mxu0 %v394
  %664 = vmatpush.bf16.msra.mxu0 %v378
  %665 = vmatpush.bf16.msra.mxu0 %v362
  %666 = vmatmul.bf16.gmra.mxu0 %v500
  %v667 = vpop.f32.mrf.mxu0
  %v668 = vadd.f32 %v112, %v667
  %v669 = vpop.f32.mrf.mxu0
  %670 = vdwg.mxu0
  %671 = vmatpush.bf16.msra.mxu0 0
  %672 = vmatpush.bf16.msra.mxu0 0
  %673 = vmatpush.bf16.msra.mxu0 0
  %674 = vmatpush.bf16.msra.mxu0 %v534
  %675 = vmatpush.bf16.msra.mxu0 %v411
  %676 = vmatpush.bf16.msra.mxu0 %v395
  %677 = vmatpush.bf16.msra.mxu0 %v379
  %678 = vmatpush.bf16.msra.mxu0 %v363
  %679 = vmatmul.bf16.gmra.mxu0 %v500
  %v680 = vpop.f32.mrf.mxu0
  %v681 = vadd.f32 %v112, %v680
  %v682 = vpop.f32.mrf.mxu0
  %683 = vdwg.mxu0
  %684 = vmatpush.bf16.msra.mxu0 0
  %685 = vmatpush.bf16.msra.mxu0 0
  %686 = vmatpush.bf16.msra.mxu0 0
  %687 = vmatpush.bf16.msra.mxu0 %v537
  %688 = vmatpush.bf16.msra.mxu0 %v412
  %689 = vmatpush.bf16.msra.mxu0 %v396
  %690 = vmatpush.bf16.msra.mxu0 %v380
  %691 = vmatpush.bf16.msra.mxu0 %v364
  %692 = vmatmul.bf16.gmra.mxu0 %v500
  %v693 = vpop.f32.mrf.mxu0
  %v694 = vadd.f32 %v112, %v693
  %v695 = vpop.f32.mrf.mxu0
  %696 = vdwg.mxu0
  %697 = vmatpush.bf16.msra.mxu0 0
  %698 = vmatpush.bf16.msra.mxu0 0
  %699 = vmatpush.bf16.msra.mxu0 0
  %700 = vmatpush.bf16.msra.mxu0 %v540
  %701 = vmatpush.bf16.msra.mxu0 %v413
  %702 = vmatpush.bf16.msra.mxu0 %v397
  %703 = vmatpush.bf16.msra.mxu0 %v381
  %704 = vmatpush.bf16.msra.mxu0 %v365
  %705 = vmatmul.bf16.gmra.mxu0 %v500
  %v706 = vpop.f32.mrf.mxu0
  %v707 = vadd.f32 %v112, %v706
  %v708 = vpop.f32.mrf.mxu0
  %709 = vdwg.mxu0
  %710 = vmatpush.bf16.msra.mxu0 0
  %711 = vmatpush.bf16.msra.mxu0 0
  %712 = vmatpush.bf16.msra.mxu0 0
  %713 = vmatpush.bf16.msra.mxu0 %v543
  %714 = vmatpush.bf16.msra.mxu0 %v414
  %715 = vmatpush.bf16.msra.mxu0 %v398
  %716 = vmatpush.bf16.msra.mxu0 %v382
  %717 = vmatpush.bf16.msra.mxu0 %v366
  %718 = vmatmul.bf16.gmra.mxu0 %v500
  %v719 = vpop.f32.mrf.mxu0
  %v720 = vadd.f32 %v112, %v719
  %v721 = vpop.f32.mrf.mxu0
  %722 = vdwg.mxu0
  %723 = vmatpush.bf16.msra.mxu0 0
  %724 = vmatpush.bf16.msra.mxu0 0
  %725 = vmatpush.bf16.msra.mxu0 0
  %726 = vmatpush.bf16.msra.mxu0 %v546
  %727 = vmatpush.bf16.msra.mxu0 %v415
  %728 = vmatpush.bf16.msra.mxu0 %v399
  %729 = vmatpush.bf16.msra.mxu0 %v383
  %730 = vmatpush.bf16.msra.mxu0 %v367
  %731 = vmatmul.bf16.gmra.mxu0 %v500
  %v732 = vpop.f32.mrf.mxu0
  %v733 = vadd.f32 %v112, %v732
  %v734 = vpop.f32.mrf.mxu0
  %735 = vdwg.mxu0
  %736 = vmatpush.bf16.msra.mxu0 0
  %737 = vmatpush.bf16.msra.mxu0 0
  %738 = vmatpush.bf16.msra.mxu0 0
  %739 = vmatpush.bf16.msra.mxu0 %v549
  %740 = vmatpush.bf16.msra.mxu0 %v416
  %741 = vmatpush.bf16.msra.mxu0 %v400
  %742 = vmatpush.bf16.msra.mxu0 %v384
  %743 = vmatpush.bf16.msra.mxu0 %v368
  %744 = vmatmul.bf16.gmra.mxu0 %v500
  %v745 = vpop.f32.mrf.mxu0
  %v746 = vadd.f32 %v112, %v745
  %v747 = vpop.f32.mrf.mxu0
  %748 = vdwg.mxu0
  %749 = vmatpush.bf16.msra.mxu0 0
  %750 = vmatpush.bf16.msra.mxu0 0
  %751 = vmatpush.bf16.msra.mxu0 0
  %752 = vmatpush.bf16.msra.mxu0 %v552
  %753 = vmatpush.bf16.msra.mxu0 %v417
  %754 = vmatpush.bf16.msra.mxu0 %v401
  %755 = vmatpush.bf16.msra.mxu0 %v385
  %756 = vmatpush.bf16.msra.mxu0 %v369
  %757 = vmatmul.bf16.gmra.mxu0 %v500
  %v758 = vpop.f32.mrf.mxu0
  %v759 = vadd.f32 %v112, %v758
  %v760 = vpop.f32.mrf.mxu0
  %761 = vdwg.mxu0
  %v762 = vlaneseq
  %v763 = vand.u32 %v762, 127
  %v764 = vadd.s32 %v763, 128
  %v765 = vadd.s32 %v763, 256
  %v766 = vadd.s32 %v763, 384
  %v767 = vadd.s32 %v763, 512
  %v768 = vadd.s32 %v763, 640
  %v769 = vadd.s32 %v763, 768
  %v770 = vadd.s32 %v763, 896
  %v771 = vadd.s32 %v763, 1024
  %v772 = vadd.s32 %v763, 1152
  %v773 = vadd.s32 %v763, 1280
  %v774 = vadd.s32 %v763, 1408
  %v775 = vadd.s32 %v763, 1536
  %v776 = vadd.s32 %v763, 1664
  %v777 = vadd.s32 %v763, 1792
  %v778 = vadd.s32 %v763, 1920
  %v779 = vand.u32 %v763, 1023
  %v780 = vand.u32 %v764, 1023
  %v781 = vand.u32 %v765, 1023
  %v782 = vand.u32 %v766, 1023
  %v783 = vand.u32 %v767, 1023
  %v784 = vand.u32 %v768, 1023
  %v785 = vand.u32 %v769, 1023
  %v786 = vand.u32 %v770, 1023
  %v787 = vand.u32 %v771, 1023
  %v788 = vand.u32 %v772, 1023
  %v789 = vand.u32 %v773, 1023
  %v790 = vand.u32 %v774, 1023
  %v791 = vand.u32 %v775, 1023
  %v792 = vand.u32 %v776, 1023
  %v793 = vand.u32 %v777, 1023
  %v794 = vand.u32 %v778, 1023
  %v795 = vand.u32 %v779, 31
  %v796 = vand.u32 %v780, 31
  %v797 = vand.u32 %v781, 31
  %v798 = vand.u32 %v782, 31
  %v799 = vand.u32 %v783, 31
  %v800 = vand.u32 %v784, 31
  %v801 = vand.u32 %v785, 31
  %v802 = vand.u32 %v786, 31
  %v803 = vand.u32 %v787, 31
  %v804 = vand.u32 %v788, 31
  %v805 = vand.u32 %v789, 31
  %v806 = vand.u32 %v790, 31
  %v807 = vand.u32 %v791, 31
  %v808 = vand.u32 %v792, 31
  %v809 = vand.u32 %v793, 31
  %v810 = vand.u32 %v794, 31
  %vm811 = vcmp.lt.s32.totalorder %v795, 28
  %vm812 = vcmp.lt.s32.totalorder %v796, 28
  %vm813 = vcmp.lt.s32.totalorder %v797, 28
  %vm814 = vcmp.lt.s32.totalorder %v798, 28
  %vm815 = vcmp.lt.s32.totalorder %v799, 28
  %vm816 = vcmp.lt.s32.totalorder %v800, 28
  %vm817 = vcmp.lt.s32.totalorder %v801, 28
  %vm818 = vcmp.lt.s32.totalorder %v802, 28
  %vm819 = vcmp.lt.s32.totalorder %v803, 28
  %vm820 = vcmp.lt.s32.totalorder %v804, 28
  %vm821 = vcmp.lt.s32.totalorder %v805, 28
  %vm822 = vcmp.lt.s32.totalorder %v806, 28
  %vm823 = vcmp.lt.s32.totalorder %v807, 28
  %vm824 = vcmp.lt.s32.totalorder %v808, 28
  %vm825 = vcmp.lt.s32.totalorder %v809, 28
  %vm826 = vcmp.lt.s32.totalorder %v810, 28
  %vm827 = vcmp.lt.s32.totalorder %v779, 896
  %vm828 = vcmp.lt.s32.totalorder %v780, 896
  %vm829 = vcmp.lt.s32.totalorder %v781, 896
  %vm830 = vcmp.lt.s32.totalorder %v782, 896
  %vm831 = vcmp.lt.s32.totalorder %v783, 896
  %vm832 = vcmp.lt.s32.totalorder %v784, 896
  %vm833 = vcmp.lt.s32.totalorder %v785, 896
  %vm834 = vcmp.lt.s32.totalorder %v786, 896
  %vm835 = vcmp.lt.s32.totalorder %v787, 896
  %vm836 = vcmp.lt.s32.totalorder %v788, 896
  %vm837 = vcmp.lt.s32.totalorder %v789, 896
  %vm838 = vcmp.lt.s32.totalorder %v790, 896
  %vm839 = vcmp.lt.s32.totalorder %v791, 896
  %vm840 = vcmp.lt.s32.totalorder %v792, 896
  %vm841 = vcmp.lt.s32.totalorder %v793, 896
  %vm842 = vcmp.lt.s32.totalorder %v794, 896
  %vm843 = vmand %vm811, %vm827
  %vm844 = vmand %vm812, %vm828
  %vm845 = vmand %vm813, %vm829
  %vm846 = vmand %vm814, %vm830
  %vm847 = vmand %vm815, %vm831
  %vm848 = vmand %vm816, %vm832
  %vm849 = vmand %vm817, %vm833
  %vm850 = vmand %vm818, %vm834
  %vm851 = vmand %vm819, %vm835
  %vm852 = vmand %vm820, %vm836
  %vm853 = vmand %vm821, %vm837
  %vm854 = vmand %vm822, %vm838
  %vm855 = vmand %vm823, %vm839
  %vm856 = vmand %vm824, %vm840
  %vm857 = vmand %vm825, %vm841
  %vm858 = vmand %vm826, %vm842
  %v859 = vsel %vm843, 1, 0
  %v860 = vsel %vm844, 1, 0
  %v861 = vsel %vm845, 1, 0
  %v862 = vsel %vm846, 1, 0
  %v863 = vsel %vm847, 1, 0
  %v864 = vsel %vm848, 1, 0
  %v865 = vsel %vm849, 1, 0
  %v866 = vsel %vm850, 1, 0
  %v867 = vsel %vm851, 1, 0
  %v868 = vsel %vm852, 1, 0
  %v869 = vsel %vm853, 1, 0
  %v870 = vsel %vm854, 1, 0
  %v871 = vsel %vm855, 1, 0
  %v872 = vsel %vm856, 1, 0
  %v873 = vsel %vm857, 1, 0
  %v874 = vsel %vm858, 1, 0
  %vm875 = vcmp.eq.s32.totalorder %v859, 1
  %vm876 = vcmp.eq.s32.totalorder %v860, 1
  %vm877 = vcmp.eq.s32.totalorder %v861, 1
  %vm878 = vcmp.eq.s32.totalorder %v862, 1
  %vm879 = vcmp.eq.s32.totalorder %v863, 1
  %vm880 = vcmp.eq.s32.totalorder %v864, 1
  %vm881 = vcmp.eq.s32.totalorder %v865, 1
  %vm882 = vcmp.eq.s32.totalorder %v866, 1
  %vm883 = vcmp.eq.s32.totalorder %v867, 1
  %vm884 = vcmp.eq.s32.totalorder %v868, 1
  %vm885 = vcmp.eq.s32.totalorder %v869, 1
  %vm886 = vcmp.eq.s32.totalorder %v870, 1
  %vm887 = vcmp.eq.s32.totalorder %v871, 1
  %vm888 = vcmp.eq.s32.totalorder %v872, 1
  %vm889 = vcmp.eq.s32.totalorder %v873, 1
  %vm890 = vcmp.eq.s32.totalorder %v874, 1
  %v891 = vsel %vm875, %v564, 0.0
  %v892 = vsel %vm876, %v577, 0.0
  %v893 = vsel %vm877, %v590, 0.0
  %v894 = vsel %vm878, %v603, 0.0
  %v895 = vsel %vm879, %v616, 0.0
  %v896 = vsel %vm880, %v629, 0.0
  %v897 = vsel %vm881, %v642, 0.0
  %v898 = vsel %vm882, %v655, 0.0
  %v899 = vsel %vm883, %v668, 0.0
  %v900 = vsel %vm884, %v681, 0.0
  %v901 = vsel %vm885, %v694, 0.0
  %v902 = vsel %vm886, %v707, 0.0
  %v903 = vsel %vm887, %v720, 0.0
  %v904 = vsel %vm888, %v733, 0.0
  %v905 = vsel %vm889, %v746, 0.0
  %v906 = vsel %vm890, %v759, 0.0
  %v907 = vsel %vm503, %v891, 0.0
  %v908 = vsel %vm503, %v892, 0.0
  %v909 = vadd.f32 %v907, %v908
  %v910 = vsel %vm503, %v893, 0.0
  %v911 = vadd.f32 %v909, %v910
  %v912 = vsel %vm503, %v894, 0.0
  %v913 = vadd.f32 %v911, %v912
  %v914 = vsel %vm503, %v895, 0.0
  %v915 = vadd.f32 %v913, %v914
  %v916 = vsel %vm503, %v896, 0.0
  %v917 = vadd.f32 %v915, %v916
  %v918 = vsel %vm503, %v897, 0.0
  %v919 = vadd.f32 %v917, %v918
  %v920 = vsel %vm503, %v898, 0.0
  %v921 = vadd.f32 %v919, %v920
  %v922 = vsel %vm503, %v899, 0.0
  %v923 = vadd.f32 %v921, %v922
  %v924 = vsel %vm503, %v900, 0.0
  %v925 = vadd.f32 %v923, %v924
  %v926 = vsel %vm503, %v901, 0.0
  %v927 = vadd.f32 %v925, %v926
  %v928 = vsel %vm503, %v902, 0.0
  %v929 = vadd.f32 %v927, %v928
  %v930 = vsel %vm503, %v903, 0.0
  %v931 = vadd.f32 %v929, %v930
  %v932 = vsel %vm503, %v904, 0.0
  %v933 = vadd.f32 %v931, %v932
  %v934 = vsel %vm503, %v905, 0.0
  %v935 = vadd.f32 %v933, %v934
  %v936 = vsel %vm503, %v906, 0.0
  %v937 = vadd.f32 %v935, %v936
  %938 = vadd.xlane.f32.xlu0 %v937
  %v939 = vpop.xlane.xlu0 %938
  %v940 = vmul.f32 %v939, 0.0006377551
  %v941 = vsub.f32 %v564, %v940
  %v942 = vsub.f32 %v577, %v940
  %v943 = vsub.f32 %v590, %v940
  %v944 = vsub.f32 %v603, %v940
  %v945 = vsub.f32 %v616, %v940
  %v946 = vsub.f32 %v629, %v940
  %v947 = vsub.f32 %v642, %v940
  %v948 = vsub.f32 %v655, %v940
  %v949 = vsub.f32 %v668, %v940
  %v950 = vsub.f32 %v681, %v940
  %v951 = vsub.f32 %v694, %v940
  %v952 = vsub.f32 %v707, %v940
  %v953 = vsub.f32 %v720, %v940
  %v954 = vsub.f32 %v733, %v940
  %v955 = vsub.f32 %v746, %v940
  %v956 = vsub.f32 %v759, %v940
  %v957 = vmul.f32 %v941, %v941
  %v958 = vmul.f32 %v942, %v942
  %v959 = vmul.f32 %v943, %v943
  %v960 = vmul.f32 %v944, %v944
  %v961 = vmul.f32 %v945, %v945
  %v962 = vmul.f32 %v946, %v946
  %v963 = vmul.f32 %v947, %v947
  %v964 = vmul.f32 %v948, %v948
  %v965 = vmul.f32 %v949, %v949
  %v966 = vmul.f32 %v950, %v950
  %v967 = vmul.f32 %v951, %v951
  %v968 = vmul.f32 %v952, %v952
  %v969 = vmul.f32 %v953, %v953
  %v970 = vmul.f32 %v954, %v954
  %v971 = vmul.f32 %v955, %v955
  %v972 = vmul.f32 %v956, %v956
  %v973 = vsel %vm875, %v957, 0.0
  %v974 = vsel %vm876, %v958, 0.0
  %v975 = vsel %vm877, %v959, 0.0
  %v976 = vsel %vm878, %v960, 0.0
  %v977 = vsel %vm879, %v961, 0.0
  %v978 = vsel %vm880, %v962, 0.0
  %v979 = vsel %vm881, %v963, 0.0
  %v980 = vsel %vm882, %v964, 0.0
  %v981 = vsel %vm883, %v965, 0.0
  %v982 = vsel %vm884, %v966, 0.0
  %v983 = vsel %vm885, %v967, 0.0
  %v984 = vsel %vm886, %v968, 0.0
  %v985 = vsel %vm887, %v969, 0.0
  %v986 = vsel %vm888, %v970, 0.0
  %v987 = vsel %vm889, %v971, 0.0
  %v988 = vsel %vm890, %v972, 0.0
  %v989 = vsel %vm503, %v973, 0.0
  %v990 = vsel %vm503, %v974, 0.0
  %v991 = vadd.f32 %v989, %v990
  %v992 = vsel %vm503, %v975, 0.0
  %v993 = vadd.f32 %v991, %v992
  %v994 = vsel %vm503, %v976, 0.0
  %v995 = vadd.f32 %v993, %v994
  %v996 = vsel %vm503, %v977, 0.0
  %v997 = vadd.f32 %v995, %v996
  %v998 = vsel %vm503, %v978, 0.0
  %v999 = vadd.f32 %v997, %v998
  %v1000 = vsel %vm503, %v979, 0.0
  %v1001 = vadd.f32 %v999, %v1000
  %v1002 = vsel %vm503, %v980, 0.0
  %v1003 = vadd.f32 %v1001, %v1002
  %v1004 = vsel %vm503, %v981, 0.0
  %v1005 = vadd.f32 %v1003, %v1004
  %v1006 = vsel %vm503, %v982, 0.0
  %v1007 = vadd.f32 %v1005, %v1006
  %v1008 = vsel %vm503, %v983, 0.0
  %v1009 = vadd.f32 %v1007, %v1008
  %v1010 = vsel %vm503, %v984, 0.0
  %v1011 = vadd.f32 %v1009, %v1010
  %v1012 = vsel %vm503, %v985, 0.0
  %v1013 = vadd.f32 %v1011, %v1012
  %v1014 = vsel %vm503, %v986, 0.0
  %v1015 = vadd.f32 %v1013, %v1014
  %v1016 = vsel %vm503, %v987, 0.0
  %v1017 = vadd.f32 %v1015, %v1016
  %v1018 = vsel %vm503, %v988, 0.0
  %v1019 = vadd.f32 %v1017, %v1018
  %1020 = vadd.xlane.f32.xlu0 %v1019
  %v1021 = vpop.xlane.xlu0 %1020
  %v1022 = vmul.f32 %v1021, 0.0006377551
  %v1023 = vadd.f32 %v1022, 1e-05
  %v1024 = vrsqrt.pop %v1023
  %v1025 = vmul.f32 %v1024, %v1023
  %v1026 = vmul.f32 %v1025, %v1024
  %v1027 = vmul.f32 0.5, %v1026
  %v1028 = vsub.f32 1.5, %v1027
  %v1029 = vmul.f32 %v1024, %v1028
  %vm1030 = vweird.f32 %v1023
  %vm1031 = vweird.f32 %v1024
  %vm1032 = vmor %vm1030, %vm1031
  %v1033 = vsel %vm1032, %v1024, %v1029
  %v1034 = vmul.f32 %v108, %v1033
  %1036 = vset.pattern.permute.xlu0 1
  %1037 = vperm.xlu0 %1036, %v1034
  %v1038 = vpop.permute.xlu0 %1037
  %v1040 = vmul.f32 %v941, %v1038
  %v1041 = vmul.f32 %v942, %v1038
  %v1042 = vmul.f32 %v943, %v1038
  %v1043 = vmul.f32 %v944, %v1038
  %v1044 = vmul.f32 %v945, %v1038
  %v1045 = vmul.f32 %v946, %v1038
  %v1046 = vmul.f32 %v947, %v1038
  %v1047 = vmul.f32 %v948, %v1038
  %v1048 = vmul.f32 %v949, %v1038
  %v1049 = vmul.f32 %v950, %v1038
  %v1050 = vmul.f32 %v951, %v1038
  %v1051 = vmul.f32 %v952, %v1038
  %v1052 = vmul.f32 %v953, %v1038
  %v1053 = vmul.f32 %v954, %v1038
  %v1054 = vmul.f32 %v955, %v1038
  %v1055 = vmul.f32 %v956, %v1038
  %1056 = vset.pattern.permute.xlu0 2
  %1057 = vperm.xlu0 %1056, %v108
  %v1058 = vpop.permute.xlu0 %1057
  %v1060 = vadd.f32 %v1040, %v1058
  %v1061 = vadd.f32 %v1041, %v1058
  %v1062 = vadd.f32 %v1042, %v1058
  %v1063 = vadd.f32 %v1043, %v1058
  %v1064 = vadd.f32 %v1044, %v1058
  %v1065 = vadd.f32 %v1045, %v1058
  %v1066 = vadd.f32 %v1046, %v1058
  %v1067 = vadd.f32 %v1047, %v1058
  %v1068 = vadd.f32 %v1048, %v1058
  %v1069 = vadd.f32 %v1049, %v1058
  %v1070 = vadd.f32 %v1050, %v1058
  %v1071 = vadd.f32 %v1051, %v1058
  %v1072 = vadd.f32 %v1052, %v1058
  %v1073 = vadd.f32 %v1053, %v1058
  %v1074 = vadd.f32 %v1054, %v1058
  %v1075 = vadd.f32 %v1055, %v1058
  %1092 = vrot.lane.b32.xlu0 %v1060, 127
  %v1093 = vpop.permute.xlu0 %1092
  %1094 = vrot.lane.b32.xlu0 %v1061, 127
  %v1095 = vpop.permute.xlu0 %1094
  %1096 = vrot.lane.b32.xlu0 %v1062, 127
  %v1097 = vpop.permute.xlu0 %1096
  %1098 = vrot.lane.b32.xlu0 %v1063, 127
  %v1099 = vpop.permute.xlu0 %1098
  %1100 = vrot.lane.b32.xlu0 %v1064, 127
  %v1101 = vpop.permute.xlu0 %1100
  %1102 = vrot.lane.b32.xlu0 %v1065, 127
  %v1103 = vpop.permute.xlu0 %1102
  %1104 = vrot.lane.b32.xlu0 %v1066, 127
  %v1105 = vpop.permute.xlu0 %1104
  %1106 = vrot.lane.b32.xlu0 %v1067, 127
  %v1107 = vpop.permute.xlu0 %1106
  %1108 = vrot.lane.b32.xlu0 %v1068, 127
  %v1109 = vpop.permute.xlu0 %1108
  %1110 = vrot.lane.b32.xlu0 %v1069, 127
  %v1111 = vpop.permute.xlu0 %1110
  %1112 = vrot.lane.b32.xlu0 %v1070, 127
  %v1113 = vpop.permute.xlu0 %1112
  %1114 = vrot.lane.b32.xlu0 %v1071, 127
  %v1115 = vpop.permute.xlu0 %1114
  %1116 = vrot.lane.b32.xlu0 %v1072, 127
  %v1117 = vpop.permute.xlu0 %1116
  %1118 = vrot.lane.b32.xlu0 %v1073, 127
  %v1119 = vpop.permute.xlu0 %1118
  %1120 = vrot.lane.b32.xlu0 %v1074, 127
  %v1121 = vpop.permute.xlu0 %1120
  %1122 = vrot.lane.b32.xlu0 %v1075, 127
  %v1123 = vpop.permute.xlu0 %1122
  %vm1124 = vcmask 1039360
  %v1125 = vsel %vm1124, %v1093, %v1095
  %v1126 = vsel %vm1124, %v1095, %v1097
  %v1127 = vsel %vm1124, %v1097, %v1099
  %v1128 = vsel %vm1124, %v1099, %v1101
  %v1129 = vsel %vm1124, %v1101, %v1103
  %v1130 = vsel %vm1124, %v1103, %v1105
  %v1131 = vsel %vm1124, %v1105, %v1107
  %v1132 = vsel %vm1124, %v1107, %v1109
  %v1133 = vsel %vm1124, %v1109, %v1111
  %v1134 = vsel %vm1124, %v1111, %v1113
  %v1135 = vsel %vm1124, %v1113, %v1115
  %v1136 = vsel %vm1124, %v1115, %v1117
  %v1137 = vsel %vm1124, %v1117, %v1119
  %v1138 = vsel %vm1124, %v1119, %v1121
  %v1139 = vsel %vm1124, %v1121, %v1123
  %v1156 = vmax.f32 %v1060, %v1125
  %v1157 = vmax.f32 %v1061, %v1126
  %v1158 = vmax.f32 %v1062, %v1127
  %v1159 = vmax.f32 %v1063, %v1128
  %v1160 = vmax.f32 %v1064, %v1129
  %v1161 = vmax.f32 %v1065, %v1130
  %v1162 = vmax.f32 %v1066, %v1131
  %v1163 = vmax.f32 %v1067, %v1132
  %v1164 = vmax.f32 %v1068, %v1133
  %v1165 = vmax.f32 %v1069, %v1134
  %v1166 = vmax.f32 %v1070, %v1135
  %v1167 = vmax.f32 %v1071, %v1136
  %v1168 = vmax.f32 %v1072, %v1137
  %v1169 = vmax.f32 %v1073, %v1138
  %v1170 = vmax.f32 %v1074, %v1139
  %v1171 = vmax.f32 %v1075, %v1123
  %1188 = vrot.lane.b32.xlu0 %v1156, 96
  %v1189 = vpop.permute.xlu0 %1188
  %1190 = vrot.lane.b32.xlu0 %v1157, 96
  %v1191 = vpop.permute.xlu0 %1190
  %1192 = vrot.lane.b32.xlu0 %v1158, 96
  %v1193 = vpop.permute.xlu0 %1192
  %1194 = vrot.lane.b32.xlu0 %v1159, 96
  %v1195 = vpop.permute.xlu0 %1194
  %1196 = vrot.lane.b32.xlu0 %v1160, 96
  %v1197 = vpop.permute.xlu0 %1196
  %1198 = vrot.lane.b32.xlu0 %v1161, 96
  %v1199 = vpop.permute.xlu0 %1198
  %1200 = vrot.lane.b32.xlu0 %v1162, 96
  %v1201 = vpop.permute.xlu0 %1200
  %1202 = vrot.lane.b32.xlu0 %v1163, 96
  %v1203 = vpop.permute.xlu0 %1202
  %1204 = vrot.lane.b32.xlu0 %v1164, 96
  %v1205 = vpop.permute.xlu0 %1204
  %1206 = vrot.lane.b32.xlu0 %v1165, 96
  %v1207 = vpop.permute.xlu0 %1206
  %1208 = vrot.lane.b32.xlu0 %v1166, 96
  %v1209 = vpop.permute.xlu0 %1208
  %1210 = vrot.lane.b32.xlu0 %v1167, 96
  %v1211 = vpop.permute.xlu0 %1210
  %1212 = vrot.lane.b32.xlu0 %v1168, 96
  %v1213 = vpop.permute.xlu0 %1212
  %1214 = vrot.lane.b32.xlu0 %v1169, 96
  %v1215 = vpop.permute.xlu0 %1214
  %1216 = vrot.lane.b32.xlu0 %v1170, 96
  %v1217 = vpop.permute.xlu0 %1216
  %1218 = vrot.lane.b32.xlu0 %v1171, 96
  %v1219 = vpop.permute.xlu0 %1218
  %vm1220 = vcmask 785408
  %v1221 = vsel %vm1220, %v1189, %v1191
  %v1222 = vsel %vm1220, %v1191, %v1193
  %v1223 = vsel %vm1220, %v1193, %v1195
  %v1224 = vsel %vm1220, %v1195, %v1197
  %v1225 = vsel %vm1220, %v1197, %v1199
  %v1226 = vsel %vm1220, %v1199, %v1201
  %v1227 = vsel %vm1220, %v1201, %v1203
  %v1228 = vsel %vm1220, %v1203, %v1205
  %v1229 = vsel %vm1220, %v1205, %v1207
  %v1230 = vsel %vm1220, %v1207, %v1209
  %v1231 = vsel %vm1220, %v1209, %v1211
  %v1232 = vsel %vm1220, %v1211, %v1213
  %v1233 = vsel %vm1220, %v1213, %v1215
  %v1234 = vsel %vm1220, %v1215, %v1217
  %v1235 = vsel %vm1220, %v1217, %v1219
  %v1252 = vmax.f32 %v1156, %v1221
  %v1253 = vmax.f32 %v1157, %v1222
  %v1254 = vmax.f32 %v1158, %v1223
  %v1255 = vmax.f32 %v1159, %v1224
  %v1256 = vmax.f32 %v1160, %v1225
  %v1257 = vmax.f32 %v1161, %v1226
  %v1258 = vmax.f32 %v1162, %v1227
  %v1259 = vmax.f32 %v1163, %v1228
  %v1260 = vmax.f32 %v1164, %v1229
  %v1261 = vmax.f32 %v1165, %v1230
  %v1262 = vmax.f32 %v1166, %v1231
  %v1263 = vmax.f32 %v1167, %v1232
  %v1264 = vmax.f32 %v1168, %v1233
  %v1265 = vmax.f32 %v1169, %v1234
  %v1266 = vmax.f32 %v1170, %v1235
  %v1267 = vmax.f32 %v1171, %v1219
  %v1268 = vmax.f32 %v1252, 0.0
  %v1269 = vmax.f32 %v1253, 0.0
  %v1270 = vmax.f32 %v1254, 0.0
  %v1271 = vmax.f32 %v1255, 0.0
  %v1272 = vmax.f32 %v1256, 0.0
  %v1273 = vmax.f32 %v1257, 0.0
  %v1274 = vmax.f32 %v1258, 0.0
  %v1275 = vmax.f32 %v1259, 0.0
  %v1276 = vmax.f32 %v1260, 0.0
  %v1277 = vmax.f32 %v1261, 0.0
  %v1278 = vmax.f32 %v1262, 0.0
  %v1279 = vmax.f32 %v1263, 0.0
  %v1280 = vmax.f32 %v1264, 0.0
  %v1281 = vmax.f32 %v1265, 0.0
  %v1282 = vmax.f32 %v1266, 0.0
  %v1283 = vmax.f32 %v1267, 0.0
  %v1284 = vpack.c.bf16 %v1269, %v1268
  %v1285 = vpack.c.bf16 %v1271, %v1270
  %v1286 = vpack.c.bf16 %v1273, %v1272
  %v1287 = vpack.c.bf16 %v1275, %v1274
  %v1288 = vpack.c.bf16 %v1277, %v1276
  %v1289 = vpack.c.bf16 %v1279, %v1278
  %v1290 = vpack.c.bf16 %v1281, %v1280
  %v1291 = vpack.c.bf16 %v1283, %v1282
  %1292 = vst [vmem:[#allocation2] sm:$0x77] %v1284
  %1293 = vst [vmem:[#allocation2 + $0x8] sm:$0x77] %v1285
  %1294 = vst [vmem:[#allocation2 + $0x10] sm:$0x77] %v1286
  %1295 = vst [vmem:[#allocation2 + $0x18] sm:$0x77] %v1287
  %1296 = vst [vmem:[#allocation2 + $0x20] sm:$0x77] %v1288
  %1297 = vst [vmem:[#allocation2 + $0x28] sm:$0x77] %v1289
  %1298 = vst [vmem:[#allocation2 + $0x30] sm:$0x77] %v1290
  %vm1299 = vcmask 1042432
  %vm1300 = vcmask 776196
  %vm1301 = vmor %vm1300, %vm1299
  %1302 = vst.msk [vmem:[#allocation2 + $0x38] sm:$0x77] %vm1301, %v1291
  %v1303 = vld [vmem:[#allocation2] sm:$0x77]
  %v1304 = vld [vmem:[#allocation2 + $0x8] sm:$0x77]
  %v1305 = vld [vmem:[#allocation2 + $0x10] sm:$0x77]
  %v1306 = vld [vmem:[#allocation2 + $0x18] sm:$0x77]
  %v1307 = vld [vmem:[#allocation2 + $0x20] sm:$0x77]
  %v1308 = vld [vmem:[#allocation2 + $0x28] sm:$0x77]
  %v1309 = vld [vmem:[#allocation2 + $0x30] sm:$0x77]
  %v1317 = vrot.slane %v1303, 5
  %v1318 = vrot.slane %v1304, 5
  %v1319 = vrot.slane %v1305, 5
  %v1320 = vrot.slane %v1306, 5
  %v1321 = vrot.slane %v1307, 5
  %v1322 = vrot.slane %v1308, 5
  %v1323 = vrot.slane %v1309, 5
  %v1324 = vrot.slane %v1317, 4
  %v1325 = vrot.slane %v1318, 4
  %v1326 = vrot.slane %v1319, 4
  %v1327 = vrot.slane %v1320, 4
  %v1328 = vrot.slane %v1321, 4
  %v1329 = vrot.slane %v1322, 4
  %v1330 = vrot.slane %v1323, 4
  %1331 = vrot.lane.b32.xlu0 %v1317, 64
  %v1332 = vpop.permute.xlu0 %1331
  %1333 = vrot.lane.b32.xlu0 %v1318, 64
  %v1334 = vpop.permute.xlu0 %1333
  %1335 = vrot.lane.b32.xlu0 %v1319, 64
  %v1336 = vpop.permute.xlu0 %1335
  %1337 = vrot.lane.b32.xlu0 %v1320, 64
  %v1338 = vpop.permute.xlu0 %1337
  %1339 = vrot.lane.b32.xlu0 %v1321, 64
  %v1340 = vpop.permute.xlu0 %1339
  %1341 = vrot.lane.b32.xlu0 %v1322, 64
  %v1342 = vpop.permute.xlu0 %1341
  %1343 = vrot.lane.b32.xlu0 %v1323, 64
  %v1344 = vpop.permute.xlu0 %1343
  %1345 = vrot.lane.b32.xlu0 %v1324, 64
  %v1346 = vpop.permute.xlu0 %1345
  %1347 = vrot.lane.b32.xlu0 %v1325, 64
  %v1348 = vpop.permute.xlu0 %1347
  %1349 = vrot.lane.b32.xlu0 %v1326, 64
  %v1350 = vpop.permute.xlu0 %1349
  %1351 = vrot.lane.b32.xlu0 %v1327, 64
  %v1352 = vpop.permute.xlu0 %1351
  %1353 = vrot.lane.b32.xlu0 %v1328, 64
  %v1354 = vpop.permute.xlu0 %1353
  %1355 = vrot.lane.b32.xlu0 %v1329, 64
  %v1356 = vpop.permute.xlu0 %1355
  %1357 = vrot.lane.b32.xlu0 %v1330, 64
  %v1358 = vpop.permute.xlu0 %1357
  %v1359 = vrot.slane %v1332, 4
  %v1360 = vrot.slane %v1334, 4
  %v1361 = vrot.slane %v1336, 4
  %v1362 = vrot.slane %v1338, 4
  %v1363 = vrot.slane %v1340, 4
  %v1364 = vrot.slane %v1342, 4
  %v1365 = vrot.slane %v1344, 4
  %v1366 = vrot.slane %v1346, 4
  %v1367 = vrot.slane %v1348, 4
  %v1368 = vrot.slane %v1350, 4
  %v1369 = vrot.slane %v1352, 4
  %v1370 = vrot.slane %v1354, 4
  %v1371 = vrot.slane %v1356, 4
  %v1372 = vrot.slane %v1358, 4
  %vm1373 = vcmask 1043456
  %v1374 = vsel %vm1373, %v1359, %v1360
  %vm1375 = vcmask 523264
  %v1376 = vsel %vm1375, %v1332, %v1374
  %v1377 = vsel %vm1373, %v1360, %v1361
  %v1378 = vsel %vm1375, %v1334, %v1377
  %v1379 = vsel %vm1373, %v1361, %v1362
  %v1380 = vsel %vm1375, %v1336, %v1379
  %v1381 = vsel %vm1373, %v1362, %v1363
  %v1382 = vsel %vm1375, %v1338, %v1381
  %v1383 = vsel %vm1373, %v1363, %v1364
  %v1384 = vsel %vm1375, %v1340, %v1383
  %v1385 = vsel %vm1373, %v1364, %v1365
  %v1386 = vsel %vm1375, %v1342, %v1385
  %v1387 = vsel %vm1375, %v1344, %v1365
  %v1388 = vsel %vm1373, %v1366, %v1367
  %v1389 = vsel %vm1375, %v1346, %v1388
  %v1390 = vsel %vm1373, %v1367, %v1368
  %v1391 = vsel %vm1375, %v1348, %v1390
  %v1392 = vsel %vm1373, %v1368, %v1369
  %v1393 = vsel %vm1375, %v1350, %v1392
  %v1394 = vsel %vm1373, %v1369, %v1370
  %v1395 = vsel %vm1375, %v1352, %v1394
  %v1396 = vsel %vm1373, %v1370, %v1371
  %v1397 = vsel %vm1375, %v1354, %v1396
  %v1398 = vsel %vm1373, %v1371, %v1372
  %v1399 = vsel %vm1375, %v1356, %v1398
  %v1400 = vsel %vm1375, %v1358, %v1372
  %1415 = vst [vmem:[#allocation2] sm:$0x88] %v1376
  %1416 = vst [vmem:[#allocation2 + $0x8] sm:$0x88] %v1378
  %1417 = vst [vmem:[#allocation2 + $0x10] sm:$0x88] %v1380
  %1418 = vst [vmem:[#allocation2 + $0x18] sm:$0x88] %v1382
  %1419 = vst [vmem:[#allocation2 + $0x20] sm:$0x88] %v1384
  %1420 = vst [vmem:[#allocation2 + $0x28] sm:$0x88] %v1386
  %vm1421 = vcmask 1043459
  %vm1422 = vcmask 64519
  %vm1423 = vmor %vm1422, %vm1421
  %1424 = vst.msk [vmem:[#allocation2 + $0x30] sm:$0x88] %vm1423, %v1387
  %1425 = vst [vmem:[#allocation2 + $0x40] sm:$0x33] %v1389
  %1426 = vst [vmem:[#allocation2 + $0x48] sm:$0x33] %v1391
  %1427 = vst [vmem:[#allocation2 + $0x50] sm:$0x33] %v1393
  %1428 = vst [vmem:[#allocation2 + $0x58] sm:$0x33] %v1395
  %1429 = vst [vmem:[#allocation2 + $0x60] sm:$0x33] %v1397
  %1430 = vst [vmem:[#allocation2 + $0x68] sm:$0x33] %v1399
  %vm1431 = vcmask 1041408
  %vm1432 = vcmask 62468
  %vm1433 = vmor %vm1432, %vm1431
  %1434 = vst.msk [vmem:[#allocation2 + $0x70] sm:$0x33] %vm1433, %v1400
  %v1435 = vld [vmem:[#allocation2 + $0x4] sm:$0x77]
  %v1436 = vld [vmem:[#allocation2 + $0xc] sm:$0x77]
  %v1437 = vld [vmem:[#allocation2 + $0x14] sm:$0x77]
  %v1438 = vld [vmem:[#allocation2 + $0x1c] sm:$0x77]
  %v1439 = vld [vmem:[#allocation2 + $0x24] sm:$0x77]
  %v1440 = vld [vmem:[#allocation2 + $0x2c] sm:$0x77]
  %v1441 = vld [vmem:[#allocation2 + $0x34] sm:$0x77]
  %v1449 = vrot.slane %v1435, 6
  %v1450 = vrot.slane %v1436, 6
  %v1451 = vrot.slane %v1437, 6
  %v1452 = vrot.slane %v1438, 6
  %v1453 = vrot.slane %v1439, 6
  %v1454 = vrot.slane %v1440, 6
  %v1455 = vrot.slane %v1441, 6
  %v1456 = vrot.slane %v1449, 4
  %v1457 = vrot.slane %v1450, 4
  %v1458 = vrot.slane %v1451, 4
  %v1459 = vrot.slane %v1452, 4
  %v1460 = vrot.slane %v1453, 4
  %v1461 = vrot.slane %v1454, 4
  %v1462 = vrot.slane %v1455, 4
  %1477 = vst [vmem:[#allocation2 + $0x40] sm:$0xcc] %v1449
  %1478 = vst [vmem:[#allocation2 + $0x48] sm:$0xcc] %v1450
  %1479 = vst [vmem:[#allocation2 + $0x50] sm:$0xcc] %v1451
  %1480 = vst [vmem:[#allocation2 + $0x58] sm:$0xcc] %v1452
  %1481 = vst [vmem:[#allocation2 + $0x60] sm:$0xcc] %v1453
  %1482 = vst [vmem:[#allocation2 + $0x68] sm:$0xcc] %v1454
  %vm1483 = vcmask 1043458
  %vm1484 = vcmask 64518
  %vm1485 = vmor %vm1484, %vm1483
  %1486 = vst.msk [vmem:[#allocation2 + $0x70] sm:$0xcc] %vm1485, %v1455
  %1487 = vst [vmem:[#allocation2 + $0x80] sm:$0x11] %v1456
  %1488 = vst [vmem:[#allocation2 + $0x88] sm:$0x11] %v1457
  %1489 = vst [vmem:[#allocation2 + $0x90] sm:$0x11] %v1458
  %1490 = vst [vmem:[#allocation2 + $0x98] sm:$0x11] %v1459
  %1491 = vst [vmem:[#allocation2 + $0xa0] sm:$0x11] %v1460
  %1492 = vst [vmem:[#allocation2 + $0xa8] sm:$0x11] %v1461
  %vm1493 = vcmask 1040384
  %vm1494 = vcmask 61444
  %vm1495 = vmor %vm1494, %vm1493
  %1496 = vst.msk [vmem:[#allocation2 + $0xb0] sm:$0x11] %vm1495, %v1462
  %v1497 = vld [vmem:[#allocation2 + $0x4] sm:$0x77]
  %v1498 = vld [vmem:[#allocation2 + $0xc] sm:$0x77]
  %v1499 = vld [vmem:[#allocation2 + $0x14] sm:$0x77]
  %v1500 = vld [vmem:[#allocation2 + $0x1c] sm:$0x77]
  %v1501 = vld [vmem:[#allocation2 + $0x24] sm:$0x77]
  %v1502 = vld [vmem:[#allocation2 + $0x2c] sm:$0x77]
  %v1503 = vld [vmem:[#allocation2 + $0x34] sm:$0x77]
  %v1511 = vrot.slane %v1497, 7
  %v1512 = vrot.slane %v1498, 7
  %v1513 = vrot.slane %v1499, 7
  %v1514 = vrot.slane %v1500, 7
  %v1515 = vrot.slane %v1501, 7
  %v1516 = vrot.slane %v1502, 7
  %v1517 = vrot.slane %v1503, 7
  %1518 = vrot.lane.b32.xlu0 %v1511, 64
  %v1519 = vpop.permute.xlu0 %1518
  %1520 = vrot.lane.b32.xlu0 %v1512, 64
  %v1521 = vpop.permute.xlu0 %1520
  %1522 = vrot.lane.b32.xlu0 %v1513, 64
  %v1523 = vpop.permute.xlu0 %1522
  %1524 = vrot.lane.b32.xlu0 %v1514, 64
  %v1525 = vpop.permute.xlu0 %1524
  %1526 = vrot.lane.b32.xlu0 %v1515, 64
  %v1527 = vpop.permute.xlu0 %1526
  %1528 = vrot.lane.b32.xlu0 %v1516, 64
  %v1529 = vpop.permute.xlu0 %1528
  %1530 = vrot.lane.b32.xlu0 %v1517, 64
  %v1531 = vpop.permute.xlu0 %1530
  %v1532 = vrot.slane %v1519, 4
  %v1533 = vrot.slane %v1521, 4
  %v1534 = vrot.slane %v1523, 4
  %v1535 = vrot.slane %v1525, 4
  %v1536 = vrot.slane %v1527, 4
  %v1537 = vrot.slane %v1529, 4
  %v1538 = vrot.slane %v1531, 4
  %v1539 = vsel %vm1373, %v1532, %v1533
  %v1540 = vsel %vm1375, %v1519, %v1539
  %v1541 = vsel %vm1373, %v1533, %v1534
  %v1542 = vsel %vm1375, %v1521, %v1541
  %v1543 = vsel %vm1373, %v1534, %v1535
  %v1544 = vsel %vm1375, %v1523, %v1543
  %v1545 = vsel %vm1373, %v1535, %v1536
  %v1546 = vsel %vm1375, %v1525, %v1545
  %v1547 = vsel %vm1373, %v1536, %v1537
  %v1548 = vsel %vm1375, %v1527, %v1547
  %v1549 = vsel %vm1373, %v1537, %v1538
  %v1550 = vsel %vm1375, %v1529, %v1549
  %v1551 = vsel %vm1375, %v1531, %v1538
  %1559 = vst [vmem:[#allocation2 + $0x80] sm:$0xee] %v1540
  %1560 = vst [vmem:[#allocation2 + $0x88] sm:$0xee] %v1542
  %1561 = vst [vmem:[#allocation2 + $0x90] sm:$0xee] %v1544
  %1562 = vst [vmem:[#allocation2 + $0x98] sm:$0xee] %v1546
  %1563 = vst [vmem:[#allocation2 + $0xa0] sm:$0xee] %v1548
  %1564 = vst [vmem:[#allocation2 + $0xa8] sm:$0xee] %v1550
  %vm1565 = vcmask 1043457
  %vm1566 = vcmask 64517
  %vm1567 = vmor %vm1566, %vm1565
  %1568 = vst.msk [vmem:[#allocation2 + $0xb0] sm:$0xee] %vm1567, %v1551
  %v1569 = vld [vmem:[#allocation2 + $0x8] sm:$0x77]
  %v1570 = vld [vmem:[#allocation2 + $0x10] sm:$0x77]
  %v1571 = vld [vmem:[#allocation2 + $0x18] sm:$0x77]
  %v1572 = vld [vmem:[#allocation2 + $0x20] sm:$0x77]
  %v1573 = vld [vmem:[#allocation2 + $0x28] sm:$0x77]
  %v1574 = vld [vmem:[#allocation2 + $0x30] sm:$0x77]
  %v1575 = vld [vmem:[#allocation2 + $0x38] sm:$0x77]
  %1576 = vst [vmem:[#allocation2 + $0xc0] sm:$0x77] %v1569
  %1577 = vst [vmem:[#allocation2 + $0xc8] sm:$0x77] %v1570
  %1578 = vst [vmem:[#allocation2 + $0xd0] sm:$0x77] %v1571
  %1579 = vst [vmem:[#allocation2 + $0xd8] sm:$0x77] %v1572
  %1580 = vst [vmem:[#allocation2 + $0xe0] sm:$0x77] %v1573
  %1581 = vst [vmem:[#allocation2 + $0xe8] sm:$0x77] %v1574
  %vm1582 = vcmask 63492
  %vm1583 = vmor %vm1582, %vm1299
  %1584 = vst.msk [vmem:[#allocation2 + $0xf0] sm:$0x77] %vm1583, %v1575
  %v1585 = vld [vmem:[%s2] sm:$0xf]
  %v1586 = vld [vmem:[%s2 + $0x4] sm:$0xf]
  %v1587 = vld [vmem:[#allocation2] sm:$0xff]
  %v1588 = vld [vmem:[#allocation2 + $0x8] sm:$0xff]
  %v1589 = vld [vmem:[#allocation2 + $0x10] sm:$0xff]
  %v1590 = vld [vmem:[#allocation2 + $0x18] sm:$0xff]
  %v1591 = vld [vmem:[#allocation2 + $0x20] sm:$0xff]
  %v1592 = vld [vmem:[#allocation2 + $0x28] sm:$0xff]
  %v1593 = vld [vmem:[#allocation2 + $0x30] sm:$0xf]
  %v1594 = vld [vmem:[#allocation2 + $0x40] sm:$0xff]
  %v1595 = vld [vmem:[#allocation2 + $0x48] sm:$0xff]
  %v1596 = vld [vmem:[#allocation2 + $0x50] sm:$0xff]
  %v1597 = vld [vmem:[#allocation2 + $0x58] sm:$0xff]
  %v1598 = vld [vmem:[#allocation2 + $0x60] sm:$0xff]
  %v1599 = vld [vmem:[#allocation2 + $0x68] sm:$0xff]
  %v1600 = vld [vmem:[#allocation2 + $0x70] sm:$0xf]
  %v1601 = vld [vmem:[#allocation2 + $0x80] sm:$0xff]
  %v1602 = vld [vmem:[#allocation2 + $0x88] sm:$0xff]
  %v1603 = vld [vmem:[#allocation2 + $0x90] sm:$0xff]
  %v1604 = vld [vmem:[#allocation2 + $0x98] sm:$0xff]
  %v1605 = vld [vmem:[#allocation2 + $0xa0] sm:$0xff]
  %v1606 = vld [vmem:[#allocation2 + $0xa8] sm:$0xff]
  %v1607 = vld [vmem:[#allocation2 + $0xb0] sm:$0xf]
  %v1608 = vld [vmem:[#allocation2 + $0xc0] sm:$0x77]
  %v1609 = vld [vmem:[#allocation2 + $0xc8] sm:$0x77]
  %v1610 = vld [vmem:[#allocation2 + $0xd0] sm:$0x77]
  %v1611 = vld [vmem:[#allocation2 + $0xd8] sm:$0x77]
  %v1612 = vld [vmem:[#allocation2 + $0xe0] sm:$0x77]
  %v1613 = vld [vmem:[#allocation2 + $0xe8] sm:$0x77]
  %v1614 = vld [vmem:[#allocation2 + $0xf0] sm:$0x7]
  %v1615 = vld [vmem:[%s2 + $0x8] sm:$0xf]
  %v1616 = vld [vmem:[%s2 + $0xc] sm:$0xf]
  %v1617 = vld [vmem:[#allocation2 + $0x30] sm:$0xff]
  %v1618 = vld [vmem:[#allocation2 + $0x70] sm:$0xff]
  %v1619 = vld [vmem:[#allocation2 + $0xb0] sm:$0xff]
  %v1620 = vld [vmem:[#allocation2 + $0xf0] sm:$0x77]
  %v1623 = vunpack.c.l.b16 %v1615
  %v1624 = vunpack.c.l.b16 %v1616
  %v1625 = vpack.c.b16 %v1624, %v1623
  %v1654 = vunpack.c.l.b16 %v1587
  %v1655 = vunpack.c.h.b16 %v1587
  %v1656 = vunpack.c.l.b16 %v1588
  %v1657 = vunpack.c.h.b16 %v1588
  %v1658 = vunpack.c.l.b16 %v1589
  %v1659 = vunpack.c.h.b16 %v1589
  %v1660 = vunpack.c.l.b16 %v1590
  %v1661 = vunpack.c.h.b16 %v1590
  %v1662 = vunpack.c.l.b16 %v1591
  %v1663 = vunpack.c.h.b16 %v1591
  %v1664 = vunpack.c.l.b16 %v1592
  %v1665 = vunpack.c.h.b16 %v1592
  %v1666 = vunpack.c.l.b16 %v1617
  %v1667 = vunpack.c.h.b16 %v1617
  %v1668 = vunpack.c.l.b16 %v1594
  %v1669 = vunpack.c.h.b16 %v1594
  %v1670 = vunpack.c.l.b16 %v1595
  %v1671 = vunpack.c.h.b16 %v1595
  %v1672 = vunpack.c.l.b16 %v1596
  %v1673 = vunpack.c.h.b16 %v1596
  %v1674 = vunpack.c.l.b16 %v1597
  %v1675 = vunpack.c.h.b16 %v1597
  %v1676 = vunpack.c.l.b16 %v1598
  %v1677 = vunpack.c.h.b16 %v1598
  %v1678 = vunpack.c.l.b16 %v1599
  %v1679 = vunpack.c.h.b16 %v1599
  %v1680 = vunpack.c.l.b16 %v1618
  %v1681 = vunpack.c.h.b16 %v1618
  %v1682 = vunpack.c.l.b16 %v1601
  %v1683 = vunpack.c.h.b16 %v1601
  %v1684 = vunpack.c.l.b16 %v1602
  %v1685 = vunpack.c.h.b16 %v1602
  %v1686 = vunpack.c.l.b16 %v1603
  %v1687 = vunpack.c.h.b16 %v1603
  %v1688 = vunpack.c.l.b16 %v1604
  %v1689 = vunpack.c.h.b16 %v1604
  %v1690 = vunpack.c.l.b16 %v1605
  %v1691 = vunpack.c.h.b16 %v1605
  %v1692 = vunpack.c.l.b16 %v1606
  %v1693 = vunpack.c.h.b16 %v1606
  %v1694 = vunpack.c.l.b16 %v1619
  %v1695 = vunpack.c.h.b16 %v1619
  %v1696 = vunpack.c.l.b16 %v1608
  %v1697 = vunpack.c.h.b16 %v1608
  %v1698 = vunpack.c.l.b16 %v1609
  %v1699 = vunpack.c.h.b16 %v1609
  %v1700 = vunpack.c.l.b16 %v1610
  %v1701 = vunpack.c.h.b16 %v1610
  %v1702 = vunpack.c.l.b16 %v1611
  %v1703 = vunpack.c.h.b16 %v1611
  %v1704 = vunpack.c.l.b16 %v1612
  %v1705 = vunpack.c.h.b16 %v1612
  %v1706 = vunpack.c.l.b16 %v1613
  %v1707 = vunpack.c.h.b16 %v1613
  %v1708 = vunpack.c.l.b16 %v1620
  %v1709 = vunpack.c.h.b16 %v1620
  %v1710 = vpack.c.b16 %v1668, %v1654
  %v1711 = vpack.c.b16 %v1669, %v1655
  %v1712 = vpack.c.b16 %v1670, %v1656
  %v1713 = vpack.c.b16 %v1671, %v1657
  %v1714 = vpack.c.b16 %v1672, %v1658
  %v1715 = vpack.c.b16 %v1673, %v1659
  %v1716 = vpack.c.b16 %v1674, %v1660
  %v1717 = vpack.c.b16 %v1675, %v1661
  %v1718 = vpack.c.b16 %v1676, %v1662
  %v1719 = vpack.c.b16 %v1677, %v1663
  %v1720 = vpack.c.b16 %v1678, %v1664
  %v1721 = vpack.c.b16 %v1679, %v1665
  %v1722 = vpack.c.b16 %v1680, %v1666
  %v1723 = vpack.c.b16 %v1681, %v1667
  %v1724 = vpack.c.b16 %v1696, %v1682
  %v1725 = vpack.c.b16 %v1697, %v1683
  %v1726 = vpack.c.b16 %v1698, %v1684
  %v1727 = vpack.c.b16 %v1699, %v1685
  %v1728 = vpack.c.b16 %v1700, %v1686
  %v1729 = vpack.c.b16 %v1701, %v1687
  %v1730 = vpack.c.b16 %v1702, %v1688
  %v1731 = vpack.c.b16 %v1703, %v1689
  %v1732 = vpack.c.b16 %v1704, %v1690
  %v1733 = vpack.c.b16 %v1705, %v1691
  %v1734 = vpack.c.b16 %v1706, %v1692
  %v1735 = vpack.c.b16 %v1707, %v1693
  %v1736 = vpack.c.b16 %v1708, %v1694
  %v1737 = vpack.c.b16 %v1709, %v1695
  %1738 = vrot.lane.b32.xlu0 %v1710, 126
  %v1739 = vpop.permute.xlu0 %1738
  %1740 = vrot.lane.b32.xlu0 %v1711, 126
  %v1741 = vpop.permute.xlu0 %1740
  %1742 = vrot.lane.b32.xlu0 %v1712, 126
  %v1743 = vpop.permute.xlu0 %1742
  %1744 = vrot.lane.b32.xlu0 %v1713, 126
  %v1745 = vpop.permute.xlu0 %1744
  %1746 = vrot.lane.b32.xlu0 %v1714, 126
  %v1747 = vpop.permute.xlu0 %1746
  %1748 = vrot.lane.b32.xlu0 %v1715, 126
  %v1749 = vpop.permute.xlu0 %1748
  %1750 = vrot.lane.b32.xlu0 %v1716, 126
  %v1751 = vpop.permute.xlu0 %1750
  %1752 = vrot.lane.b32.xlu0 %v1717, 126
  %v1753 = vpop.permute.xlu0 %1752
  %1754 = vrot.lane.b32.xlu0 %v1718, 126
  %v1755 = vpop.permute.xlu0 %1754
  %1756 = vrot.lane.b32.xlu0 %v1719, 126
  %v1757 = vpop.permute.xlu0 %1756
  %1758 = vrot.lane.b32.xlu0 %v1720, 126
  %v1759 = vpop.permute.xlu0 %1758
  %1760 = vrot.lane.b32.xlu0 %v1721, 126
  %v1761 = vpop.permute.xlu0 %1760
  %1762 = vrot.lane.b32.xlu0 %v1722, 126
  %v1763 = vpop.permute.xlu0 %1762
  %1764 = vrot.lane.b32.xlu0 %v1723, 126
  %v1765 = vpop.permute.xlu0 %1764
  %1766 = vrot.lane.b32.xlu0 %v1724, 126
  %v1767 = vpop.permute.xlu0 %1766
  %1768 = vrot.lane.b32.xlu0 %v1725, 126
  %v1769 = vpop.permute.xlu0 %1768
  %1770 = vrot.lane.b32.xlu0 %v1726, 126
  %v1771 = vpop.permute.xlu0 %1770
  %1772 = vrot.lane.b32.xlu0 %v1727, 126
  %v1773 = vpop.permute.xlu0 %1772
  %1774 = vrot.lane.b32.xlu0 %v1728, 126
  %v1775 = vpop.permute.xlu0 %1774
  %1776 = vrot.lane.b32.xlu0 %v1729, 126
  %v1777 = vpop.permute.xlu0 %1776
  %1778 = vrot.lane.b32.xlu0 %v1730, 126
  %v1779 = vpop.permute.xlu0 %1778
  %1780 = vrot.lane.b32.xlu0 %v1731, 126
  %v1781 = vpop.permute.xlu0 %1780
  %1782 = vrot.lane.b32.xlu0 %v1732, 126
  %v1783 = vpop.permute.xlu0 %1782
  %1784 = vrot.lane.b32.xlu0 %v1733, 126
  %v1785 = vpop.permute.xlu0 %1784
  %1786 = vrot.lane.b32.xlu0 %v1734, 126
  %v1787 = vpop.permute.xlu0 %1786
  %1788 = vrot.lane.b32.xlu0 %v1735, 126
  %v1789 = vpop.permute.xlu0 %1788
  %1790 = vrot.lane.b32.xlu0 %v1736, 126
  %v1791 = vpop.permute.xlu0 %1790
  %1792 = vrot.lane.b32.xlu0 %v1737, 126
  %v1793 = vpop.permute.xlu0 %1792
  %vm1794 = vcmask 1031168
  %v1795 = vsel %vm1794, %v1739, %v1741
  %v1796 = vsel %vm1794, %v1741, %v1743
  %v1797 = vsel %vm1794, %v1743, %v1745
  %v1798 = vsel %vm1794, %v1745, %v1747
  %v1799 = vsel %vm1794, %v1747, %v1749
  %v1800 = vsel %vm1794, %v1749, %v1751
  %v1801 = vsel %vm1794, %v1751, %v1753
  %v1802 = vsel %vm1794, %v1753, %v1755
  %v1803 = vsel %vm1794, %v1755, %v1757
  %v1804 = vsel %vm1794, %v1757, %v1759
  %v1805 = vsel %vm1794, %v1759, %v1761
  %v1806 = vsel %vm1794, %v1761, %v1763
  %v1807 = vsel %vm1794, %v1763, %v1765
  %v1808 = vsel %vm1794, %v1767, %v1769
  %v1809 = vsel %vm1794, %v1769, %v1771
  %v1810 = vsel %vm1794, %v1771, %v1773
  %v1811 = vsel %vm1794, %v1773, %v1775
  %v1812 = vsel %vm1794, %v1775, %v1777
  %v1813 = vsel %vm1794, %v1777, %v1779
  %v1814 = vsel %vm1794, %v1779, %v1781
  %v1815 = vsel %vm1794, %v1781, %v1783
  %v1816 = vsel %vm1794, %v1783, %v1785
  %v1817 = vsel %vm1794, %v1785, %v1787
  %v1818 = vsel %vm1794, %v1787, %v1789
  %v1819 = vsel %vm1794, %v1789, %v1791
  %v1820 = vsel %vm1794, %v1791, %v1793
  %vm1834 = vcmask 244736
  %v1836 = vsel %vm1834, %v1625, 0
  %vm1838 = vcmask 1046528
  %v1840 = vsel %vm1838, %v1808, 0
  %v1843 = vsel %vm1838, %v1809, 0
  %v1846 = vsel %vm1838, %v1810, 0
  %v1849 = vsel %vm1838, %v1811, 0
  %v1852 = vsel %vm1838, %v1812, 0
  %v1855 = vsel %vm1838, %v1813, 0
  %v1858 = vsel %vm1838, %v1814, 0
  %v1861 = vsel %vm1838, %v1815, 0
  %v1864 = vsel %vm1838, %v1816, 0
  %v1867 = vsel %vm1838, %v1817, 0
  %v1870 = vsel %vm1838, %v1818, 0
  %v1873 = vsel %vm1838, %v1819, 0
  %v1876 = vsel %vm1838, %v1820, 0
  %1878 = vmatpush.bf16.msra.mxu0 0
  %1879 = vmatpush.bf16.msra.mxu0 0
  %1880 = vmatpush.bf16.msra.mxu0 0
  %1881 = vmatpush.bf16.msra.mxu0 0
  %1882 = vmatpush.bf16.msra.mxu0 0
  %1883 = vmatpush.bf16.msra.mxu0 0
  %1884 = vmatpush.bf16.msra.mxu0 %v1840
  %1885 = vmatpush.bf16.msra.mxu0 %v1795
  %1886 = vmatmul.bf16.gmra.mxu0 %v1836
  %v1887 = vpop.f32.mrf.mxu0
  %v1888 = vadd.f32 0.0, %v1887
  %v1889 = vpop.f32.mrf.mxu0
  %v1890 = vadd.f32 0.0, %v1889
  %1891 = vdwg.mxu0
  %1892 = vmatpush.bf16.msra.mxu0 0
  %1893 = vmatpush.bf16.msra.mxu0 0
  %1894 = vmatpush.bf16.msra.mxu0 0
  %1895 = vmatpush.bf16.msra.mxu0 0
  %1896 = vmatpush.bf16.msra.mxu0 0
  %1897 = vmatpush.bf16.msra.mxu0 0
  %1898 = vmatpush.bf16.msra.mxu0 %v1843
  %1899 = vmatpush.bf16.msra.mxu0 %v1796
  %1900 = vmatmul.bf16.gmra.mxu0 %v1836
  %v1901 = vpop.f32.mrf.mxu0
  %v1902 = vadd.f32 0.0, %v1901
  %v1903 = vpop.f32.mrf.mxu0
  %v1904 = vadd.f32 0.0, %v1903
  %1905 = vdwg.mxu0
  %1906 = vmatpush.bf16.msra.mxu0 0
  %1907 = vmatpush.bf16.msra.mxu0 0
  %1908 = vmatpush.bf16.msra.mxu0 0
  %1909 = vmatpush.bf16.msra.mxu0 0
  %1910 = vmatpush.bf16.msra.mxu0 0
  %1911 = vmatpush.bf16.msra.mxu0 0
  %1912 = vmatpush.bf16.msra.mxu0 %v1846
  %1913 = vmatpush.bf16.msra.mxu0 %v1797
  %1914 = vmatmul.bf16.gmra.mxu0 %v1836
  %v1915 = vpop.f32.mrf.mxu0
  %v1916 = vadd.f32 0.0, %v1915
  %v1917 = vpop.f32.mrf.mxu0
  %v1918 = vadd.f32 0.0, %v1917
  %1919 = vdwg.mxu0
  %1920 = vmatpush.bf16.msra.mxu0 0
  %1921 = vmatpush.bf16.msra.mxu0 0
  %1922 = vmatpush.bf16.msra.mxu0 0
  %1923 = vmatpush.bf16.msra.mxu0 0
  %1924 = vmatpush.bf16.msra.mxu0 0
  %1925 = vmatpush.bf16.msra.mxu0 0
  %1926 = vmatpush.bf16.msra.mxu0 %v1849
  %1927 = vmatpush.bf16.msra.mxu0 %v1798
  %1928 = vmatmul.bf16.gmra.mxu0 %v1836
  %v1929 = vpop.f32.mrf.mxu0
  %v1930 = vadd.f32 0.0, %v1929
  %v1931 = vpop.f32.mrf.mxu0
  %v1932 = vadd.f32 0.0, %v1931
  %1933 = vdwg.mxu0
  %1934 = vmatpush.bf16.msra.mxu0 0
  %1935 = vmatpush.bf16.msra.mxu0 0
  %1936 = vmatpush.bf16.msra.mxu0 0
  %1937 = vmatpush.bf16.msra.mxu0 0
  %1938 = vmatpush.bf16.msra.mxu0 0
  %1939 = vmatpush.bf16.msra.mxu0 0
  %1940 = vmatpush.bf16.msra.mxu0 %v1852
  %1941 = vmatpush.bf16.msra.mxu0 %v1799
  %1942 = vmatmul.bf16.gmra.mxu0 %v1836
  %v1943 = vpop.f32.mrf.mxu0
  %v1944 = vadd.f32 0.0, %v1943
  %v1945 = vpop.f32.mrf.mxu0
  %v1946 = vadd.f32 0.0, %v1945
  %1947 = vdwg.mxu0
  %1948 = vmatpush.bf16.msra.mxu0 0
  %1949 = vmatpush.bf16.msra.mxu0 0
  %1950 = vmatpush.bf16.msra.mxu0 0
  %1951 = vmatpush.bf16.msra.mxu0 0
  %1952 = vmatpush.bf16.msra.mxu0 0
  %1953 = vmatpush.bf16.msra.mxu0 0
  %1954 = vmatpush.bf16.msra.mxu0 %v1855
  %1955 = vmatpush.bf16.msra.mxu0 %v1800
  %1956 = vmatmul.bf16.gmra.mxu0 %v1836
  %v1957 = vpop.f32.mrf.mxu0
  %v1958 = vadd.f32 0.0, %v1957
  %v1959 = vpop.f32.mrf.mxu0
  %v1960 = vadd.f32 0.0, %v1959
  %1961 = vdwg.mxu0
  %1962 = vmatpush.bf16.msra.mxu0 0
  %1963 = vmatpush.bf16.msra.mxu0 0
  %1964 = vmatpush.bf16.msra.mxu0 0
  %1965 = vmatpush.bf16.msra.mxu0 0
  %1966 = vmatpush.bf16.msra.mxu0 0
  %1967 = vmatpush.bf16.msra.mxu0 0
  %1968 = vmatpush.bf16.msra.mxu0 %v1858
  %1969 = vmatpush.bf16.msra.mxu0 %v1801
  %1970 = vmatmul.bf16.gmra.mxu0 %v1836
  %v1971 = vpop.f32.mrf.mxu0
  %v1972 = vadd.f32 0.0, %v1971
  %v1973 = vpop.f32.mrf.mxu0
  %v1974 = vadd.f32 0.0, %v1973
  %1975 = vdwg.mxu0
  %1976 = vmatpush.bf16.msra.mxu0 0
  %1977 = vmatpush.bf16.msra.mxu0 0
  %1978 = vmatpush.bf16.msra.mxu0 0
  %1979 = vmatpush.bf16.msra.mxu0 0
  %1980 = vmatpush.bf16.msra.mxu0 0
  %1981 = vmatpush.bf16.msra.mxu0 0
  %1982 = vmatpush.bf16.msra.mxu0 %v1861
  %1983 = vmatpush.bf16.msra.mxu0 %v1802
  %1984 = vmatmul.bf16.gmra.mxu0 %v1836
  %v1985 = vpop.f32.mrf.mxu0
  %v1986 = vadd.f32 0.0, %v1985
  %v1987 = vpop.f32.mrf.mxu0
  %v1988 = vadd.f32 0.0, %v1987
  %1989 = vdwg.mxu0
  %1990 = vmatpush.bf16.msra.mxu0 0
  %1991 = vmatpush.bf16.msra.mxu0 0
  %1992 = vmatpush.bf16.msra.mxu0 0
  %1993 = vmatpush.bf16.msra.mxu0 0
  %1994 = vmatpush.bf16.msra.mxu0 0
  %1995 = vmatpush.bf16.msra.mxu0 0
  %1996 = vmatpush.bf16.msra.mxu0 %v1864
  %1997 = vmatpush.bf16.msra.mxu0 %v1803
  %1998 = vmatmul.bf16.gmra.mxu0 %v1836
  %v1999 = vpop.f32.mrf.mxu0
  %v2000 = vadd.f32 0.0, %v1999
  %v2001 = vpop.f32.mrf.mxu0
  %v2002 = vadd.f32 0.0, %v2001
  %2003 = vdwg.mxu0
  %2004 = vmatpush.bf16.msra.mxu0 0
  %2005 = vmatpush.bf16.msra.mxu0 0
  %2006 = vmatpush.bf16.msra.mxu0 0
  %2007 = vmatpush.bf16.msra.mxu0 0
  %2008 = vmatpush.bf16.msra.mxu0 0
  %2009 = vmatpush.bf16.msra.mxu0 0
  %2010 = vmatpush.bf16.msra.mxu0 %v1867
  %2011 = vmatpush.bf16.msra.mxu0 %v1804
  %2012 = vmatmul.bf16.gmra.mxu0 %v1836
  %v2013 = vpop.f32.mrf.mxu0
  %v2014 = vadd.f32 0.0, %v2013
  %v2015 = vpop.f32.mrf.mxu0
  %v2016 = vadd.f32 0.0, %v2015
  %2017 = vdwg.mxu0
  %2018 = vmatpush.bf16.msra.mxu0 0
  %2019 = vmatpush.bf16.msra.mxu0 0
  %2020 = vmatpush.bf16.msra.mxu0 0
  %2021 = vmatpush.bf16.msra.mxu0 0
  %2022 = vmatpush.bf16.msra.mxu0 0
  %2023 = vmatpush.bf16.msra.mxu0 0
  %2024 = vmatpush.bf16.msra.mxu0 %v1870
  %2025 = vmatpush.bf16.msra.mxu0 %v1805
  %2026 = vmatmul.bf16.gmra.mxu0 %v1836
  %v2027 = vpop.f32.mrf.mxu0
  %v2028 = vadd.f32 0.0, %v2027
  %v2029 = vpop.f32.mrf.mxu0
  %v2030 = vadd.f32 0.0, %v2029
  %2031 = vdwg.mxu0
  %2032 = vmatpush.bf16.msra.mxu0 0
  %2033 = vmatpush.bf16.msra.mxu0 0
  %2034 = vmatpush.bf16.msra.mxu0 0
  %2035 = vmatpush.bf16.msra.mxu0 0
  %2036 = vmatpush.bf16.msra.mxu0 0
  %2037 = vmatpush.bf16.msra.mxu0 0
  %2038 = vmatpush.bf16.msra.mxu0 %v1873
  %2039 = vmatpush.bf16.msra.mxu0 %v1806
  %2040 = vmatmul.bf16.gmra.mxu0 %v1836
  %v2041 = vpop.f32.mrf.mxu0
  %v2042 = vadd.f32 0.0, %v2041
  %v2043 = vpop.f32.mrf.mxu0
  %v2044 = vadd.f32 0.0, %v2043
  %2045 = vdwg.mxu0
  %2046 = vmatpush.bf16.msra.mxu0 0
  %2047 = vmatpush.bf16.msra.mxu0 0
  %2048 = vmatpush.bf16.msra.mxu0 0
  %2049 = vmatpush.bf16.msra.mxu0 0
  %2050 = vmatpush.bf16.msra.mxu0 0
  %2051 = vmatpush.bf16.msra.mxu0 0
  %2052 = vmatpush.bf16.msra.mxu0 %v1876
  %2053 = vmatpush.bf16.msra.mxu0 %v1807
  %2054 = vmatmul.bf16.gmra.mxu0 %v1836
  %v2055 = vpop.f32.mrf.mxu0
  %v2056 = vadd.f32 0.0, %v2055
  %v2057 = vpop.f32.mrf.mxu0
  %v2058 = vadd.f32 0.0, %v2057
  %2059 = vdwg.mxu0
  %v2062 = vunpack.c.l.b16 %v1585
  %v2063 = vunpack.c.l.b16 %v1586
  %v2064 = vpack.c.b16 %v2063, %v2062
  %v2069 = vunpack.c.l.b16 %v1593
  %v2070 = vunpack.c.l.b16 %v1600
  %v2071 = vunpack.c.l.b16 %v1607
  %v2072 = vunpack.c.l.b16 %v1614
  %v2073 = vpack.c.b16 %v2070, %v2069
  %v2074 = vpack.c.b16 %v2072, %v2071
  %v2089 = vsel %vm1834, %v2064, 0
  %v2092 = vsel %vm1838, %v1724, 0
  %v2095 = vsel %vm1838, %v1725, 0
  %v2098 = vsel %vm1838, %v1726, 0
  %v2101 = vsel %vm1838, %v1727, 0
  %v2104 = vsel %vm1838, %v1728, 0
  %v2107 = vsel %vm1838, %v1729, 0
  %v2110 = vsel %vm1838, %v1730, 0
  %v2113 = vsel %vm1838, %v1731, 0
  %v2116 = vsel %vm1838, %v1732, 0
  %v2119 = vsel %vm1838, %v1733, 0
  %v2122 = vsel %vm1838, %v1734, 0
  %v2125 = vsel %vm1838, %v1735, 0
  %v2128 = vsel %vm1838, %v2074, 0
  %2130 = vmatpush.bf16.msra.mxu0 0
  %2131 = vmatpush.bf16.msra.mxu0 0
  %2132 = vmatpush.bf16.msra.mxu0 0
  %2133 = vmatpush.bf16.msra.mxu0 0
  %2134 = vmatpush.bf16.msra.mxu0 0
  %2135 = vmatpush.bf16.msra.mxu0 0
  %2136 = vmatpush.bf16.msra.mxu0 %v2092
  %2137 = vmatpush.bf16.msra.mxu0 %v1710
  %2138 = vmatmul.bf16.gmra.mxu0 %v2089
  %v2139 = vpop.f32.mrf.mxu0
  %v2140 = vadd.f32 %v1888, %v2139
  %v2141 = vpop.f32.mrf.mxu0
  %v2142 = vadd.f32 %v1890, %v2141
  %2143 = vdwg.mxu0
  %2144 = vmatpush.bf16.msra.mxu0 0
  %2145 = vmatpush.bf16.msra.mxu0 0
  %2146 = vmatpush.bf16.msra.mxu0 0
  %2147 = vmatpush.bf16.msra.mxu0 0
  %2148 = vmatpush.bf16.msra.mxu0 0
  %2149 = vmatpush.bf16.msra.mxu0 0
  %2150 = vmatpush.bf16.msra.mxu0 %v2095
  %2151 = vmatpush.bf16.msra.mxu0 %v1711
  %2152 = vmatmul.bf16.gmra.mxu0 %v2089
  %v2153 = vpop.f32.mrf.mxu0
  %v2154 = vadd.f32 %v1902, %v2153
  %v2155 = vpop.f32.mrf.mxu0
  %v2156 = vadd.f32 %v1904, %v2155
  %2157 = vdwg.mxu0
  %2158 = vmatpush.bf16.msra.mxu0 0
  %2159 = vmatpush.bf16.msra.mxu0 0
  %2160 = vmatpush.bf16.msra.mxu0 0
  %2161 = vmatpush.bf16.msra.mxu0 0
  %2162 = vmatpush.bf16.msra.mxu0 0
  %2163 = vmatpush.bf16.msra.mxu0 0
  %2164 = vmatpush.bf16.msra.mxu0 %v2098
  %2165 = vmatpush.bf16.msra.mxu0 %v1712
  %2166 = vmatmul.bf16.gmra.mxu0 %v2089
  %v2167 = vpop.f32.mrf.mxu0
  %v2168 = vadd.f32 %v1916, %v2167
  %v2169 = vpop.f32.mrf.mxu0
  %v2170 = vadd.f32 %v1918, %v2169
  %2171 = vdwg.mxu0
  %2172 = vmatpush.bf16.msra.mxu0 0
  %2173 = vmatpush.bf16.msra.mxu0 0
  %2174 = vmatpush.bf16.msra.mxu0 0
  %2175 = vmatpush.bf16.msra.mxu0 0
  %2176 = vmatpush.bf16.msra.mxu0 0
  %2177 = vmatpush.bf16.msra.mxu0 0
  %2178 = vmatpush.bf16.msra.mxu0 %v2101
  %2179 = vmatpush.bf16.msra.mxu0 %v1713
  %2180 = vmatmul.bf16.gmra.mxu0 %v2089
  %v2181 = vpop.f32.mrf.mxu0
  %v2182 = vadd.f32 %v1930, %v2181
  %v2183 = vpop.f32.mrf.mxu0
  %v2184 = vadd.f32 %v1932, %v2183
  %2185 = vdwg.mxu0
  %2186 = vmatpush.bf16.msra.mxu0 0
  %2187 = vmatpush.bf16.msra.mxu0 0
  %2188 = vmatpush.bf16.msra.mxu0 0
  %2189 = vmatpush.bf16.msra.mxu0 0
  %2190 = vmatpush.bf16.msra.mxu0 0
  %2191 = vmatpush.bf16.msra.mxu0 0
  %2192 = vmatpush.bf16.msra.mxu0 %v2104
  %2193 = vmatpush.bf16.msra.mxu0 %v1714
  %2194 = vmatmul.bf16.gmra.mxu0 %v2089
  %v2195 = vpop.f32.mrf.mxu0
  %v2196 = vadd.f32 %v1944, %v2195
  %v2197 = vpop.f32.mrf.mxu0
  %v2198 = vadd.f32 %v1946, %v2197
  %2199 = vdwg.mxu0
  %2200 = vmatpush.bf16.msra.mxu0 0
  %2201 = vmatpush.bf16.msra.mxu0 0
  %2202 = vmatpush.bf16.msra.mxu0 0
  %2203 = vmatpush.bf16.msra.mxu0 0
  %2204 = vmatpush.bf16.msra.mxu0 0
  %2205 = vmatpush.bf16.msra.mxu0 0
  %2206 = vmatpush.bf16.msra.mxu0 %v2107
  %2207 = vmatpush.bf16.msra.mxu0 %v1715
  %2208 = vmatmul.bf16.gmra.mxu0 %v2089
  %v2209 = vpop.f32.mrf.mxu0
  %v2210 = vadd.f32 %v1958, %v2209
  %v2211 = vpop.f32.mrf.mxu0
  %v2212 = vadd.f32 %v1960, %v2211
  %2213 = vdwg.mxu0
  %2214 = vmatpush.bf16.msra.mxu0 0
  %2215 = vmatpush.bf16.msra.mxu0 0
  %2216 = vmatpush.bf16.msra.mxu0 0
  %2217 = vmatpush.bf16.msra.mxu0 0
  %2218 = vmatpush.bf16.msra.mxu0 0
  %2219 = vmatpush.bf16.msra.mxu0 0
  %2220 = vmatpush.bf16.msra.mxu0 %v2110
  %2221 = vmatpush.bf16.msra.mxu0 %v1716
  %2222 = vmatmul.bf16.gmra.mxu0 %v2089
  %v2223 = vpop.f32.mrf.mxu0
  %v2224 = vadd.f32 %v1972, %v2223
  %v2225 = vpop.f32.mrf.mxu0
  %v2226 = vadd.f32 %v1974, %v2225
  %2227 = vdwg.mxu0
  %2228 = vmatpush.bf16.msra.mxu0 0
  %2229 = vmatpush.bf16.msra.mxu0 0
  %2230 = vmatpush.bf16.msra.mxu0 0
  %2231 = vmatpush.bf16.msra.mxu0 0
  %2232 = vmatpush.bf16.msra.mxu0 0
  %2233 = vmatpush.bf16.msra.mxu0 0
  %2234 = vmatpush.bf16.msra.mxu0 %v2113
  %2235 = vmatpush.bf16.msra.mxu0 %v1717
  %2236 = vmatmul.bf16.gmra.mxu0 %v2089
  %v2237 = vpop.f32.mrf.mxu0
  %v2238 = vadd.f32 %v1986, %v2237
  %v2239 = vpop.f32.mrf.mxu0
  %v2240 = vadd.f32 %v1988, %v2239
  %2241 = vdwg.mxu0
  %2242 = vmatpush.bf16.msra.mxu0 0
  %2243 = vmatpush.bf16.msra.mxu0 0
  %2244 = vmatpush.bf16.msra.mxu0 0
  %2245 = vmatpush.bf16.msra.mxu0 0
  %2246 = vmatpush.bf16.msra.mxu0 0
  %2247 = vmatpush.bf16.msra.mxu0 0
  %2248 = vmatpush.bf16.msra.mxu0 %v2116
  %2249 = vmatpush.bf16.msra.mxu0 %v1718
  %2250 = vmatmul.bf16.gmra.mxu0 %v2089
  %v2251 = vpop.f32.mrf.mxu0
  %v2252 = vadd.f32 %v2000, %v2251
  %v2253 = vpop.f32.mrf.mxu0
  %v2254 = vadd.f32 %v2002, %v2253
  %2255 = vdwg.mxu0
  %2256 = vmatpush.bf16.msra.mxu0 0
  %2257 = vmatpush.bf16.msra.mxu0 0
  %2258 = vmatpush.bf16.msra.mxu0 0
  %2259 = vmatpush.bf16.msra.mxu0 0
  %2260 = vmatpush.bf16.msra.mxu0 0
  %2261 = vmatpush.bf16.msra.mxu0 0
  %2262 = vmatpush.bf16.msra.mxu0 %v2119
  %2263 = vmatpush.bf16.msra.mxu0 %v1719
  %2264 = vmatmul.bf16.gmra.mxu0 %v2089
  %v2265 = vpop.f32.mrf.mxu0
  %v2266 = vadd.f32 %v2014, %v2265
  %v2267 = vpop.f32.mrf.mxu0
  %v2268 = vadd.f32 %v2016, %v2267
  %2269 = vdwg.mxu0
  %2270 = vmatpush.bf16.msra.mxu0 0
  %2271 = vmatpush.bf16.msra.mxu0 0
  %2272 = vmatpush.bf16.msra.mxu0 0
  %2273 = vmatpush.bf16.msra.mxu0 0
  %2274 = vmatpush.bf16.msra.mxu0 0
  %2275 = vmatpush.bf16.msra.mxu0 0
  %2276 = vmatpush.bf16.msra.mxu0 %v2122
  %2277 = vmatpush.bf16.msra.mxu0 %v1720
  %2278 = vmatmul.bf16.gmra.mxu0 %v2089
  %v2279 = vpop.f32.mrf.mxu0
  %v2280 = vadd.f32 %v2028, %v2279
  %v2281 = vpop.f32.mrf.mxu0
  %v2282 = vadd.f32 %v2030, %v2281
  %2283 = vdwg.mxu0
  %2284 = vmatpush.bf16.msra.mxu0 0
  %2285 = vmatpush.bf16.msra.mxu0 0
  %2286 = vmatpush.bf16.msra.mxu0 0
  %2287 = vmatpush.bf16.msra.mxu0 0
  %2288 = vmatpush.bf16.msra.mxu0 0
  %2289 = vmatpush.bf16.msra.mxu0 0
  %2290 = vmatpush.bf16.msra.mxu0 %v2125
  %2291 = vmatpush.bf16.msra.mxu0 %v1721
  %2292 = vmatmul.bf16.gmra.mxu0 %v2089
  %v2293 = vpop.f32.mrf.mxu0
  %v2294 = vadd.f32 %v2042, %v2293
  %v2295 = vpop.f32.mrf.mxu0
  %v2296 = vadd.f32 %v2044, %v2295
  %2297 = vdwg.mxu0
  %2298 = vmatpush.bf16.msra.mxu0 0
  %2299 = vmatpush.bf16.msra.mxu0 0
  %2300 = vmatpush.bf16.msra.mxu0 0
  %2301 = vmatpush.bf16.msra.mxu0 0
  %2302 = vmatpush.bf16.msra.mxu0 0
  %2303 = vmatpush.bf16.msra.mxu0 0
  %2304 = vmatpush.bf16.msra.mxu0 %v2128
  %2305 = vmatpush.bf16.msra.mxu0 %v2073
  %2306 = vmatmul.bf16.gmra.mxu0 %v2089
  %v2307 = vpop.f32.mrf.mxu0
  %v2308 = vadd.f32 %v2056, %v2307
  %v2309 = vpop.f32.mrf.mxu0
  %v2310 = vadd.f32 %v2058, %v2309
  %2311 = vdwg.mxu0
  %v2312 = vld [vmem:[%s2 + $0x10] sm:$0xf]
  %v2313 = vld [vmem:[%s2 + $0x14] sm:$0xf]
  %v2316 = vunpack.c.l.b16 %v2312
  %v2317 = vunpack.c.l.b16 %v2313
  %v2318 = vpack.c.b16 %v2317, %v2316
  %2319 = vrot.lane.b32.xlu0 %v1710, 124
  %v2320 = vpop.permute.xlu0 %2319
  %2321 = vrot.lane.b32.xlu0 %v1711, 124
  %v2322 = vpop.permute.xlu0 %2321
  %2323 = vrot.lane.b32.xlu0 %v1712, 124
  %v2324 = vpop.permute.xlu0 %2323
  %2325 = vrot.lane.b32.xlu0 %v1713, 124
  %v2326 = vpop.permute.xlu0 %2325
  %2327 = vrot.lane.b32.xlu0 %v1714, 124
  %v2328 = vpop.permute.xlu0 %2327
  %2329 = vrot.lane.b32.xlu0 %v1715, 124
  %v2330 = vpop.permute.xlu0 %2329
  %2331 = vrot.lane.b32.xlu0 %v1716, 124
  %v2332 = vpop.permute.xlu0 %2331
  %2333 = vrot.lane.b32.xlu0 %v1717, 124
  %v2334 = vpop.permute.xlu0 %2333
  %2335 = vrot.lane.b32.xlu0 %v1718, 124
  %v2336 = vpop.permute.xlu0 %2335
  %2337 = vrot.lane.b32.xlu0 %v1719, 124
  %v2338 = vpop.permute.xlu0 %2337
  %2339 = vrot.lane.b32.xlu0 %v1720, 124
  %v2340 = vpop.permute.xlu0 %2339
  %2341 = vrot.lane.b32.xlu0 %v1721, 124
  %v2342 = vpop.permute.xlu0 %2341
  %2343 = vrot.lane.b32.xlu0 %v1722, 124
  %v2344 = vpop.permute.xlu0 %2343
  %2345 = vrot.lane.b32.xlu0 %v1723, 124
  %v2346 = vpop.permute.xlu0 %2345
  %2347 = vrot.lane.b32.xlu0 %v1724, 124
  %v2348 = vpop.permute.xlu0 %2347
  %2349 = vrot.lane.b32.xlu0 %v1725, 124
  %v2350 = vpop.permute.xlu0 %2349
  %2351 = vrot.lane.b32.xlu0 %v1726, 124
  %v2352 = vpop.permute.xlu0 %2351
  %2353 = vrot.lane.b32.xlu0 %v1727, 124
  %v2354 = vpop.permute.xlu0 %2353
  %2355 = vrot.lane.b32.xlu0 %v1728, 124
  %v2356 = vpop.permute.xlu0 %2355
  %2357 = vrot.lane.b32.xlu0 %v1729, 124
  %v2358 = vpop.permute.xlu0 %2357
  %2359 = vrot.lane.b32.xlu0 %v1730, 124
  %v2360 = vpop.permute.xlu0 %2359
  %2361 = vrot.lane.b32.xlu0 %v1731, 124
  %v2362 = vpop.permute.xlu0 %2361
  %2363 = vrot.lane.b32.xlu0 %v1732, 124
  %v2364 = vpop.permute.xlu0 %2363
  %2365 = vrot.lane.b32.xlu0 %v1733, 124
  %v2366 = vpop.permute.xlu0 %2365
  %2367 = vrot.lane.b32.xlu0 %v1734, 124
  %v2368 = vpop.permute.xlu0 %2367
  %2369 = vrot.lane.b32.xlu0 %v1735, 124
  %v2370 = vpop.permute.xlu0 %2369
  %2371 = vrot.lane.b32.xlu0 %v1736, 124
  %v2372 = vpop.permute.xlu0 %2371
  %2373 = vrot.lane.b32.xlu0 %v1737, 124
  %v2374 = vpop.permute.xlu0 %2373
  %vm2375 = vcmask 1014784
  %v2376 = vsel %vm2375, %v2320, %v2322
  %v2377 = vsel %vm2375, %v2322, %v2324
  %v2378 = vsel %vm2375, %v2324, %v2326
  %v2379 = vsel %vm2375, %v2326, %v2328
  %v2380 = vsel %vm2375, %v2328, %v2330
  %v2381 = vsel %vm2375, %v2330, %v2332
  %v2382 = vsel %vm2375, %v2332, %v2334
  %v2383 = vsel %vm2375, %v2334, %v2336
  %v2384 = vsel %vm2375, %v2336, %v2338
  %v2385 = vsel %vm2375, %v2338, %v2340
  %v2386 = vsel %vm2375, %v2340, %v2342
  %v2387 = vsel %vm2375, %v2342, %v2344
  %v2388 = vsel %vm2375, %v2344, %v2346
  %v2389 = vsel %vm2375, %v2348, %v2350
  %v2390 = vsel %vm2375, %v2350, %v2352
  %v2391 = vsel %vm2375, %v2352, %v2354
  %v2392 = vsel %vm2375, %v2354, %v2356
  %v2393 = vsel %vm2375, %v2356, %v2358
  %v2394 = vsel %vm2375, %v2358, %v2360
  %v2395 = vsel %vm2375, %v2360, %v2362
  %v2396 = vsel %vm2375, %v2362, %v2364
  %v2397 = vsel %vm2375, %v2364, %v2366
  %v2398 = vsel %vm2375, %v2366, %v2368
  %v2399 = vsel %vm2375, %v2368, %v2370
  %v2400 = vsel %vm2375, %v2370, %v2372
  %v2401 = vsel %vm2375, %v2372, %v2374
  %v2416 = vsel %vm1834, %v2318, 0
  %v2419 = vsel %vm1838, %v2389, 0
  %v2422 = vsel %vm1838, %v2390, 0
  %v2425 = vsel %vm1838, %v2391, 0
  %v2428 = vsel %vm1838, %v2392, 0
  %v2431 = vsel %vm1838, %v2393, 0
  %v2434 = vsel %vm1838, %v2394, 0
  %v2437 = vsel %vm1838, %v2395, 0
  %v2440 = vsel %vm1838, %v2396, 0
  %v2443 = vsel %vm1838, %v2397, 0
  %v2446 = vsel %vm1838, %v2398, 0
  %v2449 = vsel %vm1838, %v2399, 0
  %v2452 = vsel %vm1838, %v2400, 0
  %v2455 = vsel %vm1838, %v2401, 0
  %2457 = vmatpush.bf16.msra.mxu0 0
  %2458 = vmatpush.bf16.msra.mxu0 0
  %2459 = vmatpush.bf16.msra.mxu0 0
  %2460 = vmatpush.bf16.msra.mxu0 0
  %2461 = vmatpush.bf16.msra.mxu0 0
  %2462 = vmatpush.bf16.msra.mxu0 0
  %2463 = vmatpush.bf16.msra.mxu0 %v2419
  %2464 = vmatpush.bf16.msra.mxu0 %v2376
  %2465 = vmatmul.bf16.gmra.mxu0 %v2416
  %v2466 = vpop.f32.mrf.mxu0
  %v2467 = vadd.f32 0.0, %v2466
  %v2468 = vpop.f32.mrf.mxu0
  %v2469 = vadd.f32 0.0, %v2468
  %2470 = vdwg.mxu0
  %2471 = vmatpush.bf16.msra.mxu0 0
  %2472 = vmatpush.bf16.msra.mxu0 0
  %2473 = vmatpush.bf16.msra.mxu0 0
  %2474 = vmatpush.bf16.msra.mxu0 0
  %2475 = vmatpush.bf16.msra.mxu0 0
  %2476 = vmatpush.bf16.msra.mxu0 0
  %2477 = vmatpush.bf16.msra.mxu0 %v2422
  %2478 = vmatpush.bf16.msra.mxu0 %v2377
  %2479 = vmatmul.bf16.gmra.mxu0 %v2416
  %v2480 = vpop.f32.mrf.mxu0
  %v2481 = vadd.f32 0.0, %v2480
  %v2482 = vpop.f32.mrf.mxu0
  %v2483 = vadd.f32 0.0, %v2482
  %2484 = vdwg.mxu0
  %2485 = vmatpush.bf16.msra.mxu0 0
  %2486 = vmatpush.bf16.msra.mxu0 0
  %2487 = vmatpush.bf16.msra.mxu0 0
  %2488 = vmatpush.bf16.msra.mxu0 0
  %2489 = vmatpush.bf16.msra.mxu0 0
  %2490 = vmatpush.bf16.msra.mxu0 0
  %2491 = vmatpush.bf16.msra.mxu0 %v2425
  %2492 = vmatpush.bf16.msra.mxu0 %v2378
  %2493 = vmatmul.bf16.gmra.mxu0 %v2416
  %v2494 = vpop.f32.mrf.mxu0
  %v2495 = vadd.f32 0.0, %v2494
  %v2496 = vpop.f32.mrf.mxu0
  %v2497 = vadd.f32 0.0, %v2496
  %2498 = vdwg.mxu0
  %2499 = vmatpush.bf16.msra.mxu0 0
  %2500 = vmatpush.bf16.msra.mxu0 0
  %2501 = vmatpush.bf16.msra.mxu0 0
  %2502 = vmatpush.bf16.msra.mxu0 0
  %2503 = vmatpush.bf16.msra.mxu0 0
  %2504 = vmatpush.bf16.msra.mxu0 0
  %2505 = vmatpush.bf16.msra.mxu0 %v2428
  %2506 = vmatpush.bf16.msra.mxu0 %v2379
  %2507 = vmatmul.bf16.gmra.mxu0 %v2416
  %v2508 = vpop.f32.mrf.mxu0
  %v2509 = vadd.f32 0.0, %v2508
  %v2510 = vpop.f32.mrf.mxu0
  %v2511 = vadd.f32 0.0, %v2510
  %2512 = vdwg.mxu0
  %2513 = vmatpush.bf16.msra.mxu0 0
  %2514 = vmatpush.bf16.msra.mxu0 0
  %2515 = vmatpush.bf16.msra.mxu0 0
  %2516 = vmatpush.bf16.msra.mxu0 0
  %2517 = vmatpush.bf16.msra.mxu0 0
  %2518 = vmatpush.bf16.msra.mxu0 0
  %2519 = vmatpush.bf16.msra.mxu0 %v2431
  %2520 = vmatpush.bf16.msra.mxu0 %v2380
  %2521 = vmatmul.bf16.gmra.mxu0 %v2416
  %v2522 = vpop.f32.mrf.mxu0
  %v2523 = vadd.f32 0.0, %v2522
  %v2524 = vpop.f32.mrf.mxu0
  %v2525 = vadd.f32 0.0, %v2524
  %2526 = vdwg.mxu0
  %2527 = vmatpush.bf16.msra.mxu0 0
  %2528 = vmatpush.bf16.msra.mxu0 0
  %2529 = vmatpush.bf16.msra.mxu0 0
  %2530 = vmatpush.bf16.msra.mxu0 0
  %2531 = vmatpush.bf16.msra.mxu0 0
  %2532 = vmatpush.bf16.msra.mxu0 0
  %2533 = vmatpush.bf16.msra.mxu0 %v2434
  %2534 = vmatpush.bf16.msra.mxu0 %v2381
  %2535 = vmatmul.bf16.gmra.mxu0 %v2416
  %v2536 = vpop.f32.mrf.mxu0
  %v2537 = vadd.f32 0.0, %v2536
  %v2538 = vpop.f32.mrf.mxu0
  %v2539 = vadd.f32 0.0, %v2538
  %2540 = vdwg.mxu0
  %2541 = vmatpush.bf16.msra.mxu0 0
  %2542 = vmatpush.bf16.msra.mxu0 0
  %2543 = vmatpush.bf16.msra.mxu0 0
  %2544 = vmatpush.bf16.msra.mxu0 0
  %2545 = vmatpush.bf16.msra.mxu0 0
  %2546 = vmatpush.bf16.msra.mxu0 0
  %2547 = vmatpush.bf16.msra.mxu0 %v2437
  %2548 = vmatpush.bf16.msra.mxu0 %v2382
  %2549 = vmatmul.bf16.gmra.mxu0 %v2416
  %v2550 = vpop.f32.mrf.mxu0
  %v2551 = vadd.f32 0.0, %v2550
  %v2552 = vpop.f32.mrf.mxu0
  %v2553 = vadd.f32 0.0, %v2552
  %2554 = vdwg.mxu0
  %2555 = vmatpush.bf16.msra.mxu0 0
  %2556 = vmatpush.bf16.msra.mxu0 0
  %2557 = vmatpush.bf16.msra.mxu0 0
  %2558 = vmatpush.bf16.msra.mxu0 0
  %2559 = vmatpush.bf16.msra.mxu0 0
  %2560 = vmatpush.bf16.msra.mxu0 0
  %2561 = vmatpush.bf16.msra.mxu0 %v2440
  %2562 = vmatpush.bf16.msra.mxu0 %v2383
  %2563 = vmatmul.bf16.gmra.mxu0 %v2416
  %v2564 = vpop.f32.mrf.mxu0
  %v2565 = vadd.f32 0.0, %v2564
  %v2566 = vpop.f32.mrf.mxu0
  %v2567 = vadd.f32 0.0, %v2566
  %2568 = vdwg.mxu0
  %2569 = vmatpush.bf16.msra.mxu0 0
  %2570 = vmatpush.bf16.msra.mxu0 0
  %2571 = vmatpush.bf16.msra.mxu0 0
  %2572 = vmatpush.bf16.msra.mxu0 0
  %2573 = vmatpush.bf16.msra.mxu0 0
  %2574 = vmatpush.bf16.msra.mxu0 0
  %2575 = vmatpush.bf16.msra.mxu0 %v2443
  %2576 = vmatpush.bf16.msra.mxu0 %v2384
  %2577 = vmatmul.bf16.gmra.mxu0 %v2416
  %v2578 = vpop.f32.mrf.mxu0
  %v2579 = vadd.f32 0.0, %v2578
  %v2580 = vpop.f32.mrf.mxu0
  %v2581 = vadd.f32 0.0, %v2580
  %2582 = vdwg.mxu0
  %2583 = vmatpush.bf16.msra.mxu0 0
  %2584 = vmatpush.bf16.msra.mxu0 0
  %2585 = vmatpush.bf16.msra.mxu0 0
  %2586 = vmatpush.bf16.msra.mxu0 0
  %2587 = vmatpush.bf16.msra.mxu0 0
  %2588 = vmatpush.bf16.msra.mxu0 0
  %2589 = vmatpush.bf16.msra.mxu0 %v2446
  %2590 = vmatpush.bf16.msra.mxu0 %v2385
  %2591 = vmatmul.bf16.gmra.mxu0 %v2416
  %v2592 = vpop.f32.mrf.mxu0
  %v2593 = vadd.f32 0.0, %v2592
  %v2594 = vpop.f32.mrf.mxu0
  %v2595 = vadd.f32 0.0, %v2594
  %2596 = vdwg.mxu0
  %2597 = vmatpush.bf16.msra.mxu0 0
  %2598 = vmatpush.bf16.msra.mxu0 0
  %2599 = vmatpush.bf16.msra.mxu0 0
  %2600 = vmatpush.bf16.msra.mxu0 0
  %2601 = vmatpush.bf16.msra.mxu0 0
  %2602 = vmatpush.bf16.msra.mxu0 0
  %2603 = vmatpush.bf16.msra.mxu0 %v2449
  %2604 = vmatpush.bf16.msra.mxu0 %v2386
  %2605 = vmatmul.bf16.gmra.mxu0 %v2416
  %v2606 = vpop.f32.mrf.mxu0
  %v2607 = vadd.f32 0.0, %v2606
  %v2608 = vpop.f32.mrf.mxu0
  %v2609 = vadd.f32 0.0, %v2608
  %2610 = vdwg.mxu0
  %2611 = vmatpush.bf16.msra.mxu0 0
  %2612 = vmatpush.bf16.msra.mxu0 0
  %2613 = vmatpush.bf16.msra.mxu0 0
  %2614 = vmatpush.bf16.msra.mxu0 0
  %2615 = vmatpush.bf16.msra.mxu0 0
  %2616 = vmatpush.bf16.msra.mxu0 0
  %2617 = vmatpush.bf16.msra.mxu0 %v2452
  %2618 = vmatpush.bf16.msra.mxu0 %v2387
  %2619 = vmatmul.bf16.gmra.mxu0 %v2416
  %v2620 = vpop.f32.mrf.mxu0
  %v2621 = vadd.f32 0.0, %v2620
  %v2622 = vpop.f32.mrf.mxu0
  %v2623 = vadd.f32 0.0, %v2622
  %2624 = vdwg.mxu0
  %2625 = vmatpush.bf16.msra.mxu0 0
  %2626 = vmatpush.bf16.msra.mxu0 0
  %2627 = vmatpush.bf16.msra.mxu0 0
  %2628 = vmatpush.bf16.msra.mxu0 0
  %2629 = vmatpush.bf16.msra.mxu0 0
  %2630 = vmatpush.bf16.msra.mxu0 0
  %2631 = vmatpush.bf16.msra.mxu0 %v2455
  %2632 = vmatpush.bf16.msra.mxu0 %v2388
  %2633 = vmatmul.bf16.gmra.mxu0 %v2416
  %v2634 = vpop.f32.mrf.mxu0
  %v2635 = vadd.f32 0.0, %v2634
  %v2636 = vpop.f32.mrf.mxu0
  %v2637 = vadd.f32 0.0, %v2636
  %2638 = vdwg.mxu0
  %v2639 = vadd.f32 %v2140, %v2467
  %v2640 = vadd.f32 %v2154, %v2481
  %v2641 = vadd.f32 %v2168, %v2495
  %v2642 = vadd.f32 %v2182, %v2509
  %v2643 = vadd.f32 %v2196, %v2523
  %v2644 = vadd.f32 %v2210, %v2537
  %v2645 = vadd.f32 %v2224, %v2551
  %v2646 = vadd.f32 %v2238, %v2565
  %v2647 = vadd.f32 %v2252, %v2579
  %v2648 = vadd.f32 %v2266, %v2593
  %v2649 = vadd.f32 %v2280, %v2607
  %v2650 = vadd.f32 %v2294, %v2621
  %v2651 = vadd.f32 %v2308, %v2635
  %v2652 = vadd.f32 %v2142, %v2469
  %v2653 = vadd.f32 %v2156, %v2483
  %v2654 = vadd.f32 %v2170, %v2497
  %v2655 = vadd.f32 %v2184, %v2511
  %v2656 = vadd.f32 %v2198, %v2525
  %v2657 = vadd.f32 %v2212, %v2539
  %v2658 = vadd.f32 %v2226, %v2553
  %v2659 = vadd.f32 %v2240, %v2567
  %v2660 = vadd.f32 %v2254, %v2581
  %v2661 = vadd.f32 %v2268, %v2595
  %v2662 = vadd.f32 %v2282, %v2609
  %v2663 = vadd.f32 %v2296, %v2623
  %v2664 = vadd.f32 %v2310, %v2637
  %v2665 = vld [vmem:[%s2 + $0x18] sm:$0xf]
  %v2666 = vld [vmem:[%s2 + $0x1c] sm:$0xf]
  %v2669 = vunpack.c.l.b16 %v2665
  %v2670 = vunpack.c.l.b16 %v2666
  %v2671 = vpack.c.b16 %v2670, %v2669
  %2672 = vrot.lane.b32.xlu0 %v1710, 122
  %v2673 = vpop.permute.xlu0 %2672
  %2674 = vrot.lane.b32.xlu0 %v1711, 122
  %v2675 = vpop.permute.xlu0 %2674
  %2676 = vrot.lane.b32.xlu0 %v1712, 122
  %v2677 = vpop.permute.xlu0 %2676
  %2678 = vrot.lane.b32.xlu0 %v1713, 122
  %v2679 = vpop.permute.xlu0 %2678
  %2680 = vrot.lane.b32.xlu0 %v1714, 122
  %v2681 = vpop.permute.xlu0 %2680
  %2682 = vrot.lane.b32.xlu0 %v1715, 122
  %v2683 = vpop.permute.xlu0 %2682
  %2684 = vrot.lane.b32.xlu0 %v1716, 122
  %v2685 = vpop.permute.xlu0 %2684
  %2686 = vrot.lane.b32.xlu0 %v1717, 122
  %v2687 = vpop.permute.xlu0 %2686
  %2688 = vrot.lane.b32.xlu0 %v1718, 122
  %v2689 = vpop.permute.xlu0 %2688
  %2690 = vrot.lane.b32.xlu0 %v1719, 122
  %v2691 = vpop.permute.xlu0 %2690
  %2692 = vrot.lane.b32.xlu0 %v1720, 122
  %v2693 = vpop.permute.xlu0 %2692
  %2694 = vrot.lane.b32.xlu0 %v1721, 122
  %v2695 = vpop.permute.xlu0 %2694
  %2696 = vrot.lane.b32.xlu0 %v1722, 122
  %v2697 = vpop.permute.xlu0 %2696
  %2698 = vrot.lane.b32.xlu0 %v1723, 122
  %v2699 = vpop.permute.xlu0 %2698
  %2700 = vrot.lane.b32.xlu0 %v1724, 122
  %v2701 = vpop.permute.xlu0 %2700
  %2702 = vrot.lane.b32.xlu0 %v1725, 122
  %v2703 = vpop.permute.xlu0 %2702
  %2704 = vrot.lane.b32.xlu0 %v1726, 122
  %v2705 = vpop.permute.xlu0 %2704
  %2706 = vrot.lane.b32.xlu0 %v1727, 122
  %v2707 = vpop.permute.xlu0 %2706
  %2708 = vrot.lane.b32.xlu0 %v1728, 122
  %v2709 = vpop.permute.xlu0 %2708
  %2710 = vrot.lane.b32.xlu0 %v1729, 122
  %v2711 = vpop.permute.xlu0 %2710
  %2712 = vrot.lane.b32.xlu0 %v1730, 122
  %v2713 = vpop.permute.xlu0 %2712
  %2714 = vrot.lane.b32.xlu0 %v1731, 122
  %v2715 = vpop.permute.xlu0 %2714
  %2716 = vrot.lane.b32.xlu0 %v1732, 122
  %v2717 = vpop.permute.xlu0 %2716
  %2718 = vrot.lane.b32.xlu0 %v1733, 122
  %v2719 = vpop.permute.xlu0 %2718
  %2720 = vrot.lane.b32.xlu0 %v1734, 122
  %v2721 = vpop.permute.xlu0 %2720
  %2722 = vrot.lane.b32.xlu0 %v1735, 122
  %v2723 = vpop.permute.xlu0 %2722
  %2724 = vrot.lane.b32.xlu0 %v1736, 122
  %v2725 = vpop.permute.xlu0 %2724
  %2726 = vrot.lane.b32.xlu0 %v1737, 122
  %v2727 = vpop.permute.xlu0 %2726
  %vm2728 = vcmask 998400
  %v2729 = vsel %vm2728, %v2673, %v2675
  %v2730 = vsel %vm2728, %v2675, %v2677
  %v2731 = vsel %vm2728, %v2677, %v2679
  %v2732 = vsel %vm2728, %v2679, %v2681
  %v2733 = vsel %vm2728, %v2681, %v2683
  %v2734 = vsel %vm2728, %v2683, %v2685
  %v2735 = vsel %vm2728, %v2685, %v2687
  %v2736 = vsel %vm2728, %v2687, %v2689
  %v2737 = vsel %vm2728, %v2689, %v2691
  %v2738 = vsel %vm2728, %v2691, %v2693
  %v2739 = vsel %vm2728, %v2693, %v2695
  %v2740 = vsel %vm2728, %v2695, %v2697
  %v2741 = vsel %vm2728, %v2697, %v2699
  %v2742 = vsel %vm2728, %v2701, %v2703
  %v2743 = vsel %vm2728, %v2703, %v2705
  %v2744 = vsel %vm2728, %v2705, %v2707
  %v2745 = vsel %vm2728, %v2707, %v2709
  %v2746 = vsel %vm2728, %v2709, %v2711
  %v2747 = vsel %vm2728, %v2711, %v2713
  %v2748 = vsel %vm2728, %v2713, %v2715
  %v2749 = vsel %vm2728, %v2715, %v2717
  %v2750 = vsel %vm2728, %v2717, %v2719
  %v2751 = vsel %vm2728, %v2719, %v2721
  %v2752 = vsel %vm2728, %v2721, %v2723
  %v2753 = vsel %vm2728, %v2723, %v2725
  %v2754 = vsel %vm2728, %v2725, %v2727
  %v2769 = vsel %vm1834, %v2671, 0
  %v2772 = vsel %vm1838, %v2742, 0
  %v2775 = vsel %vm1838, %v2743, 0
  %v2778 = vsel %vm1838, %v2744, 0
  %v2781 = vsel %vm1838, %v2745, 0
  %v2784 = vsel %vm1838, %v2746, 0
  %v2787 = vsel %vm1838, %v2747, 0
  %v2790 = vsel %vm1838, %v2748, 0
  %v2793 = vsel %vm1838, %v2749, 0
  %v2796 = vsel %vm1838, %v2750, 0
  %v2799 = vsel %vm1838, %v2751, 0
  %v2802 = vsel %vm1838, %v2752, 0
  %v2805 = vsel %vm1838, %v2753, 0
  %v2808 = vsel %vm1838, %v2754, 0
  %2810 = vmatpush.bf16.msra.mxu0 0
  %2811 = vmatpush.bf16.msra.mxu0 0
  %2812 = vmatpush.bf16.msra.mxu0 0
  %2813 = vmatpush.bf16.msra.mxu0 0
  %2814 = vmatpush.bf16.msra.mxu0 0
  %2815 = vmatpush.bf16.msra.mxu0 0
  %2816 = vmatpush.bf16.msra.mxu0 %v2772
  %2817 = vmatpush.bf16.msra.mxu0 %v2729
  %2818 = vmatmul.bf16.gmra.mxu0 %v2769
  %v2819 = vpop.f32.mrf.mxu0
  %v2820 = vadd.f32 0.0, %v2819
  %v2821 = vpop.f32.mrf.mxu0
  %v2822 = vadd.f32 0.0, %v2821
  %2823 = vdwg.mxu0
  %2824 = vmatpush.bf16.msra.mxu0 0
  %2825 = vmatpush.bf16.msra.mxu0 0
  %2826 = vmatpush.bf16.msra.mxu0 0
  %2827 = vmatpush.bf16.msra.mxu0 0
  %2828 = vmatpush.bf16.msra.mxu0 0
  %2829 = vmatpush.bf16.msra.mxu0 0
  %2830 = vmatpush.bf16.msra.mxu0 %v2775
  %2831 = vmatpush.bf16.msra.mxu0 %v2730
  %2832 = vmatmul.bf16.gmra.mxu0 %v2769
  %v2833 = vpop.f32.mrf.mxu0
  %v2834 = vadd.f32 0.0, %v2833
  %v2835 = vpop.f32.mrf.mxu0
  %v2836 = vadd.f32 0.0, %v2835
  %2837 = vdwg.mxu0
  %2838 = vmatpush.bf16.msra.mxu0 0
  %2839 = vmatpush.bf16.msra.mxu0 0
  %2840 = vmatpush.bf16.msra.mxu0 0
  %2841 = vmatpush.bf16.msra.mxu0 0
  %2842 = vmatpush.bf16.msra.mxu0 0
  %2843 = vmatpush.bf16.msra.mxu0 0
  %2844 = vmatpush.bf16.msra.mxu0 %v2778
  %2845 = vmatpush.bf16.msra.mxu0 %v2731
  %2846 = vmatmul.bf16.gmra.mxu0 %v2769
  %v2847 = vpop.f32.mrf.mxu0
  %v2848 = vadd.f32 0.0, %v2847
  %v2849 = vpop.f32.mrf.mxu0
  %v2850 = vadd.f32 0.0, %v2849
  %2851 = vdwg.mxu0
  %2852 = vmatpush.bf16.msra.mxu0 0
  %2853 = vmatpush.bf16.msra.mxu0 0
  %2854 = vmatpush.bf16.msra.mxu0 0
  %2855 = vmatpush.bf16.msra.mxu0 0
  %2856 = vmatpush.bf16.msra.mxu0 0
  %2857 = vmatpush.bf16.msra.mxu0 0
  %2858 = vmatpush.bf16.msra.mxu0 %v2781
  %2859 = vmatpush.bf16.msra.mxu0 %v2732
  %2860 = vmatmul.bf16.gmra.mxu0 %v2769
  %v2861 = vpop.f32.mrf.mxu0
  %v2862 = vadd.f32 0.0, %v2861
  %v2863 = vpop.f32.mrf.mxu0
  %v2864 = vadd.f32 0.0, %v2863
  %2865 = vdwg.mxu0
  %2866 = vmatpush.bf16.msra.mxu0 0
  %2867 = vmatpush.bf16.msra.mxu0 0
  %2868 = vmatpush.bf16.msra.mxu0 0
  %2869 = vmatpush.bf16.msra.mxu0 0
  %2870 = vmatpush.bf16.msra.mxu0 0
  %2871 = vmatpush.bf16.msra.mxu0 0
  %2872 = vmatpush.bf16.msra.mxu0 %v2784
  %2873 = vmatpush.bf16.msra.mxu0 %v2733
  %2874 = vmatmul.bf16.gmra.mxu0 %v2769
  %v2875 = vpop.f32.mrf.mxu0
  %v2876 = vadd.f32 0.0, %v2875
  %v2877 = vpop.f32.mrf.mxu0
  %v2878 = vadd.f32 0.0, %v2877
  %2879 = vdwg.mxu0
  %2880 = vmatpush.bf16.msra.mxu0 0
  %2881 = vmatpush.bf16.msra.mxu0 0
  %2882 = vmatpush.bf16.msra.mxu0 0
  %2883 = vmatpush.bf16.msra.mxu0 0
  %2884 = vmatpush.bf16.msra.mxu0 0
  %2885 = vmatpush.bf16.msra.mxu0 0
  %2886 = vmatpush.bf16.msra.mxu0 %v2787
  %2887 = vmatpush.bf16.msra.mxu0 %v2734
  %2888 = vmatmul.bf16.gmra.mxu0 %v2769
  %v2889 = vpop.f32.mrf.mxu0
  %v2890 = vadd.f32 0.0, %v2889
  %v2891 = vpop.f32.mrf.mxu0
  %v2892 = vadd.f32 0.0, %v2891
  %2893 = vdwg.mxu0
  %2894 = vmatpush.bf16.msra.mxu0 0
  %2895 = vmatpush.bf16.msra.mxu0 0
  %2896 = vmatpush.bf16.msra.mxu0 0
  %2897 = vmatpush.bf16.msra.mxu0 0
  %2898 = vmatpush.bf16.msra.mxu0 0
  %2899 = vmatpush.bf16.msra.mxu0 0
  %2900 = vmatpush.bf16.msra.mxu0 %v2790
  %2901 = vmatpush.bf16.msra.mxu0 %v2735
  %2902 = vmatmul.bf16.gmra.mxu0 %v2769
  %v2903 = vpop.f32.mrf.mxu0
  %v2904 = vadd.f32 0.0, %v2903
  %v2905 = vpop.f32.mrf.mxu0
  %v2906 = vadd.f32 0.0, %v2905
  %2907 = vdwg.mxu0
  %2908 = vmatpush.bf16.msra.mxu0 0
  %2909 = vmatpush.bf16.msra.mxu0 0
  %2910 = vmatpush.bf16.msra.mxu0 0
  %2911 = vmatpush.bf16.msra.mxu0 0
  %2912 = vmatpush.bf16.msra.mxu0 0
  %2913 = vmatpush.bf16.msra.mxu0 0
  %2914 = vmatpush.bf16.msra.mxu0 %v2793
  %2915 = vmatpush.bf16.msra.mxu0 %v2736
  %2916 = vmatmul.bf16.gmra.mxu0 %v2769
  %v2917 = vpop.f32.mrf.mxu0
  %v2918 = vadd.f32 0.0, %v2917
  %v2919 = vpop.f32.mrf.mxu0
  %v2920 = vadd.f32 0.0, %v2919
  %2921 = vdwg.mxu0
  %2922 = vmatpush.bf16.msra.mxu0 0
  %2923 = vmatpush.bf16.msra.mxu0 0
  %2924 = vmatpush.bf16.msra.mxu0 0
  %2925 = vmatpush.bf16.msra.mxu0 0
  %2926 = vmatpush.bf16.msra.mxu0 0
  %2927 = vmatpush.bf16.msra.mxu0 0
  %2928 = vmatpush.bf16.msra.mxu0 %v2796
  %2929 = vmatpush.bf16.msra.mxu0 %v2737
  %2930 = vmatmul.bf16.gmra.mxu0 %v2769
  %v2931 = vpop.f32.mrf.mxu0
  %v2932 = vadd.f32 0.0, %v2931
  %v2933 = vpop.f32.mrf.mxu0
  %v2934 = vadd.f32 0.0, %v2933
  %2935 = vdwg.mxu0
  %2936 = vmatpush.bf16.msra.mxu0 0
  %2937 = vmatpush.bf16.msra.mxu0 0
  %2938 = vmatpush.bf16.msra.mxu0 0
  %2939 = vmatpush.bf16.msra.mxu0 0
  %2940 = vmatpush.bf16.msra.mxu0 0
  %2941 = vmatpush.bf16.msra.mxu0 0
  %2942 = vmatpush.bf16.msra.mxu0 %v2799
  %2943 = vmatpush.bf16.msra.mxu0 %v2738
  %2944 = vmatmul.bf16.gmra.mxu0 %v2769
  %v2945 = vpop.f32.mrf.mxu0
  %v2946 = vadd.f32 0.0, %v2945
  %v2947 = vpop.f32.mrf.mxu0
  %v2948 = vadd.f32 0.0, %v2947
  %2949 = vdwg.mxu0
  %2950 = vmatpush.bf16.msra.mxu0 0
  %2951 = vmatpush.bf16.msra.mxu0 0
  %2952 = vmatpush.bf16.msra.mxu0 0
  %2953 = vmatpush.bf16.msra.mxu0 0
  %2954 = vmatpush.bf16.msra.mxu0 0
  %2955 = vmatpush.bf16.msra.mxu0 0
  %2956 = vmatpush.bf16.msra.mxu0 %v2802
  %2957 = vmatpush.bf16.msra.mxu0 %v2739
  %2958 = vmatmul.bf16.gmra.mxu0 %v2769
  %v2959 = vpop.f32.mrf.mxu0
  %v2960 = vadd.f32 0.0, %v2959
  %v2961 = vpop.f32.mrf.mxu0
  %v2962 = vadd.f32 0.0, %v2961
  %2963 = vdwg.mxu0
  %2964 = vmatpush.bf16.msra.mxu0 0
  %2965 = vmatpush.bf16.msra.mxu0 0
  %2966 = vmatpush.bf16.msra.mxu0 0
  %2967 = vmatpush.bf16.msra.mxu0 0
  %2968 = vmatpush.bf16.msra.mxu0 0
  %2969 = vmatpush.bf16.msra.mxu0 0
  %2970 = vmatpush.bf16.msra.mxu0 %v2805
  %2971 = vmatpush.bf16.msra.mxu0 %v2740
  %2972 = vmatmul.bf16.gmra.mxu0 %v2769
  %v2973 = vpop.f32.mrf.mxu0
  %v2974 = vadd.f32 0.0, %v2973
  %v2975 = vpop.f32.mrf.mxu0
  %v2976 = vadd.f32 0.0, %v2975
  %2977 = vdwg.mxu0
  %2978 = vmatpush.bf16.msra.mxu0 0
  %2979 = vmatpush.bf16.msra.mxu0 0
  %2980 = vmatpush.bf16.msra.mxu0 0
  %2981 = vmatpush.bf16.msra.mxu0 0
  %2982 = vmatpush.bf16.msra.mxu0 0
  %2983 = vmatpush.bf16.msra.mxu0 0
  %2984 = vmatpush.bf16.msra.mxu0 %v2808
  %2985 = vmatpush.bf16.msra.mxu0 %v2741
  %2986 = vmatmul.bf16.gmra.mxu0 %v2769
  %v2987 = vpop.f32.mrf.mxu0
  %v2988 = vadd.f32 0.0, %v2987
  %v2989 = vpop.f32.mrf.mxu0
  %v2990 = vadd.f32 0.0, %v2989
  %2991 = vdwg.mxu0
  %v2992 = vadd.f32 %v2639, %v2820
  %v2993 = vadd.f32 %v2640, %v2834
  %v2994 = vadd.f32 %v2641, %v2848
  %v2995 = vadd.f32 %v2642, %v2862
  %v2996 = vadd.f32 %v2643, %v2876
  %v2997 = vadd.f32 %v2644, %v2890
  %v2998 = vadd.f32 %v2645, %v2904
  %v2999 = vadd.f32 %v2646, %v2918
  %v3000 = vadd.f32 %v2647, %v2932
  %v3001 = vadd.f32 %v2648, %v2946
  %v3002 = vadd.f32 %v2649, %v2960
  %v3003 = vadd.f32 %v2650, %v2974
  %v3004 = vadd.f32 %v2651, %v2988
  %v3005 = vadd.f32 %v2652, %v2822
  %v3006 = vadd.f32 %v2653, %v2836
  %v3007 = vadd.f32 %v2654, %v2850
  %v3008 = vadd.f32 %v2655, %v2864
  %v3009 = vadd.f32 %v2656, %v2878
  %v3010 = vadd.f32 %v2657, %v2892
  %v3011 = vadd.f32 %v2658, %v2906
  %v3012 = vadd.f32 %v2659, %v2920
  %v3013 = vadd.f32 %v2660, %v2934
  %v3014 = vadd.f32 %v2661, %v2948
  %v3015 = vadd.f32 %v2662, %v2962
  %v3016 = vadd.f32 %v2663, %v2976
  %v3017 = vadd.f32 %v2664, %v2990
  %v3018 = vld [vmem:[%s2 + $0x20] sm:$0xf]
  %v3019 = vld [vmem:[%s2 + $0x24] sm:$0xf]
  %v3022 = vunpack.c.l.b16 %v3018
  %v3023 = vunpack.c.l.b16 %v3019
  %v3024 = vpack.c.b16 %v3023, %v3022
  %3025 = vrot.lane.b32.xlu0 %v1710, 120
  %v3026 = vpop.permute.xlu0 %3025
  %3027 = vrot.lane.b32.xlu0 %v1711, 120
  %v3028 = vpop.permute.xlu0 %3027
  %3029 = vrot.lane.b32.xlu0 %v1712, 120
  %v3030 = vpop.permute.xlu0 %3029
  %3031 = vrot.lane.b32.xlu0 %v1713, 120
  %v3032 = vpop.permute.xlu0 %3031
  %3033 = vrot.lane.b32.xlu0 %v1714, 120
  %v3034 = vpop.permute.xlu0 %3033
  %3035 = vrot.lane.b32.xlu0 %v1715, 120
  %v3036 = vpop.permute.xlu0 %3035
  %3037 = vrot.lane.b32.xlu0 %v1716, 120
  %v3038 = vpop.permute.xlu0 %3037
  %3039 = vrot.lane.b32.xlu0 %v1717, 120
  %v3040 = vpop.permute.xlu0 %3039
  %3041 = vrot.lane.b32.xlu0 %v1718, 120
  %v3042 = vpop.permute.xlu0 %3041
  %3043 = vrot.lane.b32.xlu0 %v1719, 120
  %v3044 = vpop.permute.xlu0 %3043
  %3045 = vrot.lane.b32.xlu0 %v1720, 120
  %v3046 = vpop.permute.xlu0 %3045
  %3047 = vrot.lane.b32.xlu0 %v1721, 120
  %v3048 = vpop.permute.xlu0 %3047
  %3049 = vrot.lane.b32.xlu0 %v1722, 120
  %v3050 = vpop.permute.xlu0 %3049
  %3051 = vrot.lane.b32.xlu0 %v1723, 120
  %v3052 = vpop.permute.xlu0 %3051
  %3053 = vrot.lane.b32.xlu0 %v1724, 120
  %v3054 = vpop.permute.xlu0 %3053
  %3055 = vrot.lane.b32.xlu0 %v1725, 120
  %v3056 = vpop.permute.xlu0 %3055
  %3057 = vrot.lane.b32.xlu0 %v1726, 120
  %v3058 = vpop.permute.xlu0 %3057
  %3059 = vrot.lane.b32.xlu0 %v1727, 120
  %v3060 = vpop.permute.xlu0 %3059
  %3061 = vrot.lane.b32.xlu0 %v1728, 120
  %v3062 = vpop.permute.xlu0 %3061
  %3063 = vrot.lane.b32.xlu0 %v1729, 120
  %v3064 = vpop.permute.xlu0 %3063
  %3065 = vrot.lane.b32.xlu0 %v1730, 120
  %v3066 = vpop.permute.xlu0 %3065
  %3067 = vrot.lane.b32.xlu0 %v1731, 120
  %v3068 = vpop.permute.xlu0 %3067
  %3069 = vrot.lane.b32.xlu0 %v1732, 120
  %v3070 = vpop.permute.xlu0 %3069
  %3071 = vrot.lane.b32.xlu0 %v1733, 120
  %v3072 = vpop.permute.xlu0 %3071
  %3073 = vrot.lane.b32.xlu0 %v1734, 120
  %v3074 = vpop.permute.xlu0 %3073
  %3075 = vrot.lane.b32.xlu0 %v1735, 120
  %v3076 = vpop.permute.xlu0 %3075
  %3077 = vrot.lane.b32.xlu0 %v1736, 120
  %v3078 = vpop.permute.xlu0 %3077
  %3079 = vrot.lane.b32.xlu0 %v1737, 120
  %v3080 = vpop.permute.xlu0 %3079
  %vm3081 = vcmask 982016
  %v3082 = vsel %vm3081, %v3026, %v3028
  %v3083 = vsel %vm3081, %v3028, %v3030
  %v3084 = vsel %vm3081, %v3030, %v3032
  %v3085 = vsel %vm3081, %v3032, %v3034
  %v3086 = vsel %vm3081, %v3034, %v3036
  %v3087 = vsel %vm3081, %v3036, %v3038
  %v3088 = vsel %vm3081, %v3038, %v3040
  %v3089 = vsel %vm3081, %v3040, %v3042
  %v3090 = vsel %vm3081, %v3042, %v3044
  %v3091 = vsel %vm3081, %v3044, %v3046
  %v3092 = vsel %vm3081, %v3046, %v3048
  %v3093 = vsel %vm3081, %v3048, %v3050
  %v3094 = vsel %vm3081, %v3050, %v3052
  %v3095 = vsel %vm3081, %v3054, %v3056
  %v3096 = vsel %vm3081, %v3056, %v3058
  %v3097 = vsel %vm3081, %v3058, %v3060
  %v3098 = vsel %vm3081, %v3060, %v3062
  %v3099 = vsel %vm3081, %v3062, %v3064
  %v3100 = vsel %vm3081, %v3064, %v3066
  %v3101 = vsel %vm3081, %v3066, %v3068
  %v3102 = vsel %vm3081, %v3068, %v3070
  %v3103 = vsel %vm3081, %v3070, %v3072
  %v3104 = vsel %vm3081, %v3072, %v3074
  %v3105 = vsel %vm3081, %v3074, %v3076
  %v3106 = vsel %vm3081, %v3076, %v3078
  %v3107 = vsel %vm3081, %v3078, %v3080
  %v3122 = vsel %vm1834, %v3024, 0
  %v3125 = vsel %vm1838, %v3095, 0
  %v3128 = vsel %vm1838, %v3096, 0
  %v3131 = vsel %vm1838, %v3097, 0
  %v3134 = vsel %vm1838, %v3098, 0
  %v3137 = vsel %vm1838, %v3099, 0
  %v3140 = vsel %vm1838, %v3100, 0
  %v3143 = vsel %vm1838, %v3101, 0
  %v3146 = vsel %vm1838, %v3102, 0
  %v3149 = vsel %vm1838, %v3103, 0
  %v3152 = vsel %vm1838, %v3104, 0
  %v3155 = vsel %vm1838, %v3105, 0
  %v3158 = vsel %vm1838, %v3106, 0
  %v3161 = vsel %vm1838, %v3107, 0
  %3163 = vmatpush.bf16.msra.mxu0 0
  %3164 = vmatpush.bf16.msra.mxu0 0
  %3165 = vmatpush.bf16.msra.mxu0 0
  %3166 = vmatpush.bf16.msra.mxu0 0
  %3167 = vmatpush.bf16.msra.mxu0 0
  %3168 = vmatpush.bf16.msra.mxu0 0
  %3169 = vmatpush.bf16.msra.mxu0 %v3125
  %3170 = vmatpush.bf16.msra.mxu0 %v3082
  %3171 = vmatmul.bf16.gmra.mxu0 %v3122
  %v3172 = vpop.f32.mrf.mxu0
  %v3173 = vadd.f32 0.0, %v3172
  %v3174 = vpop.f32.mrf.mxu0
  %v3175 = vadd.f32 0.0, %v3174
  %3176 = vdwg.mxu0
  %3177 = vmatpush.bf16.msra.mxu0 0
  %3178 = vmatpush.bf16.msra.mxu0 0
  %3179 = vmatpush.bf16.msra.mxu0 0
  %3180 = vmatpush.bf16.msra.mxu0 0
  %3181 = vmatpush.bf16.msra.mxu0 0
  %3182 = vmatpush.bf16.msra.mxu0 0
  %3183 = vmatpush.bf16.msra.mxu0 %v3128
  %3184 = vmatpush.bf16.msra.mxu0 %v3083
  %3185 = vmatmul.bf16.gmra.mxu0 %v3122
  %v3186 = vpop.f32.mrf.mxu0
  %v3187 = vadd.f32 0.0, %v3186
  %v3188 = vpop.f32.mrf.mxu0
  %v3189 = vadd.f32 0.0, %v3188
  %3190 = vdwg.mxu0
  %3191 = vmatpush.bf16.msra.mxu0 0
  %3192 = vmatpush.bf16.msra.mxu0 0
  %3193 = vmatpush.bf16.msra.mxu0 0
  %3194 = vmatpush.bf16.msra.mxu0 0
  %3195 = vmatpush.bf16.msra.mxu0 0
  %3196 = vmatpush.bf16.msra.mxu0 0
  %3197 = vmatpush.bf16.msra.mxu0 %v3131
  %3198 = vmatpush.bf16.msra.mxu0 %v3084
  %3199 = vmatmul.bf16.gmra.mxu0 %v3122
  %v3200 = vpop.f32.mrf.mxu0
  %v3201 = vadd.f32 0.0, %v3200
  %v3202 = vpop.f32.mrf.mxu0
  %v3203 = vadd.f32 0.0, %v3202
  %3204 = vdwg.mxu0
  %3205 = vmatpush.bf16.msra.mxu0 0
  %3206 = vmatpush.bf16.msra.mxu0 0
  %3207 = vmatpush.bf16.msra.mxu0 0
  %3208 = vmatpush.bf16.msra.mxu0 0
  %3209 = vmatpush.bf16.msra.mxu0 0
  %3210 = vmatpush.bf16.msra.mxu0 0
  %3211 = vmatpush.bf16.msra.mxu0 %v3134
  %3212 = vmatpush.bf16.msra.mxu0 %v3085
  %3213 = vmatmul.bf16.gmra.mxu0 %v3122
  %v3214 = vpop.f32.mrf.mxu0
  %v3215 = vadd.f32 0.0, %v3214
  %v3216 = vpop.f32.mrf.mxu0
  %v3217 = vadd.f32 0.0, %v3216
  %3218 = vdwg.mxu0
  %3219 = vmatpush.bf16.msra.mxu0 0
  %3220 = vmatpush.bf16.msra.mxu0 0
  %3221 = vmatpush.bf16.msra.mxu0 0
  %3222 = vmatpush.bf16.msra.mxu0 0
  %3223 = vmatpush.bf16.msra.mxu0 0
  %3224 = vmatpush.bf16.msra.mxu0 0
  %3225 = vmatpush.bf16.msra.mxu0 %v3137
  %3226 = vmatpush.bf16.msra.mxu0 %v3086
  %3227 = vmatmul.bf16.gmra.mxu0 %v3122
  %v3228 = vpop.f32.mrf.mxu0
  %v3229 = vadd.f32 0.0, %v3228
  %v3230 = vpop.f32.mrf.mxu0
  %v3231 = vadd.f32 0.0, %v3230
  %3232 = vdwg.mxu0
  %3233 = vmatpush.bf16.msra.mxu0 0
  %3234 = vmatpush.bf16.msra.mxu0 0
  %3235 = vmatpush.bf16.msra.mxu0 0
  %3236 = vmatpush.bf16.msra.mxu0 0
  %3237 = vmatpush.bf16.msra.mxu0 0
  %3238 = vmatpush.bf16.msra.mxu0 0
  %3239 = vmatpush.bf16.msra.mxu0 %v3140
  %3240 = vmatpush.bf16.msra.mxu0 %v3087
  %3241 = vmatmul.bf16.gmra.mxu0 %v3122
  %v3242 = vpop.f32.mrf.mxu0
  %v3243 = vadd.f32 0.0, %v3242
  %v3244 = vpop.f32.mrf.mxu0
  %v3245 = vadd.f32 0.0, %v3244
  %3246 = vdwg.mxu0
  %3247 = vmatpush.bf16.msra.mxu0 0
  %3248 = vmatpush.bf16.msra.mxu0 0
  %3249 = vmatpush.bf16.msra.mxu0 0
  %3250 = vmatpush.bf16.msra.mxu0 0
  %3251 = vmatpush.bf16.msra.mxu0 0
  %3252 = vmatpush.bf16.msra.mxu0 0
  %3253 = vmatpush.bf16.msra.mxu0 %v3143
  %3254 = vmatpush.bf16.msra.mxu0 %v3088
  %3255 = vmatmul.bf16.gmra.mxu0 %v3122
  %v3256 = vpop.f32.mrf.mxu0
  %v3257 = vadd.f32 0.0, %v3256
  %v3258 = vpop.f32.mrf.mxu0
  %v3259 = vadd.f32 0.0, %v3258
  %3260 = vdwg.mxu0
  %3261 = vmatpush.bf16.msra.mxu0 0
  %3262 = vmatpush.bf16.msra.mxu0 0
  %3263 = vmatpush.bf16.msra.mxu0 0
  %3264 = vmatpush.bf16.msra.mxu0 0
  %3265 = vmatpush.bf16.msra.mxu0 0
  %3266 = vmatpush.bf16.msra.mxu0 0
  %3267 = vmatpush.bf16.msra.mxu0 %v3146
  %3268 = vmatpush.bf16.msra.mxu0 %v3089
  %3269 = vmatmul.bf16.gmra.mxu0 %v3122
  %v3270 = vpop.f32.mrf.mxu0
  %v3271 = vadd.f32 0.0, %v3270
  %v3272 = vpop.f32.mrf.mxu0
  %v3273 = vadd.f32 0.0, %v3272
  %3274 = vdwg.mxu0
  %3275 = vmatpush.bf16.msra.mxu0 0
  %3276 = vmatpush.bf16.msra.mxu0 0
  %3277 = vmatpush.bf16.msra.mxu0 0
  %3278 = vmatpush.bf16.msra.mxu0 0
  %3279 = vmatpush.bf16.msra.mxu0 0
  %3280 = vmatpush.bf16.msra.mxu0 0
  %3281 = vmatpush.bf16.msra.mxu0 %v3149
  %3282 = vmatpush.bf16.msra.mxu0 %v3090
  %3283 = vmatmul.bf16.gmra.mxu0 %v3122
  %v3284 = vpop.f32.mrf.mxu0
  %v3285 = vadd.f32 0.0, %v3284
  %v3286 = vpop.f32.mrf.mxu0
  %v3287 = vadd.f32 0.0, %v3286
  %3288 = vdwg.mxu0
  %3289 = vmatpush.bf16.msra.mxu0 0
  %3290 = vmatpush.bf16.msra.mxu0 0
  %3291 = vmatpush.bf16.msra.mxu0 0
  %3292 = vmatpush.bf16.msra.mxu0 0
  %3293 = vmatpush.bf16.msra.mxu0 0
  %3294 = vmatpush.bf16.msra.mxu0 0
  %3295 = vmatpush.bf16.msra.mxu0 %v3152
  %3296 = vmatpush.bf16.msra.mxu0 %v3091
  %3297 = vmatmul.bf16.gmra.mxu0 %v3122
  %v3298 = vpop.f32.mrf.mxu0
  %v3299 = vadd.f32 0.0, %v3298
  %v3300 = vpop.f32.mrf.mxu0
  %v3301 = vadd.f32 0.0, %v3300
  %3302 = vdwg.mxu0
  %3303 = vmatpush.bf16.msra.mxu0 0
  %3304 = vmatpush.bf16.msra.mxu0 0
  %3305 = vmatpush.bf16.msra.mxu0 0
  %3306 = vmatpush.bf16.msra.mxu0 0
  %3307 = vmatpush.bf16.msra.mxu0 0
  %3308 = vmatpush.bf16.msra.mxu0 0
  %3309 = vmatpush.bf16.msra.mxu0 %v3155
  %3310 = vmatpush.bf16.msra.mxu0 %v3092
  %3311 = vmatmul.bf16.gmra.mxu0 %v3122
  %v3312 = vpop.f32.mrf.mxu0
  %v3313 = vadd.f32 0.0, %v3312
  %v3314 = vpop.f32.mrf.mxu0
  %v3315 = vadd.f32 0.0, %v3314
  %3316 = vdwg.mxu0
  %3317 = vmatpush.bf16.msra.mxu0 0
  %3318 = vmatpush.bf16.msra.mxu0 0
  %3319 = vmatpush.bf16.msra.mxu0 0
  %3320 = vmatpush.bf16.msra.mxu0 0
  %3321 = vmatpush.bf16.msra.mxu0 0
  %3322 = vmatpush.bf16.msra.mxu0 0
  %3323 = vmatpush.bf16.msra.mxu0 %v3158
  %3324 = vmatpush.bf16.msra.mxu0 %v3093
  %3325 = vmatmul.bf16.gmra.mxu0 %v3122
  %v3326 = vpop.f32.mrf.mxu0
  %v3327 = vadd.f32 0.0, %v3326
  %v3328 = vpop.f32.mrf.mxu0
  %v3329 = vadd.f32 0.0, %v3328
  %3330 = vdwg.mxu0
  %3331 = vmatpush.bf16.msra.mxu0 0
  %3332 = vmatpush.bf16.msra.mxu0 0
  %3333 = vmatpush.bf16.msra.mxu0 0
  %3334 = vmatpush.bf16.msra.mxu0 0
  %3335 = vmatpush.bf16.msra.mxu0 0
  %3336 = vmatpush.bf16.msra.mxu0 0
  %3337 = vmatpush.bf16.msra.mxu0 %v3161
  %3338 = vmatpush.bf16.msra.mxu0 %v3094
  %3339 = vmatmul.bf16.gmra.mxu0 %v3122
  %v3340 = vpop.f32.mrf.mxu0
  %v3341 = vadd.f32 0.0, %v3340
  %v3342 = vpop.f32.mrf.mxu0
  %v3343 = vadd.f32 0.0, %v3342
  %3344 = vdwg.mxu0
  %v3345 = vadd.f32 %v2992, %v3173
  %v3346 = vadd.f32 %v2993, %v3187
  %v3347 = vadd.f32 %v2994, %v3201
  %v3348 = vadd.f32 %v2995, %v3215
  %v3349 = vadd.f32 %v2996, %v3229
  %v3350 = vadd.f32 %v2997, %v3243
  %v3351 = vadd.f32 %v2998, %v3257
  %v3352 = vadd.f32 %v2999, %v3271
  %v3353 = vadd.f32 %v3000, %v3285
  %v3354 = vadd.f32 %v3001, %v3299
  %v3355 = vadd.f32 %v3002, %v3313
  %v3356 = vadd.f32 %v3003, %v3327
  %v3357 = vadd.f32 %v3004, %v3341
  %v3358 = vadd.f32 %v3005, %v3175
  %v3359 = vadd.f32 %v3006, %v3189
  %v3360 = vadd.f32 %v3007, %v3203
  %v3361 = vadd.f32 %v3008, %v3217
  %v3362 = vadd.f32 %v3009, %v3231
  %v3363 = vadd.f32 %v3010, %v3245
  %v3364 = vadd.f32 %v3011, %v3259
  %v3365 = vadd.f32 %v3012, %v3273
  %v3366 = vadd.f32 %v3013, %v3287
  %v3367 = vadd.f32 %v3014, %v3301
  %v3368 = vadd.f32 %v3015, %v3315
  %v3369 = vadd.f32 %v3016, %v3329
  %v3370 = vadd.f32 %v3017, %v3343
  %v3371 = vld [vmem:[%s3] sm:$0xff]
  %v3372 = vld [vmem:[%s3 + $0x8] sm:$0xff]
  %3374 = vset.pattern.permute.xlu0 3
  %3375 = vperm.xlu0 %3374, %v3371
  %v3376 = vpop.permute.xlu0 %3375
  %3379 = vset.pattern.permute.xlu0 3
  %3380 = vperm.xlu0 %3379, %v3372
  %v3381 = vpop.permute.xlu0 %3380
  %v3383 = vadd.f32 %v3345, %v3376
  %v3384 = vadd.f32 %v3346, %v3376
  %v3385 = vadd.f32 %v3347, %v3376
  %v3386 = vadd.f32 %v3348, %v3376
  %v3387 = vadd.f32 %v3349, %v3376
  %v3388 = vadd.f32 %v3350, %v3376
  %v3389 = vadd.f32 %v3351, %v3376
  %v3390 = vadd.f32 %v3352, %v3376
  %v3391 = vadd.f32 %v3353, %v3376
  %v3392 = vadd.f32 %v3354, %v3376
  %v3393 = vadd.f32 %v3355, %v3376
  %v3394 = vadd.f32 %v3356, %v3376
  %v3395 = vadd.f32 %v3357, %v3376
  %v3396 = vadd.f32 %v3358, %v3381
  %v3397 = vadd.f32 %v3359, %v3381
  %v3398 = vadd.f32 %v3360, %v3381
  %v3399 = vadd.f32 %v3361, %v3381
  %v3400 = vadd.f32 %v3362, %v3381
  %v3401 = vadd.f32 %v3363, %v3381
  %v3402 = vadd.f32 %v3364, %v3381
  %v3403 = vadd.f32 %v3365, %v3381
  %v3404 = vadd.f32 %v3366, %v3381
  %v3405 = vadd.f32 %v3367, %v3381
  %v3406 = vadd.f32 %v3368, %v3381
  %v3407 = vadd.f32 %v3369, %v3381
  %v3408 = vadd.f32 %v3370, %v3381
  %vm3409 = vcmp.lt.s32.totalorder %v779, 640
  %vm3410 = vcmp.lt.s32.totalorder %v780, 640
  %vm3411 = vcmp.lt.s32.totalorder %v781, 640
  %vm3412 = vcmp.lt.s32.totalorder %v782, 640
  %vm3413 = vcmp.lt.s32.totalorder %v783, 640
  %vm3414 = vcmp.lt.s32.totalorder %v784, 640
  %vm3415 = vcmp.lt.s32.totalorder %v785, 640
  %vm3416 = vcmp.lt.s32.totalorder %v786, 640
  %vm3417 = vcmp.lt.s32.totalorder %v787, 640
  %vm3418 = vcmp.lt.s32.totalorder %v788, 640
  %vm3419 = vcmp.lt.s32.totalorder %v789, 640
  %vm3420 = vcmp.lt.s32.totalorder %v790, 640
  %vm3421 = vcmp.lt.s32.totalorder %v791, 640
  %v3422 = vand.u32 %v779, 63
  %v3423 = vand.u32 %v780, 63
  %v3424 = vand.u32 %v781, 63
  %v3425 = vand.u32 %v782, 63
  %v3426 = vand.u32 %v783, 63
  %v3427 = vand.u32 %v784, 63
  %v3428 = vand.u32 %v785, 63
  %v3429 = vand.u32 %v786, 63
  %v3430 = vand.u32 %v787, 63
  %v3431 = vand.u32 %v788, 63
  %v3432 = vand.u32 %v789, 63
  %v3433 = vand.u32 %v790, 63
  %v3434 = vand.u32 %v791, 63
  %vm3435 = vcmp.lt.s32.totalorder %v3422, 20
  %vm3436 = vcmp.lt.s32.totalorder %v3423, 20
  %vm3437 = vcmp.lt.s32.totalorder %v3424, 20
  %vm3438 = vcmp.lt.s32.totalorder %v3425, 20
  %vm3439 = vcmp.lt.s32.totalorder %v3426, 20
  %vm3440 = vcmp.lt.s32.totalorder %v3427, 20
  %vm3441 = vcmp.lt.s32.totalorder %v3428, 20
  %vm3442 = vcmp.lt.s32.totalorder %v3429, 20
  %vm3443 = vcmp.lt.s32.totalorder %v3430, 20
  %vm3444 = vcmp.lt.s32.totalorder %v3431, 20
  %vm3445 = vcmp.lt.s32.totalorder %v3432, 20
  %vm3446 = vcmp.lt.s32.totalorder %v3433, 20
  %vm3447 = vcmp.lt.s32.totalorder %v3434, 20
  %vm3448 = vmand %vm3409, %vm3435
  %vm3449 = vmand %vm3410, %vm3436
  %vm3450 = vmand %vm3411, %vm3437
  %vm3451 = vmand %vm3412, %vm3438
  %vm3452 = vmand %vm3413, %vm3439
  %vm3453 = vmand %vm3414, %vm3440
  %vm3454 = vmand %vm3415, %vm3441
  %vm3455 = vmand %vm3416, %vm3442
  %vm3456 = vmand %vm3417, %vm3443
  %vm3457 = vmand %vm3418, %vm3444
  %vm3458 = vmand %vm3419, %vm3445
  %vm3459 = vmand %vm3420, %vm3446
  %vm3460 = vmand %vm3421, %vm3447
  %v3461 = vand.u32 %v779, 1
  %v3462 = vand.u32 %v780, 1
  %v3463 = vand.u32 %v781, 1
  %v3464 = vand.u32 %v782, 1
  %v3465 = vand.u32 %v783, 1
  %v3466 = vand.u32 %v784, 1
  %v3467 = vand.u32 %v785, 1
  %v3468 = vand.u32 %v786, 1
  %v3469 = vand.u32 %v787, 1
  %v3470 = vand.u32 %v788, 1
  %v3471 = vand.u32 %v789, 1
  %v3472 = vand.u32 %v790, 1
  %v3473 = vand.u32 %v791, 1
  %vm3474 = vcmp.eq.s32.totalorder %v3461, 0
  %vm3475 = vcmp.eq.s32.totalorder %v3462, 0
  %vm3476 = vcmp.eq.s32.totalorder %v3463, 0
  %vm3477 = vcmp.eq.s32.totalorder %v3464, 0
  %vm3478 = vcmp.eq.s32.totalorder %v3465, 0
  %vm3479 = vcmp.eq.s32.totalorder %v3466, 0
  %vm3480 = vcmp.eq.s32.totalorder %v3467, 0
  %vm3481 = vcmp.eq.s32.totalorder %v3468, 0
  %vm3482 = vcmp.eq.s32.totalorder %v3469, 0
  %vm3483 = vcmp.eq.s32.totalorder %v3470, 0
  %vm3484 = vcmp.eq.s32.totalorder %v3471, 0
  %vm3485 = vcmp.eq.s32.totalorder %v3472, 0
  %vm3486 = vcmp.eq.s32.totalorder %v3473, 0
  %vm3487 = vmand %vm3448, %vm3474
  %vm3488 = vmand %vm3449, %vm3475
  %vm3489 = vmand %vm3450, %vm3476
  %vm3490 = vmand %vm3451, %vm3477
  %vm3491 = vmand %vm3452, %vm3478
  %vm3492 = vmand %vm3453, %vm3479
  %vm3493 = vmand %vm3454, %vm3480
  %vm3494 = vmand %vm3455, %vm3481
  %vm3495 = vmand %vm3456, %vm3482
  %vm3496 = vmand %vm3457, %vm3483
  %vm3497 = vmand %vm3458, %vm3484
  %vm3498 = vmand %vm3459, %vm3485
  %vm3499 = vmand %vm3460, %vm3486
  %v3500 = vsel %vm3487, 1, 0
  %v3501 = vsel %vm3488, 1, 0
  %v3502 = vsel %vm3489, 1, 0
  %v3503 = vsel %vm3490, 1, 0
  %v3504 = vsel %vm3491, 1, 0
  %v3505 = vsel %vm3492, 1, 0
  %v3506 = vsel %vm3493, 1, 0
  %v3507 = vsel %vm3494, 1, 0
  %v3508 = vsel %vm3495, 1, 0
  %v3509 = vsel %vm3496, 1, 0
  %v3510 = vsel %vm3497, 1, 0
  %v3511 = vsel %vm3498, 1, 0
  %v3512 = vsel %vm3499, 1, 0
  %vm3513 = vcmp.eq.s32.totalorder %v3500, 1
  %vm3514 = vcmp.eq.s32.totalorder %v3501, 1
  %vm3515 = vcmp.eq.s32.totalorder %v3502, 1
  %vm3516 = vcmp.eq.s32.totalorder %v3503, 1
  %vm3517 = vcmp.eq.s32.totalorder %v3504, 1
  %vm3518 = vcmp.eq.s32.totalorder %v3505, 1
  %vm3519 = vcmp.eq.s32.totalorder %v3506, 1
  %vm3520 = vcmp.eq.s32.totalorder %v3507, 1
  %vm3521 = vcmp.eq.s32.totalorder %v3508, 1
  %vm3522 = vcmp.eq.s32.totalorder %v3509, 1
  %vm3523 = vcmp.eq.s32.totalorder %v3510, 1
  %vm3524 = vcmp.eq.s32.totalorder %v3511, 1
  %vm3525 = vcmp.eq.s32.totalorder %v3512, 1
  %v3526 = vsel %vm3513, %v3383, 0.0
  %v3527 = vsel %vm3514, %v3384, 0.0
  %v3528 = vsel %vm3515, %v3385, 0.0
  %v3529 = vsel %vm3516, %v3386, 0.0
  %v3530 = vsel %vm3517, %v3387, 0.0
  %v3531 = vsel %vm3518, %v3388, 0.0
  %v3532 = vsel %vm3519, %v3389, 0.0
  %v3533 = vsel %vm3520, %v3390, 0.0
  %v3534 = vsel %vm3521, %v3391, 0.0
  %v3535 = vsel %vm3522, %v3392, 0.0
  %v3536 = vsel %vm3523, %v3393, 0.0
  %v3537 = vsel %vm3524, %v3394, 0.0
  %v3538 = vsel %vm3525, %v3395, 0.0
  %v3539 = vsel %vm3513, %v3396, 0.0
  %v3540 = vsel %vm3514, %v3397, 0.0
  %v3541 = vsel %vm3515, %v3398, 0.0
  %v3542 = vsel %vm3516, %v3399, 0.0
  %v3543 = vsel %vm3517, %v3400, 0.0
  %v3544 = vsel %vm3518, %v3401, 0.0
  %v3545 = vsel %vm3519, %v3402, 0.0
  %v3546 = vsel %vm3520, %v3403, 0.0
  %v3547 = vsel %vm3521, %v3404, 0.0
  %v3548 = vsel %vm3522, %v3405, 0.0
  %v3549 = vsel %vm3523, %v3406, 0.0
  %v3550 = vsel %vm3524, %v3407, 0.0
  %v3551 = vsel %vm3525, %v3408, 0.0
  %v3552 = vadd.f32 %v3526, %v3527
  %v3553 = vadd.f32 %v3552, %v3528
  %v3554 = vadd.f32 %v3553, %v3529
  %v3555 = vadd.f32 %v3554, %v3530
  %v3556 = vadd.f32 %v3555, %v3531
  %v3557 = vadd.f32 %v3556, %v3532
  %v3558 = vadd.f32 %v3557, %v3533
  %v3559 = vadd.f32 %v3558, %v3534
  %v3560 = vadd.f32 %v3559, %v3535
  %v3561 = vadd.f32 %v3560, %v3536
  %v3562 = vadd.f32 %v3561, %v3537
  %v3563 = vadd.f32 %v3562, %v3538
  %3564 = vadd.xlane.f32.xlu0 %v3563
  %v3565 = vpop.xlane.xlu0 %3564
  %v3566 = vadd.f32 %v3539, %v3540
  %v3567 = vadd.f32 %v3566, %v3541
  %v3568 = vadd.f32 %v3567, %v3542
  %v3569 = vadd.f32 %v3568, %v3543
  %v3570 = vadd.f32 %v3569, %v3544
  %v3571 = vadd.f32 %v3570, %v3545
  %v3572 = vadd.f32 %v3571, %v3546
  %v3573 = vadd.f32 %v3572, %v3547
  %v3574 = vadd.f32 %v3573, %v3548
  %v3575 = vadd.f32 %v3574, %v3549
  %v3576 = vadd.f32 %v3575, %v3550
  %v3577 = vadd.f32 %v3576, %v3551
  %3578 = vadd.xlane.f32.xlu0 %v3577
  %v3579 = vpop.xlane.xlu0 %3578
  %v3580 = vmul.f32 %v3565, 0.005
  %v3581 = vmul.f32 %v3579, 0.005
  %v3582 = vsub.f32 %v3383, %v3580
  %v3583 = vsub.f32 %v3384, %v3580
  %v3584 = vsub.f32 %v3385, %v3580
  %v3585 = vsub.f32 %v3386, %v3580
  %v3586 = vsub.f32 %v3387, %v3580
  %v3587 = vsub.f32 %v3388, %v3580
  %v3588 = vsub.f32 %v3389, %v3580
  %v3589 = vsub.f32 %v3390, %v3580
  %v3590 = vsub.f32 %v3391, %v3580
  %v3591 = vsub.f32 %v3392, %v3580
  %v3592 = vsub.f32 %v3393, %v3580
  %v3593 = vsub.f32 %v3394, %v3580
  %v3594 = vsub.f32 %v3395, %v3580
  %v3595 = vsub.f32 %v3396, %v3581
  %v3596 = vsub.f32 %v3397, %v3581
  %v3597 = vsub.f32 %v3398, %v3581
  %v3598 = vsub.f32 %v3399, %v3581
  %v3599 = vsub.f32 %v3400, %v3581
  %v3600 = vsub.f32 %v3401, %v3581
  %v3601 = vsub.f32 %v3402, %v3581
  %v3602 = vsub.f32 %v3403, %v3581
  %v3603 = vsub.f32 %v3404, %v3581
  %v3604 = vsub.f32 %v3405, %v3581
  %v3605 = vsub.f32 %v3406, %v3581
  %v3606 = vsub.f32 %v3407, %v3581
  %v3607 = vsub.f32 %v3408, %v3581
  %v3608 = vmul.f32 %v3582, %v3582
  %v3609 = vmul.f32 %v3583, %v3583
  %v3610 = vmul.f32 %v3584, %v3584
  %v3611 = vmul.f32 %v3585, %v3585
  %v3612 = vmul.f32 %v3586, %v3586
  %v3613 = vmul.f32 %v3587, %v3587
  %v3614 = vmul.f32 %v3588, %v3588
  %v3615 = vmul.f32 %v3589, %v3589
  %v3616 = vmul.f32 %v3590, %v3590
  %v3617 = vmul.f32 %v3591, %v3591
  %v3618 = vmul.f32 %v3592, %v3592
  %v3619 = vmul.f32 %v3593, %v3593
  %v3620 = vmul.f32 %v3594, %v3594
  %v3621 = vmul.f32 %v3595, %v3595
  %v3622 = vmul.f32 %v3596, %v3596
  %v3623 = vmul.f32 %v3597, %v3597
  %v3624 = vmul.f32 %v3598, %v3598
  %v3625 = vmul.f32 %v3599, %v3599
  %v3626 = vmul.f32 %v3600, %v3600
  %v3627 = vmul.f32 %v3601, %v3601
  %v3628 = vmul.f32 %v3602, %v3602
  %v3629 = vmul.f32 %v3603, %v3603
  %v3630 = vmul.f32 %v3604, %v3604
  %v3631 = vmul.f32 %v3605, %v3605
  %v3632 = vmul.f32 %v3606, %v3606
  %v3633 = vmul.f32 %v3607, %v3607
  %v3634 = vsel %vm3513, %v3608, 0.0
  %v3635 = vsel %vm3514, %v3609, 0.0
  %v3636 = vsel %vm3515, %v3610, 0.0
  %v3637 = vsel %vm3516, %v3611, 0.0
  %v3638 = vsel %vm3517, %v3612, 0.0
  %v3639 = vsel %vm3518, %v3613, 0.0
  %v3640 = vsel %vm3519, %v3614, 0.0
  %v3641 = vsel %vm3520, %v3615, 0.0
  %v3642 = vsel %vm3521, %v3616, 0.0
  %v3643 = vsel %vm3522, %v3617, 0.0
  %v3644 = vsel %vm3523, %v3618, 0.0
  %v3645 = vsel %vm3524, %v3619, 0.0
  %v3646 = vsel %vm3525, %v3620, 0.0
  %v3647 = vsel %vm3513, %v3621, 0.0
  %v3648 = vsel %vm3514, %v3622, 0.0
  %v3649 = vsel %vm3515, %v3623, 0.0
  %v3650 = vsel %vm3516, %v3624, 0.0
  %v3651 = vsel %vm3517, %v3625, 0.0
  %v3652 = vsel %vm3518, %v3626, 0.0
  %v3653 = vsel %vm3519, %v3627, 0.0
  %v3654 = vsel %vm3520, %v3628, 0.0
  %v3655 = vsel %vm3521, %v3629, 0.0
  %v3656 = vsel %vm3522, %v3630, 0.0
  %v3657 = vsel %vm3523, %v3631, 0.0
  %v3658 = vsel %vm3524, %v3632, 0.0
  %v3659 = vsel %vm3525, %v3633, 0.0
  %v3660 = vadd.f32 %v3634, %v3635
  %v3661 = vadd.f32 %v3660, %v3636
  %v3662 = vadd.f32 %v3661, %v3637
  %v3663 = vadd.f32 %v3662, %v3638
  %v3664 = vadd.f32 %v3663, %v3639
  %v3665 = vadd.f32 %v3664, %v3640
  %v3666 = vadd.f32 %v3665, %v3641
  %v3667 = vadd.f32 %v3666, %v3642
  %v3668 = vadd.f32 %v3667, %v3643
  %v3669 = vadd.f32 %v3668, %v3644
  %v3670 = vadd.f32 %v3669, %v3645
  %v3671 = vadd.f32 %v3670, %v3646
  %3672 = vadd.xlane.f32.xlu0 %v3671
  %v3673 = vpop.xlane.xlu0 %3672
  %v3674 = vadd.f32 %v3647, %v3648
  %v3675 = vadd.f32 %v3674, %v3649
  %v3676 = vadd.f32 %v3675, %v3650
  %v3677 = vadd.f32 %v3676, %v3651
  %v3678 = vadd.f32 %v3677, %v3652
  %v3679 = vadd.f32 %v3678, %v3653
  %v3680 = vadd.f32 %v3679, %v3654
  %v3681 = vadd.f32 %v3680, %v3655
  %v3682 = vadd.f32 %v3681, %v3656
  %v3683 = vadd.f32 %v3682, %v3657
  %v3684 = vadd.f32 %v3683, %v3658
  %v3685 = vadd.f32 %v3684, %v3659
  %3686 = vadd.xlane.f32.xlu0 %v3685
  %v3687 = vpop.xlane.xlu0 %3686
  %v3688 = vmul.f32 %v3673, 0.005
  %v3689 = vmul.f32 %v3687, 0.005
  %v3690 = vadd.f32 %v3688, 1e-05
  %v3691 = vadd.f32 %v3689, 1e-05
  %v3692 = vrsqrt.pop %v3690
  %v3693 = vmul.f32 %v3692, %v3690
  %v3694 = vmul.f32 %v3693, %v3692
  %v3695 = vmul.f32 0.5, %v3694
  %v3696 = vsub.f32 1.5, %v3695
  %v3697 = vmul.f32 %v3692, %v3696
  %vm3698 = vweird.f32 %v3690
  %vm3699 = vweird.f32 %v3692
  %vm3700 = vmor %vm3698, %vm3699
  %v3701 = vsel %vm3700, %v3692, %v3697
  %v3702 = vrsqrt.pop %v3691
  %v3703 = vmul.f32 %v3702, %v3691
  %v3704 = vmul.f32 %v3703, %v3702
  %v3705 = vmul.f32 0.5, %v3704
  %v3706 = vsub.f32 1.5, %v3705
  %v3707 = vmul.f32 %v3702, %v3706
  %vm3708 = vweird.f32 %v3691
  %vm3709 = vweird.f32 %v3702
  %vm3710 = vmor %vm3708, %vm3709
  %v3711 = vsel %vm3710, %v3702, %v3707
  %v3712 = vmul.f32 %v3371, %v3701
  %v3713 = vmul.f32 %v3372, %v3711
  %3715 = vset.pattern.permute.xlu0 4
  %3716 = vperm.xlu0 %3715, %v3712
  %v3717 = vpop.permute.xlu0 %3716
  %3720 = vset.pattern.permute.xlu0 4
  %3721 = vperm.xlu0 %3720, %v3713
  %v3722 = vpop.permute.xlu0 %3721
  %v3724 = vmul.f32 %v3582, %v3717
  %v3725 = vmul.f32 %v3583, %v3717
  %v3726 = vmul.f32 %v3584, %v3717
  %v3727 = vmul.f32 %v3585, %v3717
  %v3728 = vmul.f32 %v3586, %v3717
  %v3729 = vmul.f32 %v3587, %v3717
  %v3730 = vmul.f32 %v3588, %v3717
  %v3731 = vmul.f32 %v3589, %v3717
  %v3732 = vmul.f32 %v3590, %v3717
  %v3733 = vmul.f32 %v3591, %v3717
  %v3734 = vmul.f32 %v3592, %v3717
  %v3735 = vmul.f32 %v3593, %v3717
  %v3736 = vmul.f32 %v3594, %v3717
  %v3737 = vmul.f32 %v3595, %v3722
  %v3738 = vmul.f32 %v3596, %v3722
  %v3739 = vmul.f32 %v3597, %v3722
  %v3740 = vmul.f32 %v3598, %v3722
  %v3741 = vmul.f32 %v3599, %v3722
  %v3742 = vmul.f32 %v3600, %v3722
  %v3743 = vmul.f32 %v3601, %v3722
  %v3744 = vmul.f32 %v3602, %v3722
  %v3745 = vmul.f32 %v3603, %v3722
  %v3746 = vmul.f32 %v3604, %v3722
  %v3747 = vmul.f32 %v3605, %v3722
  %v3748 = vmul.f32 %v3606, %v3722
  %v3749 = vmul.f32 %v3607, %v3722
  %3750 = vset.pattern.permute.xlu0 5
  %3751 = vperm.xlu0 %3750, %v3371
  %v3752 = vpop.permute.xlu0 %3751
  %3754 = vset.pattern.permute.xlu0 5
  %3755 = vperm.xlu0 %3754, %v3372
  %v3756 = vpop.permute.xlu0 %3755
  %v3758 = vadd.f32 %v3724, %v3752
  %v3759 = vadd.f32 %v3725, %v3752
  %v3760 = vadd.f32 %v3726, %v3752
  %v3761 = vadd.f32 %v3727, %v3752
  %v3762 = vadd.f32 %v3728, %v3752
  %v3763 = vadd.f32 %v3729, %v3752
  %v3764 = vadd.f32 %v3730, %v3752
  %v3765 = vadd.f32 %v3731, %v3752
  %v3766 = vadd.f32 %v3732, %v3752
  %v3767 = vadd.f32 %v3733, %v3752
  %v3768 = vadd.f32 %v3734, %v3752
  %v3769 = vadd.f32 %v3735, %v3752
  %v3770 = vadd.f32 %v3736, %v3752
  %v3771 = vadd.f32 %v3737, %v3756
  %v3772 = vadd.f32 %v3738, %v3756
  %v3773 = vadd.f32 %v3739, %v3756
  %v3774 = vadd.f32 %v3740, %v3756
  %v3775 = vadd.f32 %v3741, %v3756
  %v3776 = vadd.f32 %v3742, %v3756
  %v3777 = vadd.f32 %v3743, %v3756
  %v3778 = vadd.f32 %v3744, %v3756
  %v3779 = vadd.f32 %v3745, %v3756
  %v3780 = vadd.f32 %v3746, %v3756
  %v3781 = vadd.f32 %v3747, %v3756
  %v3782 = vadd.f32 %v3748, %v3756
  %v3783 = vadd.f32 %v3749, %v3756
  %3810 = vrot.lane.b32.xlu0 %v3758, 126
  %v3811 = vpop.permute.xlu0 %3810
  %3812 = vrot.lane.b32.xlu0 %v3759, 126
  %v3813 = vpop.permute.xlu0 %3812
  %3814 = vrot.lane.b32.xlu0 %v3760, 126
  %v3815 = vpop.permute.xlu0 %3814
  %3816 = vrot.lane.b32.xlu0 %v3761, 126
  %v3817 = vpop.permute.xlu0 %3816
  %3818 = vrot.lane.b32.xlu0 %v3762, 126
  %v3819 = vpop.permute.xlu0 %3818
  %3820 = vrot.lane.b32.xlu0 %v3763, 126
  %v3821 = vpop.permute.xlu0 %3820
  %3822 = vrot.lane.b32.xlu0 %v3764, 126
  %v3823 = vpop.permute.xlu0 %3822
  %3824 = vrot.lane.b32.xlu0 %v3765, 126
  %v3825 = vpop.permute.xlu0 %3824
  %3826 = vrot.lane.b32.xlu0 %v3766, 126
  %v3827 = vpop.permute.xlu0 %3826
  %3828 = vrot.lane.b32.xlu0 %v3767, 126
  %v3829 = vpop.permute.xlu0 %3828
  %3830 = vrot.lane.b32.xlu0 %v3768, 126
  %v3831 = vpop.permute.xlu0 %3830
  %3832 = vrot.lane.b32.xlu0 %v3769, 126
  %v3833 = vpop.permute.xlu0 %3832
  %3834 = vrot.lane.b32.xlu0 %v3770, 126
  %v3835 = vpop.permute.xlu0 %3834
  %3836 = vrot.lane.b32.xlu0 %v3771, 126
  %v3837 = vpop.permute.xlu0 %3836
  %3838 = vrot.lane.b32.xlu0 %v3772, 126
  %v3839 = vpop.permute.xlu0 %3838
  %3840 = vrot.lane.b32.xlu0 %v3773, 126
  %v3841 = vpop.permute.xlu0 %3840
  %3842 = vrot.lane.b32.xlu0 %v3774, 126
  %v3843 = vpop.permute.xlu0 %3842
  %3844 = vrot.lane.b32.xlu0 %v3775, 126
  %v3845 = vpop.permute.xlu0 %3844
  %3846 = vrot.lane.b32.xlu0 %v3776, 126
  %v3847 = vpop.permute.xlu0 %3846
  %3848 = vrot.lane.b32.xlu0 %v3777, 126
  %v3849 = vpop.permute.xlu0 %3848
  %3850 = vrot.lane.b32.xlu0 %v3778, 126
  %v3851 = vpop.permute.xlu0 %3850
  %3852 = vrot.lane.b32.xlu0 %v3779, 126
  %v3853 = vpop.permute.xlu0 %3852
  %3854 = vrot.lane.b32.xlu0 %v3780, 126
  %v3855 = vpop.permute.xlu0 %3854
  %3856 = vrot.lane.b32.xlu0 %v3781, 126
  %v3857 = vpop.permute.xlu0 %3856
  %3858 = vrot.lane.b32.xlu0 %v3782, 126
  %v3859 = vpop.permute.xlu0 %3858
  %3860 = vrot.lane.b32.xlu0 %v3783, 126
  %v3861 = vpop.permute.xlu0 %3860
  %vm3862 = vcmask 1031168
  %v3863 = vsel %vm3862, %v3811, %v3813
  %v3864 = vsel %vm3862, %v3813, %v3815
  %v3865 = vsel %vm3862, %v3815, %v3817
  %v3866 = vsel %vm3862, %v3817, %v3819
  %v3867 = vsel %vm3862, %v3819, %v3821
  %v3868 = vsel %vm3862, %v3821, %v3823
  %v3869 = vsel %vm3862, %v3823, %v3825
  %v3870 = vsel %vm3862, %v3825, %v3827
  %v3871 = vsel %vm3862, %v3827, %v3829
  %v3872 = vsel %vm3862, %v3829, %v3831
  %v3873 = vsel %vm3862, %v3831, %v3833
  %v3874 = vsel %vm3862, %v3833, %v3835
  %v3875 = vsel %vm3862, %v3837, %v3839
  %v3876 = vsel %vm3862, %v3839, %v3841
  %v3877 = vsel %vm3862, %v3841, %v3843
  %v3878 = vsel %vm3862, %v3843, %v3845
  %v3879 = vsel %vm3862, %v3845, %v3847
  %v3880 = vsel %vm3862, %v3847, %v3849
  %v3881 = vsel %vm3862, %v3849, %v3851
  %v3882 = vsel %vm3862, %v3851, %v3853
  %v3883 = vsel %vm3862, %v3853, %v3855
  %v3884 = vsel %vm3862, %v3855, %v3857
  %v3885 = vsel %vm3862, %v3857, %v3859
  %v3886 = vsel %vm3862, %v3859, %v3861
  %v3913 = vmax.f32 %v3758, %v3863
  %v3914 = vmax.f32 %v3759, %v3864
  %v3915 = vmax.f32 %v3760, %v3865
  %v3916 = vmax.f32 %v3761, %v3866
  %v3917 = vmax.f32 %v3762, %v3867
  %v3918 = vmax.f32 %v3763, %v3868
  %v3919 = vmax.f32 %v3764, %v3869
  %v3920 = vmax.f32 %v3765, %v3870
  %v3921 = vmax.f32 %v3766, %v3871
  %v3922 = vmax.f32 %v3767, %v3872
  %v3923 = vmax.f32 %v3768, %v3873
  %v3924 = vmax.f32 %v3769, %v3874
  %v3925 = vmax.f32 %v3770, %v3835
  %v3926 = vmax.f32 %v3771, %v3875
  %v3927 = vmax.f32 %v3772, %v3876
  %v3928 = vmax.f32 %v3773, %v3877
  %v3929 = vmax.f32 %v3774, %v3878
  %v3930 = vmax.f32 %v3775, %v3879
  %v3931 = vmax.f32 %v3776, %v3880
  %v3932 = vmax.f32 %v3777, %v3881
  %v3933 = vmax.f32 %v3778, %v3882
  %v3934 = vmax.f32 %v3779, %v3883
  %v3935 = vmax.f32 %v3780, %v3884
  %v3936 = vmax.f32 %v3781, %v3885
  %v3937 = vmax.f32 %v3782, %v3886
  %v3938 = vmax.f32 %v3783, %v3861
  %3965 = vrot.lane.b32.xlu0 %v3913, 64
  %v3966 = vpop.permute.xlu0 %3965
  %3967 = vrot.lane.b32.xlu0 %v3914, 64
  %v3968 = vpop.permute.xlu0 %3967
  %3969 = vrot.lane.b32.xlu0 %v3915, 64
  %v3970 = vpop.permute.xlu0 %3969
  %3971 = vrot.lane.b32.xlu0 %v3916, 64
  %v3972 = vpop.permute.xlu0 %3971
  %3973 = vrot.lane.b32.xlu0 %v3917, 64
  %v3974 = vpop.permute.xlu0 %3973
  %3975 = vrot.lane.b32.xlu0 %v3918, 64
  %v3976 = vpop.permute.xlu0 %3975
  %3977 = vrot.lane.b32.xlu0 %v3919, 64
  %v3978 = vpop.permute.xlu0 %3977
  %3979 = vrot.lane.b32.xlu0 %v3920, 64
  %v3980 = vpop.permute.xlu0 %3979
  %3981 = vrot.lane.b32.xlu0 %v3921, 64
  %v3982 = vpop.permute.xlu0 %3981
  %3983 = vrot.lane.b32.xlu0 %v3922, 64
  %v3984 = vpop.permute.xlu0 %3983
  %3985 = vrot.lane.b32.xlu0 %v3923, 64
  %v3986 = vpop.permute.xlu0 %3985
  %3987 = vrot.lane.b32.xlu0 %v3924, 64
  %v3988 = vpop.permute.xlu0 %3987
  %3989 = vrot.lane.b32.xlu0 %v3925, 64
  %v3990 = vpop.permute.xlu0 %3989
  %3991 = vrot.lane.b32.xlu0 %v3926, 64
  %v3992 = vpop.permute.xlu0 %3991
  %3993 = vrot.lane.b32.xlu0 %v3927, 64
  %v3994 = vpop.permute.xlu0 %3993
  %3995 = vrot.lane.b32.xlu0 %v3928, 64
  %v3996 = vpop.permute.xlu0 %3995
  %3997 = vrot.lane.b32.xlu0 %v3929, 64
  %v3998 = vpop.permute.xlu0 %3997
  %3999 = vrot.lane.b32.xlu0 %v3930, 64
  %v4000 = vpop.permute.xlu0 %3999
  %4001 = vrot.lane.b32.xlu0 %v3931, 64
  %v4002 = vpop.permute.xlu0 %4001
  %4003 = vrot.lane.b32.xlu0 %v3932, 64
  %v4004 = vpop.permute.xlu0 %4003
  %4005 = vrot.lane.b32.xlu0 %v3933, 64
  %v4006 = vpop.permute.xlu0 %4005
  %4007 = vrot.lane.b32.xlu0 %v3934, 64
  %v4008 = vpop.permute.xlu0 %4007
  %4009 = vrot.lane.b32.xlu0 %v3935, 64
  %v4010 = vpop.permute.xlu0 %4009
  %4011 = vrot.lane.b32.xlu0 %v3936, 64
  %v4012 = vpop.permute.xlu0 %4011
  %4013 = vrot.lane.b32.xlu0 %v3937, 64
  %v4014 = vpop.permute.xlu0 %4013
  %4015 = vrot.lane.b32.xlu0 %v3938, 64
  %v4016 = vpop.permute.xlu0 %4015
  %vm4017 = vcmask 523264
  %v4018 = vsel %vm4017, %v3966, %v3968
  %v4019 = vsel %vm4017, %v3968, %v3970
  %v4020 = vsel %vm4017, %v3970, %v3972
  %v4021 = vsel %vm4017, %v3972, %v3974
  %v4022 = vsel %vm4017, %v3974, %v3976
  %v4023 = vsel %vm4017, %v3976, %v3978
  %v4024 = vsel %vm4017, %v3978, %v3980
  %v4025 = vsel %vm4017, %v3980, %v3982
  %v4026 = vsel %vm4017, %v3982, %v3984
  %v4027 = vsel %vm4017, %v3984, %v3986
  %v4028 = vsel %vm4017, %v3986, %v3988
  %v4029 = vsel %vm4017, %v3988, %v3990
  %v4030 = vsel %vm4017, %v3992, %v3994
  %v4031 = vsel %vm4017, %v3994, %v3996
  %v4032 = vsel %vm4017, %v3996, %v3998
  %v4033 = vsel %vm4017, %v3998, %v4000
  %v4034 = vsel %vm4017, %v4000, %v4002
  %v4035 = vsel %vm4017, %v4002, %v4004
  %v4036 = vsel %vm4017, %v4004, %v4006
  %v4037 = vsel %vm4017, %v4006, %v4008
  %v4038 = vsel %vm4017, %v4008, %v4010
  %v4039 = vsel %vm4017, %v4010, %v4012
  %v4040 = vsel %vm4017, %v4012, %v4014
  %v4041 = vsel %vm4017, %v4014, %v4016
  %v4068 = vmax.f32 %v3913, %v4018
  %v4069 = vmax.f32 %v3914, %v4019
  %v4070 = vmax.f32 %v3915, %v4020
  %v4071 = vmax.f32 %v3916, %v4021
  %v4072 = vmax.f32 %v3917, %v4022
  %v4073 = vmax.f32 %v3918, %v4023
  %v4074 = vmax.f32 %v3919, %v4024
  %v4075 = vmax.f32 %v3920, %v4025
  %v4076 = vmax.f32 %v3921, %v4026
  %v4077 = vmax.f32 %v3922, %v4027
  %v4078 = vmax.f32 %v3923, %v4028
  %v4079 = vmax.f32 %v3924, %v4029
  %v4080 = vmax.f32 %v3925, %v3990
  %v4081 = vmax.f32 %v3926, %v4030
  %v4082 = vmax.f32 %v3927, %v4031
  %v4083 = vmax.f32 %v3928, %v4032
  %v4084 = vmax.f32 %v3929, %v4033
  %v4085 = vmax.f32 %v3930, %v4034
  %v4086 = vmax.f32 %v3931, %v4035
  %v4087 = vmax.f32 %v3932, %v4036
  %v4088 = vmax.f32 %v3933, %v4037
  %v4089 = vmax.f32 %v3934, %v4038
  %v4090 = vmax.f32 %v3935, %v4039
  %v4091 = vmax.f32 %v3936, %v4040
  %v4092 = vmax.f32 %v3937, %v4041
  %v4093 = vmax.f32 %v3938, %v4016
  %v4094 = vmax.f32 %v4068, 0.0
  %v4095 = vmax.f32 %v4069, 0.0
  %v4096 = vmax.f32 %v4070, 0.0
  %v4097 = vmax.f32 %v4071, 0.0
  %v4098 = vmax.f32 %v4072, 0.0
  %v4099 = vmax.f32 %v4073, 0.0
  %v4100 = vmax.f32 %v4074, 0.0
  %v4101 = vmax.f32 %v4075, 0.0
  %v4102 = vmax.f32 %v4076, 0.0
  %v4103 = vmax.f32 %v4077, 0.0
  %v4104 = vmax.f32 %v4078, 0.0
  %v4105 = vmax.f32 %v4079, 0.0
  %v4106 = vmax.f32 %v4080, 0.0
  %v4107 = vmax.f32 %v4081, 0.0
  %v4108 = vmax.f32 %v4082, 0.0
  %v4109 = vmax.f32 %v4083, 0.0
  %v4110 = vmax.f32 %v4084, 0.0
  %v4111 = vmax.f32 %v4085, 0.0
  %v4112 = vmax.f32 %v4086, 0.0
  %v4113 = vmax.f32 %v4087, 0.0
  %v4114 = vmax.f32 %v4088, 0.0
  %v4115 = vmax.f32 %v4089, 0.0
  %v4116 = vmax.f32 %v4090, 0.0
  %v4117 = vmax.f32 %v4091, 0.0
  %v4118 = vmax.f32 %v4092, 0.0
  %v4119 = vmax.f32 %v4093, 0.0
  %4120 = vst [vmem:[#allocation3] sm:$0xff] %v4094
  %4121 = vst [vmem:[#allocation3 + $0x8] sm:$0xff] %v4095
  %4122 = vst [vmem:[#allocation3 + $0x10] sm:$0xff] %v4096
  %4123 = vst [vmem:[#allocation3 + $0x18] sm:$0xff] %v4097
  %4124 = vst [vmem:[#allocation3 + $0x20] sm:$0xff] %v4098
  %4125 = vst [vmem:[#allocation3 + $0x28] sm:$0xff] %v4099
  %4126 = vst [vmem:[#allocation3 + $0x30] sm:$0xff] %v4100
  %4127 = vst [vmem:[#allocation3 + $0x38] sm:$0xff] %v4101
  %4128 = vst [vmem:[#allocation3 + $0x40] sm:$0xff] %v4102
  %4129 = vst [vmem:[#allocation3 + $0x48] sm:$0xff] %v4103
  %4130 = vst [vmem:[#allocation3 + $0x50] sm:$0xff] %v4104
  %4131 = vst [vmem:[#allocation3 + $0x58] sm:$0xff] %v4105
  %vm4132 = vcmask 506880
  %4133 = vst.msk [vmem:[#allocation3 + $0x60] sm:$0xff] %vm4132, %v4106
  %4134 = vst [vmem:[#allocation3 + $0x68] sm:$0xff] %v4107
  %4135 = vst [vmem:[#allocation3 + $0x70] sm:$0xff] %v4108
  %4136 = vst [vmem:[#allocation3 + $0x78] sm:$0xff] %v4109
  %4137 = vst [vmem:[#allocation3 + $0x80] sm:$0xff] %v4110
  %4138 = vst [vmem:[#allocation3 + $0x88] sm:$0xff] %v4111
  %4139 = vst [vmem:[#allocation3 + $0x90] sm:$0xff] %v4112
  %4140 = vst [vmem:[#allocation3 + $0x98] sm:$0xff] %v4113
  %4141 = vst [vmem:[#allocation3 + $0xa0] sm:$0xff] %v4114
  %4142 = vst [vmem:[#allocation3 + $0xa8] sm:$0xff] %v4115
  %4143 = vst [vmem:[#allocation3 + $0xb0] sm:$0xff] %v4116
  %4144 = vst [vmem:[#allocation3 + $0xb8] sm:$0xff] %v4117
  %4145 = vst [vmem:[#allocation3 + $0xc0] sm:$0xff] %v4118
  %4146 = vst.msk [vmem:[#allocation3 + $0xc8] sm:$0xff] %vm4132, %v4119
  %v4147 = vld [vmem:[#allocation3] sm:$0xff]
  %v4148 = vld [vmem:[#allocation3 + $0x68] sm:$0xff]
  %vm4149 = vcmask 7168
  %4150 = vst.msk [vmem:[#allocation4] sm:$0xff] %vm4149, %v4147
  %4151 = vst.msk [vmem:[#allocation4 + $0x8] sm:$0xff] %vm4149, %v4148
  %v4152 = vld [vmem:[#allocation3 + $0x40] sm:$0xff]
  %v4153 = vld [vmem:[#allocation3 + $0xa8] sm:$0xff]
  %4156 = vrot.lane.b32.xlu0 %v4152, 1
  %v4157 = vpop.permute.xlu0 %4156
  %4158 = vrot.lane.b32.xlu0 %v4153, 1
  %v4159 = vpop.permute.xlu0 %4158
  %vm4162 = vcmask 15368
  %4163 = vst.msk [vmem:[#allocation4] sm:$0xff] %vm4162, %v4157
  %4164 = vst.msk [vmem:[#allocation4 + $0x8] sm:$0xff] %vm4162, %v4159
  %v4165 = vld [vmem:[#allocation3] sm:$0xff]
  %v4166 = vld [vmem:[#allocation3 + $0x68] sm:$0xff]
  %4169 = vrot.lane.b32.xlu0 %v4165, 124
  %v4170 = vpop.permute.xlu0 %4169
  %4171 = vrot.lane.b32.xlu0 %v4166, 124
  %v4172 = vpop.permute.xlu0 %4171
  %4175 = vst.msk [vmem:[#allocation4 + $0x10] sm:$0xff] %vm4149, %v4170
  %4176 = vst.msk [vmem:[#allocation4 + $0x18] sm:$0xff] %vm4149, %v4172
  %v4177 = vld [vmem:[#allocation3 + $0x40] sm:$0xff]
  %v4178 = vld [vmem:[#allocation3 + $0xa8] sm:$0xff]
  %4181 = vrot.lane.b32.xlu0 %v4177, 125
  %v4182 = vpop.permute.xlu0 %4181
  %4183 = vrot.lane.b32.xlu0 %v4178, 125
  %v4184 = vpop.permute.xlu0 %4183
  %4187 = vst.msk [vmem:[#allocation4 + $0x10] sm:$0xff] %vm4162, %v4182
  %4188 = vst.msk [vmem:[#allocation4 + $0x18] sm:$0xff] %vm4162, %v4184
  %v4189 = vld [vmem:[#allocation3] sm:$0xff]
  %v4190 = vld [vmem:[#allocation3 + $0x68] sm:$0xff]
  %4193 = vrot.lane.b32.xlu0 %v4189, 120
  %v4194 = vpop.permute.xlu0 %4193
  %4195 = vrot.lane.b32.xlu0 %v4190, 120
  %v4196 = vpop.permute.xlu0 %4195
  %4199 = vst.msk [vmem:[#allocation4 + $0x20] sm:$0xff] %vm4149, %v4194
  %4200 = vst.msk [vmem:[#allocation4 + $0x28] sm:$0xff] %vm4149, %v4196
  %v4201 = vld [vmem:[#allocation3 + $0x40] sm:$0xff]
  %v4202 = vld [vmem:[#allocation3 + $0xa8] sm:$0xff]
  %4205 = vrot.lane.b32.xlu0 %v4201, 121
  %v4206 = vpop.permute.xlu0 %4205
  %4207 = vrot.lane.b32.xlu0 %v4202, 121
  %v4208 = vpop.permute.xlu0 %4207
  %4211 = vst.msk [vmem:[#allocation4 + $0x20] sm:$0xff] %vm4162, %v4206
  %4212 = vst.msk [vmem:[#allocation4 + $0x28] sm:$0xff] %vm4162, %v4208
  %v4213 = vld [vmem:[#allocation3] sm:$0xff]
  %v4214 = vld [vmem:[#allocation3 + $0x68] sm:$0xff]
  %4217 = vrot.lane.b32.xlu0 %v4213, 116
  %v4218 = vpop.permute.xlu0 %4217
  %4219 = vrot.lane.b32.xlu0 %v4214, 116
  %v4220 = vpop.permute.xlu0 %4219
  %4223 = vst.msk [vmem:[#allocation4 + $0x30] sm:$0xff] %vm4149, %v4218
  %4224 = vst.msk [vmem:[#allocation4 + $0x38] sm:$0xff] %vm4149, %v4220
  %v4225 = vld [vmem:[#allocation3 + $0x40] sm:$0xff]
  %v4226 = vld [vmem:[#allocation3 + $0xa8] sm:$0xff]
  %4229 = vrot.lane.b32.xlu0 %v4225, 117
  %v4230 = vpop.permute.xlu0 %4229
  %4231 = vrot.lane.b32.xlu0 %v4226, 117
  %v4232 = vpop.permute.xlu0 %4231
  %4235 = vst.msk [vmem:[#allocation4 + $0x30] sm:$0xff] %vm4162, %v4230
  %4236 = vst.msk [vmem:[#allocation4 + $0x38] sm:$0xff] %vm4162, %v4232
  %v4237 = vld [vmem:[#allocation3] sm:$0xff]
  %v4238 = vld [vmem:[#allocation3 + $0x68] sm:$0xff]
  %4241 = vrot.lane.b32.xlu0 %v4237, 112
  %v4242 = vpop.permute.xlu0 %4241
  %4243 = vrot.lane.b32.xlu0 %v4238, 112
  %v4244 = vpop.permute.xlu0 %4243
  %4247 = vst.msk [vmem:[#allocation4 + $0x40] sm:$0xff] %vm4149, %v4242
  %4248 = vst.msk [vmem:[#allocation4 + $0x48] sm:$0xff] %vm4149, %v4244
  %v4249 = vld [vmem:[#allocation3 + $0x40] sm:$0xff]
  %v4250 = vld [vmem:[#allocation3 + $0xa8] sm:$0xff]
  %4253 = vrot.lane.b32.xlu0 %v4249, 113
  %v4254 = vpop.permute.xlu0 %4253
  %4255 = vrot.lane.b32.xlu0 %v4250, 113
  %v4256 = vpop.permute.xlu0 %4255
  %4259 = vst.msk [vmem:[#allocation4 + $0x40] sm:$0xff] %vm4162, %v4254
  %4260 = vst.msk [vmem:[#allocation4 + $0x48] sm:$0xff] %vm4162, %v4256
  %v4261 = vld [vmem:[#allocation3 + $0x8] sm:$0xff]
  %v4262 = vld [vmem:[#allocation3 + $0x70] sm:$0xff]
  %4263 = vst.msk [vmem:[#allocation4 + $0x50] sm:$0xff] %vm4149, %v4261
  %4264 = vst.msk [vmem:[#allocation4 + $0x58] sm:$0xff] %vm4149, %v4262
  %v4265 = vld [vmem:[#allocation3 + $0x48] sm:$0xff]
  %v4266 = vld [vmem:[#allocation3 + $0xb0] sm:$0xff]
  %4269 = vrot.lane.b32.xlu0 %v4265, 1
  %v4270 = vpop.permute.xlu0 %4269
  %4271 = vrot.lane.b32.xlu0 %v4266, 1
  %v4272 = vpop.permute.xlu0 %4271
  %4275 = vst.msk [vmem:[#allocation4 + $0x50] sm:$0xff] %vm4162, %v4270
  %4276 = vst.msk [vmem:[#allocation4 + $0x58] sm:$0xff] %vm4162, %v4272
  %v4277 = vld [vmem:[#allocation3 + $0x8] sm:$0xff]
  %v4278 = vld [vmem:[#allocation3 + $0x70] sm:$0xff]
  %4281 = vrot.lane.b32.xlu0 %v4277, 124
  %v4282 = vpop.permute.xlu0 %4281
  %4283 = vrot.lane.b32.xlu0 %v4278, 124
  %v4284 = vpop.permute.xlu0 %4283
  %4287 = vst.msk [vmem:[#allocation4 + $0x60] sm:$0xff] %vm4149, %v4282
  %4288 = vst.msk [vmem:[#allocation4 + $0x68] sm:$0xff] %vm4149, %v4284
  %v4289 = vld [vmem:[#allocation3 + $0x48] sm:$0xff]
  %v4290 = vld [vmem:[#allocation3 + $0xb0] sm:$0xff]
  %4293 = vrot.lane.b32.xlu0 %v4289, 125
  %v4294 = vpop.permute.xlu0 %4293
  %4295 = vrot.lane.b32.xlu0 %v4290, 125
  %v4296 = vpop.permute.xlu0 %4295
  %4299 = vst.msk [vmem:[#allocation4 + $0x60] sm:$0xff] %vm4162, %v4294
  %4300 = vst.msk [vmem:[#allocation4 + $0x68] sm:$0xff] %vm4162, %v4296
  %v4301 = vld [vmem:[#allocation3 + $0x8] sm:$0xff]
  %v4302 = vld [vmem:[#allocation3 + $0x70] sm:$0xff]
  %4305 = vrot.lane.b32.xlu0 %v4301, 120
  %v4306 = vpop.permute.xlu0 %4305
  %4307 = vrot.lane.b32.xlu0 %v4302, 120
  %v4308 = vpop.permute.xlu0 %4307
  %4311 = vst.msk [vmem:[#allocation4 + $0x70] sm:$0xff] %vm4149, %v4306
  %4312 = vst.msk [vmem:[#allocation4 + $0x78] sm:$0xff] %vm4149, %v4308
  %v4313 = vld [vmem:[#allocation3 + $0x48] sm:$0xff]
  %v4314 = vld [vmem:[#allocation3 + $0xb0] sm:$0xff]
  %4317 = vrot.lane.b32.xlu0 %v4313, 121
  %v4318 = vpop.permute.xlu0 %4317
  %4319 = vrot.lane.b32.xlu0 %v4314, 121
  %v4320 = vpop.permute.xlu0 %4319
  %4323 = vst.msk [vmem:[#allocation4 + $0x70] sm:$0xff] %vm4162, %v4318
  %4324 = vst.msk [vmem:[#allocation4 + $0x78] sm:$0xff] %vm4162, %v4320
  %v4325 = vld [vmem:[#allocation3 + $0x8] sm:$0xff]
  %v4326 = vld [vmem:[#allocation3 + $0x70] sm:$0xff]
  %4329 = vrot.lane.b32.xlu0 %v4325, 116
  %v4330 = vpop.permute.xlu0 %4329
  %4331 = vrot.lane.b32.xlu0 %v4326, 116
  %v4332 = vpop.permute.xlu0 %4331
  %4335 = vst.msk [vmem:[#allocation4 + $0x80] sm:$0xff] %vm4149, %v4330
  %4336 = vst.msk [vmem:[#allocation4 + $0x88] sm:$0xff] %vm4149, %v4332
  %v4337 = vld [vmem:[#allocation3 + $0x48] sm:$0xff]
  %v4338 = vld [vmem:[#allocation3 + $0xb0] sm:$0xff]
  %4341 = vrot.lane.b32.xlu0 %v4337, 117
  %v4342 = vpop.permute.xlu0 %4341
  %4343 = vrot.lane.b32.xlu0 %v4338, 117
  %v4344 = vpop.permute.xlu0 %4343
  %4347 = vst.msk [vmem:[#allocation4 + $0x80] sm:$0xff] %vm4162, %v4342
  %4348 = vst.msk [vmem:[#allocation4 + $0x88] sm:$0xff] %vm4162, %v4344
  %v4349 = vld [vmem:[#allocation3 + $0x8] sm:$0xff]
  %v4350 = vld [vmem:[#allocation3 + $0x70] sm:$0xff]
  %4353 = vrot.lane.b32.xlu0 %v4349, 112
  %v4354 = vpop.permute.xlu0 %4353
  %4355 = vrot.lane.b32.xlu0 %v4350, 112
  %v4356 = vpop.permute.xlu0 %4355
  %4359 = vst.msk [vmem:[#allocation4 + $0x90] sm:$0xff] %vm4149, %v4354
  %4360 = vst.msk [vmem:[#allocation4 + $0x98] sm:$0xff] %vm4149, %v4356
  %v4361 = vld [vmem:[#allocation3 + $0x48] sm:$0xff]
  %v4362 = vld [vmem:[#allocation3 + $0xb0] sm:$0xff]
  %4365 = vrot.lane.b32.xlu0 %v4361, 113
  %v4366 = vpop.permute.xlu0 %4365
  %4367 = vrot.lane.b32.xlu0 %v4362, 113
  %v4368 = vpop.permute.xlu0 %4367
  %4371 = vst.msk [vmem:[#allocation4 + $0x90] sm:$0xff] %vm4162, %v4366
  %4372 = vst.msk [vmem:[#allocation4 + $0x98] sm:$0xff] %vm4162, %v4368
  %v4373 = vld [vmem:[#allocation3 + $0x10] sm:$0xff]
  %v4374 = vld [vmem:[#allocation3 + $0x78] sm:$0xff]
  %4375 = vst.msk [vmem:[#allocation4 + $0xa0] sm:$0xff] %vm4149, %v4373
  %4376 = vst.msk [vmem:[#allocation4 + $0xa8] sm:$0xff] %vm4149, %v4374
  %v4377 = vld [vmem:[#allocation3 + $0x50] sm:$0xff]
  %v4378 = vld [vmem:[#allocation3 + $0xb8] sm:$0xff]
  %4381 = vrot.lane.b32.xlu0 %v4377, 1
  %v4382 = vpop.permute.xlu0 %4381
  %4383 = vrot.lane.b32.xlu0 %v4378, 1
  %v4384 = vpop.permute.xlu0 %4383
  %4387 = vst.msk [vmem:[#allocation4 + $0xa0] sm:$0xff] %vm4162, %v4382
  %4388 = vst.msk [vmem:[#allocation4 + $0xa8] sm:$0xff] %vm4162, %v4384
  %v4389 = vld [vmem:[#allocation3 + $0x10] sm:$0xff]
  %v4390 = vld [vmem:[#allocation3 + $0x78] sm:$0xff]
  %4393 = vrot.lane.b32.xlu0 %v4389, 124
  %v4394 = vpop.permute.xlu0 %4393
  %4395 = vrot.lane.b32.xlu0 %v4390, 124
  %v4396 = vpop.permute.xlu0 %4395
  %4399 = vst.msk [vmem:[#allocation4 + $0xb0] sm:$0xff] %vm4149, %v4394
  %4400 = vst.msk [vmem:[#allocation4 + $0xb8] sm:$0xff] %vm4149, %v4396
  %v4401 = vld [vmem:[#allocation3 + $0x50] sm:$0xff]
  %v4402 = vld [vmem:[#allocation3 + $0xb8] sm:$0xff]
  %4405 = vrot.lane.b32.xlu0 %v4401, 125
  %v4406 = vpop.permute.xlu0 %4405
  %4407 = vrot.lane.b32.xlu0 %v4402, 125
  %v4408 = vpop.permute.xlu0 %4407
  %4411 = vst.msk [vmem:[#allocation4 + $0xb0] sm:$0xff] %vm4162, %v4406
  %4412 = vst.msk [vmem:[#allocation4 + $0xb8] sm:$0xff] %vm4162, %v4408
  %v4413 = vld [vmem:[#allocation3 + $0x10] sm:$0xff]
  %v4414 = vld [vmem:[#allocation3 + $0x78] sm:$0xff]
  %4417 = vrot.lane.b32.xlu0 %v4413, 120
  %v4418 = vpop.permute.xlu0 %4417
  %4419 = vrot.lane.b32.xlu0 %v4414, 120
  %v4420 = vpop.permute.xlu0 %4419
  %4423 = vst.msk [vmem:[#allocation4 + $0xc0] sm:$0xff] %vm4149, %v4418
  %4424 = vst.msk [vmem:[#allocation4 + $0xc8] sm:$0xff] %vm4149, %v4420
  %v4425 = vld [vmem:[#allocation3 + $0x50] sm:$0xff]
  %v4426 = vld [vmem:[#allocation3 + $0xb8] sm:$0xff]
  %4429 = vrot.lane.b32.xlu0 %v4425, 121
  %v4430 = vpop.permute.xlu0 %4429
  %4431 = vrot.lane.b32.xlu0 %v4426, 121
  %v4432 = vpop.permute.xlu0 %4431
  %4435 = vst.msk [vmem:[#allocation4 + $0xc0] sm:$0xff] %vm4162, %v4430
  %4436 = vst.msk [vmem:[#allocation4 + $0xc8] sm:$0xff] %vm4162, %v4432
  %v4437 = vld [vmem:[#allocation3 + $0x10] sm:$0xff]
  %v4438 = vld [vmem:[#allocation3 + $0x78] sm:$0xff]
  %4441 = vrot.lane.b32.xlu0 %v4437, 116
  %v4442 = vpop.permute.xlu0 %4441
  %4443 = vrot.lane.b32.xlu0 %v4438, 116
  %v4444 = vpop.permute.xlu0 %4443
  %4447 = vst.msk [vmem:[#allocation4 + $0xd0] sm:$0xff] %vm4149, %v4442
  %4448 = vst.msk [vmem:[#allocation4 + $0xd8] sm:$0xff] %vm4149, %v4444
  %v4449 = vld [vmem:[#allocation3 + $0x50] sm:$0xff]
  %v4450 = vld [vmem:[#allocation3 + $0xb8] sm:$0xff]
  %4453 = vrot.lane.b32.xlu0 %v4449, 117
  %v4454 = vpop.permute.xlu0 %4453
  %4455 = vrot.lane.b32.xlu0 %v4450, 117
  %v4456 = vpop.permute.xlu0 %4455
  %4459 = vst.msk [vmem:[#allocation4 + $0xd0] sm:$0xff] %vm4162, %v4454
  %4460 = vst.msk [vmem:[#allocation4 + $0xd8] sm:$0xff] %vm4162, %v4456
  %v4461 = vld [vmem:[#allocation3 + $0x10] sm:$0xff]
  %v4462 = vld [vmem:[#allocation3 + $0x78] sm:$0xff]
  %4465 = vrot.lane.b32.xlu0 %v4461, 112
  %v4466 = vpop.permute.xlu0 %4465
  %4467 = vrot.lane.b32.xlu0 %v4462, 112
  %v4468 = vpop.permute.xlu0 %4467
  %4471 = vst.msk [vmem:[#allocation4 + $0xe0] sm:$0xff] %vm4149, %v4466
  %4472 = vst.msk [vmem:[#allocation4 + $0xe8] sm:$0xff] %vm4149, %v4468
  %v4473 = vld [vmem:[#allocation3 + $0x50] sm:$0xff]
  %v4474 = vld [vmem:[#allocation3 + $0xb8] sm:$0xff]
  %4477 = vrot.lane.b32.xlu0 %v4473, 113
  %v4478 = vpop.permute.xlu0 %4477
  %4479 = vrot.lane.b32.xlu0 %v4474, 113
  %v4480 = vpop.permute.xlu0 %4479
  %4483 = vst.msk [vmem:[#allocation4 + $0xe0] sm:$0xff] %vm4162, %v4478
  %4484 = vst.msk [vmem:[#allocation4 + $0xe8] sm:$0xff] %vm4162, %v4480
  %v4485 = vld [vmem:[#allocation3 + $0x18] sm:$0xff]
  %v4486 = vld [vmem:[#allocation3 + $0x80] sm:$0xff]
  %4487 = vst.msk [vmem:[#allocation4 + $0xf0] sm:$0xff] %vm4149, %v4485
  %4488 = vst.msk [vmem:[#allocation4 + $0xf8] sm:$0xff] %vm4149, %v4486
  %v4489 = vld [vmem:[#allocation3 + $0x58] sm:$0xff]
  %v4490 = vld [vmem:[#allocation3 + $0xc0] sm:$0xff]
  %4493 = vrot.lane.b32.xlu0 %v4489, 1
  %v4494 = vpop.permute.xlu0 %4493
  %4495 = vrot.lane.b32.xlu0 %v4490, 1
  %v4496 = vpop.permute.xlu0 %4495
  %4499 = vst.msk [vmem:[#allocation4 + $0xf0] sm:$0xff] %vm4162, %v4494
  %4500 = vst.msk [vmem:[#allocation4 + $0xf8] sm:$0xff] %vm4162, %v4496
  %v4501 = vld [vmem:[#allocation3 + $0x18] sm:$0xff]
  %v4502 = vld [vmem:[#allocation3 + $0x80] sm:$0xff]
  %4505 = vrot.lane.b32.xlu0 %v4501, 124
  %v4506 = vpop.permute.xlu0 %4505
  %4507 = vrot.lane.b32.xlu0 %v4502, 124
  %v4508 = vpop.permute.xlu0 %4507
  %4511 = vst.msk [vmem:[#allocation4 + $0x100] sm:$0xff] %vm4149, %v4506
  %4512 = vst.msk [vmem:[#allocation4 + $0x108] sm:$0xff] %vm4149, %v4508
  %v4513 = vld [vmem:[#allocation3 + $0x58] sm:$0xff]
  %v4514 = vld [vmem:[#allocation3 + $0xc0] sm:$0xff]
  %4517 = vrot.lane.b32.xlu0 %v4513, 125
  %v4518 = vpop.permute.xlu0 %4517
  %4519 = vrot.lane.b32.xlu0 %v4514, 125
  %v4520 = vpop.permute.xlu0 %4519
  %4523 = vst.msk [vmem:[#allocation4 + $0x100] sm:$0xff] %vm4162, %v4518
  %4524 = vst.msk [vmem:[#allocation4 + $0x108] sm:$0xff] %vm4162, %v4520
  %v4525 = vld [vmem:[#allocation3 + $0x18] sm:$0xff]
  %v4526 = vld [vmem:[#allocation3 + $0x80] sm:$0xff]
  %4529 = vrot.lane.b32.xlu0 %v4525, 120
  %v4530 = vpop.permute.xlu0 %4529
  %4531 = vrot.lane.b32.xlu0 %v4526, 120
  %v4532 = vpop.permute.xlu0 %4531
  %4535 = vst.msk [vmem:[#allocation4 + $0x110] sm:$0xff] %vm4149, %v4530
  %4536 = vst.msk [vmem:[#allocation4 + $0x118] sm:$0xff] %vm4149, %v4532
  %v4537 = vld [vmem:[#allocation3 + $0x58] sm:$0xff]
  %v4538 = vld [vmem:[#allocation3 + $0xc0] sm:$0xff]
  %4541 = vrot.lane.b32.xlu0 %v4537, 121
  %v4542 = vpop.permute.xlu0 %4541
  %4543 = vrot.lane.b32.xlu0 %v4538, 121
  %v4544 = vpop.permute.xlu0 %4543
  %4547 = vst.msk [vmem:[#allocation4 + $0x110] sm:$0xff] %vm4162, %v4542
  %4548 = vst.msk [vmem:[#allocation4 + $0x118] sm:$0xff] %vm4162, %v4544
  %v4549 = vld [vmem:[#allocation3 + $0x18] sm:$0xff]
  %v4550 = vld [vmem:[#allocation3 + $0x80] sm:$0xff]
  %4553 = vrot.lane.b32.xlu0 %v4549, 116
  %v4554 = vpop.permute.xlu0 %4553
  %4555 = vrot.lane.b32.xlu0 %v4550, 116
  %v4556 = vpop.permute.xlu0 %4555
  %4559 = vst.msk [vmem:[#allocation4 + $0x120] sm:$0xff] %vm4149, %v4554
  %4560 = vst.msk [vmem:[#allocation4 + $0x128] sm:$0xff] %vm4149, %v4556
  %v4561 = vld [vmem:[#allocation3 + $0x58] sm:$0xff]
  %v4562 = vld [vmem:[#allocation3 + $0xc0] sm:$0xff]
  %4565 = vrot.lane.b32.xlu0 %v4561, 117
  %v4566 = vpop.permute.xlu0 %4565
  %4567 = vrot.lane.b32.xlu0 %v4562, 117
  %v4568 = vpop.permute.xlu0 %4567
  %4571 = vst.msk [vmem:[#allocation4 + $0x120] sm:$0xff] %vm4162, %v4566
  %4572 = vst.msk [vmem:[#allocation4 + $0x128] sm:$0xff] %vm4162, %v4568
  %v4573 = vld [vmem:[#allocation3 + $0x18] sm:$0xff]
  %v4574 = vld [vmem:[#allocation3 + $0x80] sm:$0xff]
  %4577 = vrot.lane.b32.xlu0 %v4573, 112
  %v4578 = vpop.permute.xlu0 %4577
  %4579 = vrot.lane.b32.xlu0 %v4574, 112
  %v4580 = vpop.permute.xlu0 %4579
  %4583 = vst.msk [vmem:[#allocation4 + $0x130] sm:$0xff] %vm4149, %v4578
  %4584 = vst.msk [vmem:[#allocation4 + $0x138] sm:$0xff] %vm4149, %v4580
  %v4585 = vld [vmem:[#allocation3 + $0x58] sm:$0xff]
  %v4586 = vld [vmem:[#allocation3 + $0xc0] sm:$0xff]
  %4589 = vrot.lane.b32.xlu0 %v4585, 113
  %v4590 = vpop.permute.xlu0 %4589
  %4591 = vrot.lane.b32.xlu0 %v4586, 113
  %v4592 = vpop.permute.xlu0 %4591
  %4595 = vst.msk [vmem:[#allocation4 + $0x130] sm:$0xff] %vm4162, %v4590
  %4596 = vst.msk [vmem:[#allocation4 + $0x138] sm:$0xff] %vm4162, %v4592
  %v4597 = vld [vmem:[#allocation3 + $0x20] sm:$0xff]
  %v4598 = vld [vmem:[#allocation3 + $0x88] sm:$0xff]
  %4599 = vst.msk [vmem:[#allocation4 + $0x140] sm:$0xff] %vm4149, %v4597
  %4600 = vst.msk [vmem:[#allocation4 + $0x148] sm:$0xff] %vm4149, %v4598
  %v4601 = vld [vmem:[#allocation3 + $0x60] sm:$0xff]
  %v4602 = vld [vmem:[#allocation3 + $0xc8] sm:$0xff]
  %4605 = vrot.lane.b32.xlu0 %v4601, 1
  %v4606 = vpop.permute.xlu0 %4605
  %4607 = vrot.lane.b32.xlu0 %v4602, 1
  %v4608 = vpop.permute.xlu0 %4607
  %4611 = vst.msk [vmem:[#allocation4 + $0x140] sm:$0xff] %vm4162, %v4606
  %4612 = vst.msk [vmem:[#allocation4 + $0x148] sm:$0xff] %vm4162, %v4608
  %v4613 = vld [vmem:[#allocation3 + $0x20] sm:$0xff]
  %v4614 = vld [vmem:[#allocation3 + $0x88] sm:$0xff]
  %4617 = vrot.lane.b32.xlu0 %v4613, 124
  %v4618 = vpop.permute.xlu0 %4617
  %4619 = vrot.lane.b32.xlu0 %v4614, 124
  %v4620 = vpop.permute.xlu0 %4619
  %4623 = vst.msk [vmem:[#allocation4 + $0x150] sm:$0xff] %vm4149, %v4618
  %4624 = vst.msk [vmem:[#allocation4 + $0x158] sm:$0xff] %vm4149, %v4620
  %v4625 = vld [vmem:[#allocation3 + $0x60] sm:$0xff]
  %v4626 = vld [vmem:[#allocation3 + $0xc8] sm:$0xff]
  %4629 = vrot.lane.b32.xlu0 %v4625, 125
  %v4630 = vpop.permute.xlu0 %4629
  %4631 = vrot.lane.b32.xlu0 %v4626, 125
  %v4632 = vpop.permute.xlu0 %4631
  %4635 = vst.msk [vmem:[#allocation4 + $0x150] sm:$0xff] %vm4162, %v4630
  %4636 = vst.msk [vmem:[#allocation4 + $0x158] sm:$0xff] %vm4162, %v4632
  %v4637 = vld [vmem:[#allocation3 + $0x20] sm:$0xff]
  %v4638 = vld [vmem:[#allocation3 + $0x88] sm:$0xff]
  %4641 = vrot.lane.b32.xlu0 %v4637, 120
  %v4642 = vpop.permute.xlu0 %4641
  %4643 = vrot.lane.b32.xlu0 %v4638, 120
  %v4644 = vpop.permute.xlu0 %4643
  %4647 = vst.msk [vmem:[#allocation4 + $0x160] sm:$0xff] %vm4149, %v4642
  %4648 = vst.msk [vmem:[#allocation4 + $0x168] sm:$0xff] %vm4149, %v4644
  %v4649 = vld [vmem:[#allocation3 + $0x60] sm:$0xff]
  %v4650 = vld [vmem:[#allocation3 + $0xc8] sm:$0xff]
  %4653 = vrot.lane.b32.xlu0 %v4649, 121
  %v4654 = vpop.permute.xlu0 %4653
  %4655 = vrot.lane.b32.xlu0 %v4650, 121
  %v4656 = vpop.permute.xlu0 %4655
  %4659 = vst.msk [vmem:[#allocation4 + $0x160] sm:$0xff] %vm4162, %v4654
  %4660 = vst.msk [vmem:[#allocation4 + $0x168] sm:$0xff] %vm4162, %v4656
  %v4661 = vld [vmem:[#allocation3 + $0x20] sm:$0xff]
  %v4662 = vld [vmem:[#allocation3 + $0x88] sm:$0xff]
  %4665 = vrot.lane.b32.xlu0 %v4661, 116
  %v4666 = vpop.permute.xlu0 %4665
  %4667 = vrot.lane.b32.xlu0 %v4662, 116
  %v4668 = vpop.permute.xlu0 %4667
  %4671 = vst.msk [vmem:[#allocation4 + $0x170] sm:$0xff] %vm4149, %v4666
  %4672 = vst.msk [vmem:[#allocation4 + $0x178] sm:$0xff] %vm4149, %v4668
  %v4673 = vld [vmem:[#allocation3 + $0x60] sm:$0xff]
  %v4674 = vld [vmem:[#allocation3 + $0xc8] sm:$0xff]
  %4677 = vrot.lane.b32.xlu0 %v4673, 117
  %v4678 = vpop.permute.xlu0 %4677
  %4679 = vrot.lane.b32.xlu0 %v4674, 117
  %v4680 = vpop.permute.xlu0 %4679
  %4683 = vst.msk [vmem:[#allocation4 + $0x170] sm:$0xff] %vm4162, %v4678
  %4684 = vst.msk [vmem:[#allocation4 + $0x178] sm:$0xff] %vm4162, %v4680
  %v4685 = vld [vmem:[#allocation3 + $0x20] sm:$0xff]
  %v4686 = vld [vmem:[#allocation3 + $0x88] sm:$0xff]
  %4689 = vrot.lane.b32.xlu0 %v4685, 112
  %v4690 = vpop.permute.xlu0 %4689
  %4691 = vrot.lane.b32.xlu0 %v4686, 112
  %v4692 = vpop.permute.xlu0 %4691
  %4695 = vst.msk [vmem:[#allocation4 + $0x180] sm:$0xff] %vm4149, %v4690
  %4696 = vst.msk [vmem:[#allocation4 + $0x188] sm:$0xff] %vm4149, %v4692
  %v4697 = vld [vmem:[#allocation3 + $0x60] sm:$0xff]
  %v4698 = vld [vmem:[#allocation3 + $0xc8] sm:$0xff]
  %4701 = vrot.lane.b32.xlu0 %v4697, 113
  %v4702 = vpop.permute.xlu0 %4701
  %4703 = vrot.lane.b32.xlu0 %v4698, 113
  %v4704 = vpop.permute.xlu0 %4703
  %4707 = vst.msk [vmem:[#allocation4 + $0x180] sm:$0xff] %vm4162, %v4702
  %4708 = vst.msk [vmem:[#allocation4 + $0x188] sm:$0xff] %vm4162, %v4704
  %v4709 = vld [vmem:[%s4] sm:$0xff]
  %v4710 = vld [vmem:[%s4 + $0x8] sm:$0xff]
  %v4711 = vld [vmem:[%s4 + $0x10] sm:$0xff]
  %v4712 = vld [vmem:[%s4 + $0x18] sm:$0xff]
  %v4713 = vld [vmem:[%s4 + $0x20] sm:$0xff]
  %v4714 = vld [vmem:[%s4 + $0x28] sm:$0xff]
  %v4715 = vld [vmem:[%s4 + $0x30] sm:$0xff]
  %v4716 = vld [vmem:[%s4 + $0x38] sm:$0xff]
  %v4717 = vld [vmem:[%s4 + $0x40] sm:$0xff]
  %v4718 = vld [vmem:[%s4 + $0x48] sm:$0xff]
  %v4719 = vld [vmem:[%s4 + $0x50] sm:$0xff]
  %v4720 = vld [vmem:[%s4 + $0x58] sm:$0xff]
  %v4721 = vld [vmem:[%s4 + $0x60] sm:$0xff]
  %v4722 = vld [vmem:[%s4 + $0x68] sm:$0xff]
  %v4723 = vld [vmem:[%s4 + $0x70] sm:$0xff]
  %v4724 = vld [vmem:[%s4 + $0x78] sm:$0xff]
  %v4725 = vld [vmem:[%s4 + $0x80] sm:$0xff]
  %v4726 = vld [vmem:[%s4 + $0x88] sm:$0xff]
  %v4727 = vld [vmem:[%s4 + $0x90] sm:$0xff]
  %v4728 = vld [vmem:[%s4 + $0x98] sm:$0xff]
  %v4729 = vld [vmem:[%s4 + $0xa0] sm:$0xff]
  %v4730 = vld [vmem:[%s4 + $0xa8] sm:$0xff]
  %v4731 = vld [vmem:[%s4 + $0xb0] sm:$0xff]
  %v4732 = vld [vmem:[%s4 + $0xb8] sm:$0xff]
  %v4733 = vld [vmem:[%s4 + $0xc0] sm:$0xff]
  %v4734 = vld [vmem:[%s4 + $0xc8] sm:$0xff]
  %v4735 = vld [vmem:[%s4 + $0xd0] sm:$0xff]
  %v4736 = vld [vmem:[%s4 + $0xd8] sm:$0xff]
  %v4737 = vld [vmem:[%s4 + $0xe0] sm:$0xff]
  %v4738 = vld [vmem:[%s4 + $0xe8] sm:$0xff]
  %v4739 = vld [vmem:[%s4 + $0xf0] sm:$0xff]
  %v4740 = vld [vmem:[%s4 + $0xf8] sm:$0xff]
  %v4741 = vld [vmem:[%s4 + $0x100] sm:$0xff]
  %v4742 = vld [vmem:[%s4 + $0x108] sm:$0xff]
  %v4743 = vld [vmem:[%s4 + $0x110] sm:$0xff]
  %v4744 = vld [vmem:[%s4 + $0x118] sm:$0xff]
  %v4745 = vld [vmem:[%s4 + $0x120] sm:$0xff]
  %v4746 = vld [vmem:[%s4 + $0x128] sm:$0xff]
  %v4747 = vld [vmem:[%s4 + $0x130] sm:$0xff]
  %v4748 = vld [vmem:[%s4 + $0x138] sm:$0xff]
  %v4749 = vld [vmem:[%s4 + $0x140] sm:$0xff]
  %v4750 = vld [vmem:[%s4 + $0x148] sm:$0xff]
  %v4751 = vld [vmem:[%s4 + $0x150] sm:$0xff]
  %v4752 = vld [vmem:[%s4 + $0x158] sm:$0xff]
  %v4753 = vld [vmem:[%s4 + $0x160] sm:$0xff]
  %v4754 = vld [vmem:[%s4 + $0x168] sm:$0xff]
  %v4755 = vld [vmem:[%s4 + $0x170] sm:$0xff]
  %v4756 = vld [vmem:[%s4 + $0x178] sm:$0xff]
  %v4757 = vld [vmem:[%s4 + $0x180] sm:$0xff]
  %v4758 = vld [vmem:[%s4 + $0x188] sm:$0xff]
  %v4759 = vld [vmem:[%s4 + $0x190] sm:$0xff]
  %v4760 = vld [vmem:[%s4 + $0x198] sm:$0xff]
  %v4761 = vld [vmem:[%s4 + $0x1a0] sm:$0xff]
  %v4762 = vld [vmem:[%s4 + $0x1a8] sm:$0xff]
  %v4763 = vld [vmem:[%s4 + $0x1b0] sm:$0xff]
  %v4764 = vld [vmem:[%s4 + $0x1b8] sm:$0xff]
  %v4765 = vld [vmem:[%s4 + $0x1c0] sm:$0xff]
  %v4766 = vld [vmem:[%s4 + $0x1c8] sm:$0xff]
  %v4767 = vld [vmem:[%s4 + $0x1d0] sm:$0xff]
  %v4768 = vld [vmem:[%s4 + $0x1d8] sm:$0xff]
  %v4769 = vld [vmem:[#allocation4] sm:$0xff]
  %v4770 = vld [vmem:[#allocation4 + $0x8] sm:$0xff]
  %v4771 = vld [vmem:[#allocation4 + $0x10] sm:$0xff]
  %v4772 = vld [vmem:[#allocation4 + $0x18] sm:$0xff]
  %v4773 = vld [vmem:[#allocation4 + $0x20] sm:$0xff]
  %v4774 = vld [vmem:[#allocation4 + $0x28] sm:$0xff]
  %v4775 = vld [vmem:[#allocation4 + $0x30] sm:$0xff]
  %v4776 = vld [vmem:[#allocation4 + $0x38] sm:$0xff]
  %v4777 = vld [vmem:[#allocation4 + $0x40] sm:$0xff]
  %v4778 = vld [vmem:[#allocation4 + $0x48] sm:$0xff]
  %v4779 = vld [vmem:[#allocation4 + $0x50] sm:$0xff]
  %v4780 = vld [vmem:[#allocation4 + $0x58] sm:$0xff]
  %v4781 = vld [vmem:[#allocation4 + $0x60] sm:$0xff]
  %v4782 = vld [vmem:[#allocation4 + $0x68] sm:$0xff]
  %v4783 = vld [vmem:[#allocation4 + $0x70] sm:$0xff]
  %v4784 = vld [vmem:[#allocation4 + $0x78] sm:$0xff]
  %v4785 = vld [vmem:[#allocation4 + $0x80] sm:$0xff]
  %v4786 = vld [vmem:[#allocation4 + $0x88] sm:$0xff]
  %v4787 = vld [vmem:[#allocation4 + $0x90] sm:$0xff]
  %v4788 = vld [vmem:[#allocation4 + $0x98] sm:$0xff]
  %v4789 = vld [vmem:[#allocation4 + $0xa0] sm:$0xff]
  %v4790 = vld [vmem:[#allocation4 + $0xa8] sm:$0xff]
  %v4791 = vld [vmem:[#allocation4 + $0xb0] sm:$0xff]
  %v4792 = vld [vmem:[#allocation4 + $0xb8] sm:$0xff]
  %v4793 = vld [vmem:[#allocation4 + $0xc0] sm:$0xff]
  %v4794 = vld [vmem:[#allocation4 + $0xc8] sm:$0xff]
  %v4795 = vld [vmem:[#allocation4 + $0xd0] sm:$0xff]
  %v4796 = vld [vmem:[#allocation4 + $0xd8] sm:$0xff]
  %v4797 = vld [vmem:[#allocation4 + $0xe0] sm:$0xff]
  %v4798 = vld [vmem:[#allocation4 + $0xe8] sm:$0xff]
  %v4799 = vld [vmem:[#allocation4 + $0xf0] sm:$0xff]
  %v4800 = vld [vmem:[#allocation4 + $0xf8] sm:$0xff]
  %v4801 = vld [vmem:[#allocation4 + $0x100] sm:$0xff]
  %v4802 = vld [vmem:[#allocation4 + $0x108] sm:$0xff]
  %v4803 = vld [vmem:[#allocation4 + $0x110] sm:$0xff]
  %v4804 = vld [vmem:[#allocation4 + $0x118] sm:$0xff]
  %v4805 = vld [vmem:[#allocation4 + $0x120] sm:$0xff]
  %v4806 = vld [vmem:[#allocation4 + $0x128] sm:$0xff]
  %v4807 = vld [vmem:[#allocation4 + $0x130] sm:$0xff]
  %v4808 = vld [vmem:[#allocation4 + $0x138] sm:$0xff]
  %v4809 = vld [vmem:[#allocation4 + $0x140] sm:$0xff]
  %v4810 = vld [vmem:[#allocation4 + $0x148] sm:$0xff]
  %v4811 = vld [vmem:[#allocation4 + $0x150] sm:$0xff]
  %v4812 = vld [vmem:[#allocation4 + $0x158] sm:$0xff]
  %v4813 = vld [vmem:[#allocation4 + $0x160] sm:$0xff]
  %v4814 = vld [vmem:[#allocation4 + $0x168] sm:$0xff]
  %v4815 = vld [vmem:[#allocation4 + $0x170] sm:$0xff]
  %v4816 = vld [vmem:[#allocation4 + $0x178] sm:$0xff]
  %v4817 = vld [vmem:[#allocation4 + $0x180] sm:$0xff]
  %v4818 = vld [vmem:[#allocation4 + $0x188] sm:$0xff]
  %v4819 = vld [vmem:[%s6] sm:$0xff]
  %v4820 = vld [vmem:[%s6 + $0x8] sm:$0xff]
  %v4821 = vld [vmem:[%s6 + $0x10] sm:$0xff]
  %v4822 = vld [vmem:[%s6 + $0x18] sm:$0xff]
  %v4823 = vld [vmem:[%s6 + $0x20] sm:$0xff]
  %v4824 = vld [vmem:[%s6 + $0x28] sm:$0xff]
  %v4825 = vld [vmem:[%s6 + $0x30] sm:$0xff]
  %v4826 = vld [vmem:[%s6 + $0x38] sm:$0xff]
  %v4827 = vld [vmem:[%s6 + $0x40] sm:$0xff]
  %v4828 = vld [vmem:[%s6 + $0x48] sm:$0xff]
  %v4829 = vld [vmem:[%s6 + $0x50] sm:$0xff]
  %v4830 = vld [vmem:[%s6 + $0x58] sm:$0xff]
  %v4831 = vld [vmem:[%s6 + $0x60] sm:$0xff]
  %v4832 = vld [vmem:[%s6 + $0x68] sm:$0xff]
  %v4833 = vld [vmem:[%s6 + $0x70] sm:$0xff]
  %4835 = vset.pattern.permute.xlu0 0
  %4836 = vperm.xlu0 %4835, %v4819
  %v4837 = vpop.permute.xlu0 %4836
  %4840 = vset.pattern.permute.xlu0 0
  %4841 = vperm.xlu0 %4840, %v4820
  %v4842 = vpop.permute.xlu0 %4841
  %4845 = vset.pattern.permute.xlu0 0
  %4846 = vperm.xlu0 %4845, %v4821
  %v4847 = vpop.permute.xlu0 %4846
  %4850 = vset.pattern.permute.xlu0 0
  %4851 = vperm.xlu0 %4850, %v4822
  %v4852 = vpop.permute.xlu0 %4851
  %4855 = vset.pattern.permute.xlu0 0
  %4856 = vperm.xlu0 %4855, %v4823
  %v4857 = vpop.permute.xlu0 %4856
  %4860 = vset.pattern.permute.xlu0 0
  %4861 = vperm.xlu0 %4860, %v4824
  %v4862 = vpop.permute.xlu0 %4861
  %4865 = vset.pattern.permute.xlu0 0
  %4866 = vperm.xlu0 %4865, %v4825
  %v4867 = vpop.permute.xlu0 %4866
  %4870 = vset.pattern.permute.xlu0 0
  %4871 = vperm.xlu0 %4870, %v4826
  %v4872 = vpop.permute.xlu0 %4871
  %4875 = vset.pattern.permute.xlu0 0
  %4876 = vperm.xlu0 %4875, %v4827
  %v4877 = vpop.permute.xlu0 %4876
  %4880 = vset.pattern.permute.xlu0 0
  %4881 = vperm.xlu0 %4880, %v4828
  %v4882 = vpop.permute.xlu0 %4881
  %4885 = vset.pattern.permute.xlu0 0
  %4886 = vperm.xlu0 %4885, %v4829
  %v4887 = vpop.permute.xlu0 %4886
  %4890 = vset.pattern.permute.xlu0 0
  %4891 = vperm.xlu0 %4890, %v4830
  %v4892 = vpop.permute.xlu0 %4891
  %4895 = vset.pattern.permute.xlu0 0
  %4896 = vperm.xlu0 %4895, %v4831
  %v4897 = vpop.permute.xlu0 %4896
  %4900 = vset.pattern.permute.xlu0 0
  %4901 = vperm.xlu0 %4900, %v4832
  %v4902 = vpop.permute.xlu0 %4901
  %4905 = vset.pattern.permute.xlu0 0
  %4906 = vperm.xlu0 %4905, %v4833
  %v4907 = vpop.permute.xlu0 %4906
  %vm4909 = vcmask 130048
  %v4911 = vsel %vm4909, %v4712, 0
  %v4914 = vsel %vm4909, %v4716, 0
  %v4917 = vsel %vm4909, %v4720, 0
  %v4920 = vsel %vm4909, %v4724, 0
  %v4923 = vsel %vm4909, %v4728, 0
  %v4926 = vsel %vm4909, %v4732, 0
  %v4929 = vsel %vm4909, %v4736, 0
  %v4932 = vsel %vm4909, %v4740, 0
  %v4935 = vsel %vm4909, %v4744, 0
  %v4938 = vsel %vm4909, %v4748, 0
  %v4941 = vsel %vm4909, %v4752, 0
  %v4944 = vsel %vm4909, %v4756, 0
  %v4947 = vsel %vm4909, %v4760, 0
  %v4950 = vsel %vm4909, %v4764, 0
  %v4953 = vsel %vm4909, %v4768, 0
  %4955 = vmatpush.msra.mxu0 %v4784
  %4956 = vmatpush.msra.mxu0 %v4783
  %4957 = vmatpush.msra.mxu0 %v4782
  %4958 = vmatpush.msra.mxu0 %v4781
  %4959 = vmatpush.msra.mxu0 %v4780
  %4960 = vmatpush.msra.mxu0 %v4779
  %4961 = vmatpush.msra.mxu0 %v4778
  %4962 = vmatpush.msra.mxu0 %v4777
  %4963 = vmatpush.msra.mxu0 %v4776
  %4964 = vmatpush.msra.mxu0 %v4775
  %4965 = vmatpush.msra.mxu0 %v4774
  %4966 = vmatpush.msra.mxu0 %v4773
  %4967 = vmatpush.msra.mxu0 %v4772
  %4968 = vmatpush.msra.mxu0 %v4771
  %4969 = vmatpush.msra.mxu0 %v4770
  %4970 = vmatpush.msra.mxu0 %v4769
  %4971 = vmatmul.f32.gmra.mxu0 %v4709
  %v4972 = vpop.f32.mrf.mxu0
  %v4973 = vadd.f32 %v4837, %v4972
  %4974 = vmatmul.f32.gmra.mxu0 %v4713
  %v4975 = vpop.f32.mrf.mxu0
  %v4976 = vadd.f32 %v4842, %v4975
  %4977 = vmatmul.f32.gmra.mxu0 %v4717
  %v4978 = vpop.f32.mrf.mxu0
  %v4979 = vadd.f32 %v4847, %v4978
  %4980 = vmatmul.f32.gmra.mxu0 %v4721
  %v4981 = vpop.f32.mrf.mxu0
  %v4982 = vadd.f32 %v4852, %v4981
  %4983 = vmatmul.f32.gmra.mxu0 %v4725
  %v4984 = vpop.f32.mrf.mxu0
  %v4985 = vadd.f32 %v4857, %v4984
  %4986 = vmatmul.f32.gmra.mxu0 %v4729
  %v4987 = vpop.f32.mrf.mxu0
  %v4988 = vadd.f32 %v4862, %v4987
  %4989 = vmatmul.f32.gmra.mxu0 %v4733
  %v4990 = vpop.f32.mrf.mxu0
  %v4991 = vadd.f32 %v4867, %v4990
  %4992 = vmatmul.f32.gmra.mxu0 %v4737
  %v4993 = vpop.f32.mrf.mxu0
  %v4994 = vadd.f32 %v4872, %v4993
  %4995 = vmatmul.f32.gmra.mxu0 %v4741
  %v4996 = vpop.f32.mrf.mxu0
  %v4997 = vadd.f32 %v4877, %v4996
  %4998 = vmatmul.f32.gmra.mxu0 %v4745
  %v4999 = vpop.f32.mrf.mxu0
  %v5000 = vadd.f32 %v4882, %v4999
  %5001 = vmatmul.f32.gmra.mxu0 %v4749
  %v5002 = vpop.f32.mrf.mxu0
  %v5003 = vadd.f32 %v4887, %v5002
  %5004 = vmatmul.f32.gmra.mxu0 %v4753
  %v5005 = vpop.f32.mrf.mxu0
  %v5006 = vadd.f32 %v4892, %v5005
  %5007 = vmatmul.f32.gmra.mxu0 %v4757
  %v5008 = vpop.f32.mrf.mxu0
  %v5009 = vadd.f32 %v4897, %v5008
  %5010 = vmatmul.f32.gmra.mxu0 %v4761
  %v5011 = vpop.f32.mrf.mxu0
  %v5012 = vadd.f32 %v4902, %v5011
  %5013 = vmatmul.f32.gmra.mxu0 %v4765
  %v5014 = vpop.f32.mrf.mxu0
  %v5015 = vadd.f32 %v4907, %v5014
  %5016 = vdwg.mxu0
  %5017 = vmatpush.msra.mxu0 %v4800
  %5018 = vmatpush.msra.mxu0 %v4799
  %5019 = vmatpush.msra.mxu0 %v4798
  %5020 = vmatpush.msra.mxu0 %v4797
  %5021 = vmatpush.msra.mxu0 %v4796
  %5022 = vmatpush.msra.mxu0 %v4795
  %5023 = vmatpush.msra.mxu0 %v4794
  %5024 = vmatpush.msra.mxu0 %v4793
  %5025 = vmatpush.msra.mxu0 %v4792
  %5026 = vmatpush.msra.mxu0 %v4791
  %5027 = vmatpush.msra.mxu0 %v4790
  %5028 = vmatpush.msra.mxu0 %v4789
  %5029 = vmatpush.msra.mxu0 %v4788
  %5030 = vmatpush.msra.mxu0 %v4787
  %5031 = vmatpush.msra.mxu0 %v4786
  %5032 = vmatpush.msra.mxu0 %v4785
  %5033 = vmatmul.f32.gmra.mxu0 %v4710
  %v5034 = vpop.f32.mrf.mxu0
  %v5035 = vadd.f32 %v4973, %v5034
  %5036 = vmatmul.f32.gmra.mxu0 %v4714
  %v5037 = vpop.f32.mrf.mxu0
  %v5038 = vadd.f32 %v4976, %v5037
  %5039 = vmatmul.f32.gmra.mxu0 %v4718
  %v5040 = vpop.f32.mrf.mxu0
  %v5041 = vadd.f32 %v4979, %v5040
  %5042 = vmatmul.f32.gmra.mxu0 %v4722
  %v5043 = vpop.f32.mrf.mxu0
  %v5044 = vadd.f32 %v4982, %v5043
  %5045 = vmatmul.f32.gmra.mxu0 %v4726
  %v5046 = vpop.f32.mrf.mxu0
  %v5047 = vadd.f32 %v4985, %v5046
  %5048 = vmatmul.f32.gmra.mxu0 %v4730
  %v5049 = vpop.f32.mrf.mxu0
  %v5050 = vadd.f32 %v4988, %v5049
  %5051 = vmatmul.f32.gmra.mxu0 %v4734
  %v5052 = vpop.f32.mrf.mxu0
  %v5053 = vadd.f32 %v4991, %v5052
  %5054 = vmatmul.f32.gmra.mxu0 %v4738
  %v5055 = vpop.f32.mrf.mxu0
  %v5056 = vadd.f32 %v4994, %v5055
  %5057 = vmatmul.f32.gmra.mxu0 %v4742
  %v5058 = vpop.f32.mrf.mxu0
  %v5059 = vadd.f32 %v4997, %v5058
  %5060 = vmatmul.f32.gmra.mxu0 %v4746
  %v5061 = vpop.f32.mrf.mxu0
  %v5062 = vadd.f32 %v5000, %v5061
  %5063 = vmatmul.f32.gmra.mxu0 %v4750
  %v5064 = vpop.f32.mrf.mxu0
  %v5065 = vadd.f32 %v5003, %v5064
  %5066 = vmatmul.f32.gmra.mxu0 %v4754
  %v5067 = vpop.f32.mrf.mxu0
  %v5068 = vadd.f32 %v5006, %v5067
  %5069 = vmatmul.f32.gmra.mxu0 %v4758
  %v5070 = vpop.f32.mrf.mxu0
  %v5071 = vadd.f32 %v5009, %v5070
  %5072 = vmatmul.f32.gmra.mxu0 %v4762
  %v5073 = vpop.f32.mrf.mxu0
  %v5074 = vadd.f32 %v5012, %v5073
  %5075 = vmatmul.f32.gmra.mxu0 %v4766
  %v5076 = vpop.f32.mrf.mxu0
  %v5077 = vadd.f32 %v5015, %v5076
  %5078 = vdwg.mxu0
  %5079 = vmatpush.msra.mxu0 %v4816
  %5080 = vmatpush.msra.mxu0 %v4815
  %5081 = vmatpush.msra.mxu0 %v4814
  %5082 = vmatpush.msra.mxu0 %v4813
  %5083 = vmatpush.msra.mxu0 %v4812
  %5084 = vmatpush.msra.mxu0 %v4811
  %5085 = vmatpush.msra.mxu0 %v4810
  %5086 = vmatpush.msra.mxu0 %v4809
  %5087 = vmatpush.msra.mxu0 %v4808
  %5088 = vmatpush.msra.mxu0 %v4807
  %5089 = vmatpush.msra.mxu0 %v4806
  %5090 = vmatpush.msra.mxu0 %v4805
  %5091 = vmatpush.msra.mxu0 %v4804
  %5092 = vmatpush.msra.mxu0 %v4803
  %5093 = vmatpush.msra.mxu0 %v4802
  %5094 = vmatpush.msra.mxu0 %v4801
  %5095 = vmatmul.f32.gmra.mxu0 %v4711
  %v5096 = vpop.f32.mrf.mxu0
  %v5097 = vadd.f32 %v5035, %v5096
  %5098 = vmatmul.f32.gmra.mxu0 %v4715
  %v5099 = vpop.f32.mrf.mxu0
  %v5100 = vadd.f32 %v5038, %v5099
  %5101 = vmatmul.f32.gmra.mxu0 %v4719
  %v5102 = vpop.f32.mrf.mxu0
  %v5103 = vadd.f32 %v5041, %v5102
  %5104 = vmatmul.f32.gmra.mxu0 %v4723
  %v5105 = vpop.f32.mrf.mxu0
  %v5106 = vadd.f32 %v5044, %v5105
  %5107 = vmatmul.f32.gmra.mxu0 %v4727
  %v5108 = vpop.f32.mrf.mxu0
  %v5109 = vadd.f32 %v5047, %v5108
  %5110 = vmatmul.f32.gmra.mxu0 %v4731
  %v5111 = vpop.f32.mrf.mxu0
  %v5112 = vadd.f32 %v5050, %v5111
  %5113 = vmatmul.f32.gmra.mxu0 %v4735
  %v5114 = vpop.f32.mrf.mxu0
  %v5115 = vadd.f32 %v5053, %v5114
  %5116 = vmatmul.f32.gmra.mxu0 %v4739
  %v5117 = vpop.f32.mrf.mxu0
  %v5118 = vadd.f32 %v5056, %v5117
  %5119 = vmatmul.f32.gmra.mxu0 %v4743
  %v5120 = vpop.f32.mrf.mxu0
  %v5121 = vadd.f32 %v5059, %v5120
  %5122 = vmatmul.f32.gmra.mxu0 %v4747
  %v5123 = vpop.f32.mrf.mxu0
  %v5124 = vadd.f32 %v5062, %v5123
  %5125 = vmatmul.f32.gmra.mxu0 %v4751
  %v5126 = vpop.f32.mrf.mxu0
  %v5127 = vadd.f32 %v5065, %v5126
  %5128 = vmatmul.f32.gmra.mxu0 %v4755
  %v5129 = vpop.f32.mrf.mxu0
  %v5130 = vadd.f32 %v5068, %v5129
  %5131 = vmatmul.f32.gmra.mxu0 %v4759
  %v5132 = vpop.f32.mrf.mxu0
  %v5133 = vadd.f32 %v5071, %v5132
  %5134 = vmatmul.f32.gmra.mxu0 %v4763
  %v5135 = vpop.f32.mrf.mxu0
  %v5136 = vadd.f32 %v5074, %v5135
  %5137 = vmatmul.f32.gmra.mxu0 %v4767
  %v5138 = vpop.f32.mrf.mxu0
  %v5139 = vadd.f32 %v5077, %v5138
  %5140 = vdwg.mxu0
  %5141 = vmatpush.msra.mxu0 0.0
  %5142 = vmatpush.msra.mxu0 0.0
  %5143 = vmatpush.msra.mxu0 0.0
  %5144 = vmatpush.msra.mxu0 0.0
  %5145 = vmatpush.msra.mxu0 0.0
  %5146 = vmatpush.msra.mxu0 0.0
  %5147 = vmatpush.msra.mxu0 0.0
  %5148 = vmatpush.msra.mxu0 0.0
  %5149 = vmatpush.msra.mxu0 0.0
  %5150 = vmatpush.msra.mxu0 0.0
  %5151 = vmatpush.msra.mxu0 0.0
  %5152 = vmatpush.msra.mxu0 0.0
  %5153 = vmatpush.msra.mxu0 0.0
  %5154 = vmatpush.msra.mxu0 0.0
  %5155 = vmatpush.msra.mxu0 %v4818
  %5156 = vmatpush.msra.mxu0 %v4817
  %5157 = vmatmul.f32.gmra.mxu0 %v4911
  %v5158 = vpop.f32.mrf.mxu0
  %v5159 = vadd.f32 %v5097, %v5158
  %5160 = vmatmul.f32.gmra.mxu0 %v4914
  %v5161 = vpop.f32.mrf.mxu0
  %v5162 = vadd.f32 %v5100, %v5161
  %5163 = vmatmul.f32.gmra.mxu0 %v4917
  %v5164 = vpop.f32.mrf.mxu0
  %v5165 = vadd.f32 %v5103, %v5164
  %5166 = vmatmul.f32.gmra.mxu0 %v4920
  %v5167 = vpop.f32.mrf.mxu0
  %v5168 = vadd.f32 %v5106, %v5167
  %5169 = vmatmul.f32.gmra.mxu0 %v4923
  %v5170 = vpop.f32.mrf.mxu0
  %v5171 = vadd.f32 %v5109, %v5170
  %5172 = vmatmul.f32.gmra.mxu0 %v4926
  %v5173 = vpop.f32.mrf.mxu0
  %v5174 = vadd.f32 %v5112, %v5173
  %5175 = vmatmul.f32.gmra.mxu0 %v4929
  %v5176 = vpop.f32.mrf.mxu0
  %v5177 = vadd.f32 %v5115, %v5176
  %5178 = vmatmul.f32.gmra.mxu0 %v4932
  %v5179 = vpop.f32.mrf.mxu0
  %v5180 = vadd.f32 %v5118, %v5179
  %5181 = vmatmul.f32.gmra.mxu0 %v4935
  %v5182 = vpop.f32.mrf.mxu0
  %v5183 = vadd.f32 %v5121, %v5182
  %5184 = vmatmul.f32.gmra.mxu0 %v4938
  %v5185 = vpop.f32.mrf.mxu0
  %v5186 = vadd.f32 %v5124, %v5185
  %5187 = vmatmul.f32.gmra.mxu0 %v4941
  %v5188 = vpop.f32.mrf.mxu0
  %v5189 = vadd.f32 %v5127, %v5188
  %5190 = vmatmul.f32.gmra.mxu0 %v4944
  %v5191 = vpop.f32.mrf.mxu0
  %v5192 = vadd.f32 %v5130, %v5191
  %5193 = vmatmul.f32.gmra.mxu0 %v4947
  %v5194 = vpop.f32.mrf.mxu0
  %v5195 = vadd.f32 %v5133, %v5194
  %5196 = vmatmul.f32.gmra.mxu0 %v4950
  %v5197 = vpop.f32.mrf.mxu0
  %v5198 = vadd.f32 %v5136, %v5197
  %5199 = vmatmul.f32.gmra.mxu0 %v4953
  %v5200 = vpop.f32.mrf.mxu0
  %v5201 = vadd.f32 %v5139, %v5200
  %5202 = vdwg.mxu0
  %v5203 = vmax.f32 %v5159, 0.0
  %v5204 = vmax.f32 %v5162, 0.0
  %v5205 = vmax.f32 %v5165, 0.0
  %v5206 = vmax.f32 %v5168, 0.0
  %v5207 = vmax.f32 %v5171, 0.0
  %v5208 = vmax.f32 %v5174, 0.0
  %v5209 = vmax.f32 %v5177, 0.0
  %v5210 = vmax.f32 %v5180, 0.0
  %v5211 = vmax.f32 %v5183, 0.0
  %v5212 = vmax.f32 %v5186, 0.0
  %v5213 = vmax.f32 %v5189, 0.0
  %v5214 = vmax.f32 %v5192, 0.0
  %v5215 = vmax.f32 %v5195, 0.0
  %v5216 = vmax.f32 %v5198, 0.0
  %v5217 = vmax.f32 %v5201, 0.0
  %v5218 = vld [vmem:[%s5 + $0x10] sm:$0xff]
  %v5219 = vld [vmem:[%s5 + $0x18] sm:$0xff]
  %v5220 = vld [vmem:[%s5 + $0x20] sm:$0xff]
  %v5221 = vld [vmem:[%s5 + $0x28] sm:$0xff]
  %v5222 = vld [vmem:[%s5 + $0x30] sm:$0xff]
  %v5223 = vld [vmem:[%s5 + $0x38] sm:$0xff]
  %v5224 = vld [vmem:[%s5 + $0x40] sm:$0xff]
  %v5225 = vld [vmem:[%s5 + $0x48] sm:$0xff]
  %v5226 = vld [vmem:[%s5 + $0x50] sm:$0xff]
  %v5227 = vld [vmem:[%s5 + $0x58] sm:$0xff]
  %v5228 = vld [vmem:[%s5 + $0x60] sm:$0xf]
  %v5229 = vld [vmem:[%s6] sm:$0xff]
  %v5230 = vld [vmem:[%s6 + $0x8] sm:$0xff]
  %v5231 = vld [vmem:[%s6 + $0x10] sm:$0xff]
  %v5232 = vld [vmem:[%s6 + $0x18] sm:$0xff]
  %v5233 = vld [vmem:[%s6 + $0x20] sm:$0xff]
  %v5234 = vld [vmem:[%s6 + $0x28] sm:$0xff]
  %v5235 = vld [vmem:[%s6 + $0x30] sm:$0xff]
  %v5236 = vld [vmem:[%s6 + $0x38] sm:$0xff]
  %v5237 = vld [vmem:[%s6 + $0x40] sm:$0xff]
  %v5238 = vld [vmem:[%s6 + $0x48] sm:$0xff]
  %v5239 = vld [vmem:[%s6 + $0x50] sm:$0xf]
  %5241 = vset.pattern.permute.xlu0 1
  %5242 = vperm.xlu0 %5241, %v5229
  %v5243 = vpop.permute.xlu0 %5242
  %5246 = vset.pattern.permute.xlu0 1
  %5247 = vperm.xlu0 %5246, %v5230
  %v5248 = vpop.permute.xlu0 %5247
  %5251 = vset.pattern.permute.xlu0 1
  %5252 = vperm.xlu0 %5251, %v5231
  %v5253 = vpop.permute.xlu0 %5252
  %5256 = vset.pattern.permute.xlu0 1
  %5257 = vperm.xlu0 %5256, %v5232
  %v5258 = vpop.permute.xlu0 %5257
  %5261 = vset.pattern.permute.xlu0 1
  %5262 = vperm.xlu0 %5261, %v5233
  %v5263 = vpop.permute.xlu0 %5262
  %5266 = vset.pattern.permute.xlu0 1
  %5267 = vperm.xlu0 %5266, %v5234
  %v5268 = vpop.permute.xlu0 %5267
  %5271 = vset.pattern.permute.xlu0 1
  %5272 = vperm.xlu0 %5271, %v5235
  %v5273 = vpop.permute.xlu0 %5272
  %5276 = vset.pattern.permute.xlu0 1
  %5277 = vperm.xlu0 %5276, %v5236
  %v5278 = vpop.permute.xlu0 %5277
  %5281 = vset.pattern.permute.xlu0 1
  %5282 = vperm.xlu0 %5281, %v5237
  %v5283 = vpop.permute.xlu0 %5282
  %5286 = vset.pattern.permute.xlu0 1
  %5287 = vperm.xlu0 %5286, %v5238
  %v5288 = vpop.permute.xlu0 %5287
  %5291 = vset.pattern.permute.xlu0 1
  %5292 = vperm.xlu0 %5291, %v5239
  %v5293 = vpop.permute.xlu0 %5292
  %vm5295 = vcmask 982016
  %v5297 = vsel %vm5295, %v5218, 0
  %v5300 = vsel %vm5295, %v5219, 0
  %v5303 = vsel %vm5295, %v5220, 0
  %v5306 = vsel %vm5295, %v5221, 0
  %v5309 = vsel %vm5295, %v5222, 0
  %v5312 = vsel %vm5295, %v5223, 0
  %v5315 = vsel %vm5295, %v5224, 0
  %v5318 = vsel %vm5295, %v5225, 0
  %v5321 = vsel %vm5295, %v5226, 0
  %v5324 = vsel %vm5295, %v5227, 0
  %v5327 = vsel %vm5295, %v5228, 0
  %5329 = vmatpush.msra.mxu0 0.0
  %5330 = vmatpush.msra.mxu0 %v5217
  %5331 = vmatpush.msra.mxu0 %v5216
  %5332 = vmatpush.msra.mxu0 %v5215
  %5333 = vmatpush.msra.mxu0 %v5214
  %5334 = vmatpush.msra.mxu0 %v5213
  %5335 = vmatpush.msra.mxu0 %v5212
  %5336 = vmatpush.msra.mxu0 %v5211
  %5337 = vmatpush.msra.mxu0 %v5210
  %5338 = vmatpush.msra.mxu0 %v5209
  %5339 = vmatpush.msra.mxu0 %v5208
  %5340 = vmatpush.msra.mxu0 %v5207
  %5341 = vmatpush.msra.mxu0 %v5206
  %5342 = vmatpush.msra.mxu0 %v5205
  %5343 = vmatpush.msra.mxu0 %v5204
  %5344 = vmatpush.msra.mxu0 %v5203
  %5345 = vmatmul.f32.gmra.mxu0 %v5297
  %v5346 = vpop.f32.mrf.mxu0
  %v5347 = vadd.f32 %v5243, %v5346
  %5348 = vmatmul.f32.gmra.mxu0 %v5300
  %v5349 = vpop.f32.mrf.mxu0
  %v5350 = vadd.f32 %v5248, %v5349
  %5351 = vmatmul.f32.gmra.mxu0 %v5303
  %v5352 = vpop.f32.mrf.mxu0
  %v5353 = vadd.f32 %v5253, %v5352
  %5354 = vmatmul.f32.gmra.mxu0 %v5306
  %v5355 = vpop.f32.mrf.mxu0
  %v5356 = vadd.f32 %v5258, %v5355
  %5357 = vmatmul.f32.gmra.mxu0 %v5309
  %v5358 = vpop.f32.mrf.mxu0
  %v5359 = vadd.f32 %v5263, %v5358
  %5360 = vmatmul.f32.gmra.mxu0 %v5312
  %v5361 = vpop.f32.mrf.mxu0
  %v5362 = vadd.f32 %v5268, %v5361
  %5363 = vmatmul.f32.gmra.mxu0 %v5315
  %v5364 = vpop.f32.mrf.mxu0
  %v5365 = vadd.f32 %v5273, %v5364
  %5366 = vmatmul.f32.gmra.mxu0 %v5318
  %v5367 = vpop.f32.mrf.mxu0
  %v5368 = vadd.f32 %v5278, %v5367
  %5369 = vmatmul.f32.gmra.mxu0 %v5321
  %v5370 = vpop.f32.mrf.mxu0
  %v5371 = vadd.f32 %v5283, %v5370
  %5372 = vmatmul.f32.gmra.mxu0 %v5324
  %v5373 = vpop.f32.mrf.mxu0
  %v5374 = vadd.f32 %v5288, %v5373
  %5375 = vmatmul.f32.gmra.mxu0 %v5327
  %v5376 = vpop.f32.mrf.mxu0
  %v5377 = vadd.f32 %v5293, %v5376
  %5378 = vdwg.mxu0
  %v5379 = vmax.f32 %v5347, 0.0
  %v5380 = vmax.f32 %v5350, 0.0
  %v5381 = vmax.f32 %v5353, 0.0
  %v5382 = vmax.f32 %v5356, 0.0
  %v5383 = vmax.f32 %v5359, 0.0
  %v5384 = vmax.f32 %v5362, 0.0
  %v5385 = vmax.f32 %v5365, 0.0
  %v5386 = vmax.f32 %v5368, 0.0
  %v5387 = vmax.f32 %v5371, 0.0
  %v5388 = vmax.f32 %v5374, 0.0
  %v5389 = vmax.f32 %v5377, 0.0
  %v5390 = vld [vmem:[%s5] sm:$0xff]
  %v5391 = vld [vmem:[%s5 + $0x8] sm:$0x3]
  %v5392 = vld [vmem:[%s6] sm:$0xff]
  %v5393 = vld [vmem:[%s6 + $0x8] sm:$0x3]
  %5395 = vset.pattern.permute.xlu0 2
  %5396 = vperm.xlu0 %5395, %v5392
  %v5397 = vpop.permute.xlu0 %5396
  %5400 = vset.pattern.permute.xlu0 2
  %5401 = vperm.xlu0 %5400, %v5393
  %v5402 = vpop.permute.xlu0 %5401
  %vm5404 = vcmask 687104
  %v5406 = vsel %vm5404, %v5390, 0
  %v5409 = vsel %vm5404, %v5391, 0
  %vm5411 = vcmask 1043456
  %v5413 = vsel %vm5411, %v5389, 0
  %5415 = vmatpush.msra.mxu0 0.0
  %5416 = vmatpush.msra.mxu0 0.0
  %5417 = vmatpush.msra.mxu0 0.0
  %5418 = vmatpush.msra.mxu0 0.0
  %5419 = vmatpush.msra.mxu0 0.0
  %5420 = vmatpush.msra.mxu0 %v5413
  %5421 = vmatpush.msra.mxu0 %v5388
  %5422 = vmatpush.msra.mxu0 %v5387
  %5423 = vmatpush.msra.mxu0 %v5386
  %5424 = vmatpush.msra.mxu0 %v5385
  %5425 = vmatpush.msra.mxu0 %v5384
  %5426 = vmatpush.msra.mxu0 %v5383
  %5427 = vmatpush.msra.mxu0 %v5382
  %5428 = vmatpush.msra.mxu0 %v5381
  %5429 = vmatpush.msra.mxu0 %v5380
  %5430 = vmatpush.msra.mxu0 %v5379
  %5431 = vmatmul.f32.gmra.mxu0 %v5406
  %v5432 = vpop.f32.mrf.mxu0
  %v5433 = vadd.f32 %v5397, %v5432
  %5434 = vmatmul.f32.gmra.mxu0 %v5409
  %v5435 = vpop.f32.mrf.mxu0
  %v5436 = vadd.f32 %v5402, %v5435
  %5437 = vdwg.mxu0
  %vm5438 = vcmask 15360
  %5439 = vst.msk [vmem:[%s7] sm:$0xff] %vm5438, %v5433
  %vm5440 = vcmask 9216
  %5441 = vst.msk [vmem:[%s7 + $0x8] sm:$0x3] %vm5440, %v5436
  // Predicated region
  $region30: #{lenet_forward.1} parent=0 // pred_check
    _
  $region31: #{lenet_forward.1} parent=0 // pred_check_branch
    %5443 = sbr.rel (0) target = $region33
  $region32: #{lenet_forward.1} parent=0 // pred_region
    _
  $region33: #{lenet_forward.1} parent=0 // pred_fallthru
    _
  // Predicated region
  $region34: #{lenet_forward.1} parent=0 // pred_check
    _
  $region35: #{lenet_forward.1} parent=0 // pred_check_branch
    %5445 = sbr.rel (0) target = $region37
  $region36: #{lenet_forward.1} parent=0 // pred_region
    _
  $region37: #{lenet_forward.1} parent=0 // pred_fallthru
    _

</llo_original>
